<compile_context>
chip_gen: v5e
topology: v5e:2x2
jax: 0.10.0
libtpu: 0.0.40
codegen_flags: <defaults>
</compile_context>

<pallas_src>
import functools
import math

import jax
import jax.numpy as jnp
from jax import lax
from jax.experimental import pallas as pl
from jax.experimental.pallas import tpu as pltpu

MAX_POS_EMB = 512          # lucidrains conformer rel-pos table half-size
LN_EPS = 1e-5
BN_EPS = 1e-5
NEG_INF = -1e30
_GOFF = 16                 # sublane-aligned start row of the depthwise-conv window


# --------------------------- generation-aware sizing -----------------------------------

@functools.lru_cache(maxsize=None)
def _vmem_budget():
    """VMEM budget in bytes (128 MiB on v5e/v6e, 64 MiB on v7x), with headroom."""
    try:
        cap = int(pltpu.get_tpu_info().vmem_capacity_bytes)
    except Exception:
        cap = 64 * 1024 * 1024          # conservative fallback (v7x-sized)
    return max(int(cap * 3 // 4), 32 * 1024 * 1024)


def _cparams(*sem):
    # TODO(synk): switch the batch/M axis to pltpu.CORE_PARALLEL on v7x once the target
    # generation is known; plain "parallel" is safe on every generation.
    return pltpu.CompilerParams(dimension_semantics=sem,
                                vmem_limit_bytes=_vmem_budget())


def _pick_m_tile(m, row_bytes, resident_bytes, budget):
    """Budget-aware row tile: fit (resident weights x2) + (rows x2 buffers), keep >=2 blocks."""
    avail = max(budget - 2 * resident_bytes, 1 << 20)
    tm = int(avail // max(2 * row_bytes, 1))
    tm = max(8, min(tm, 1024, m))
    if m >= 16:
        tm = min(tm, (m + 1) // 2)       # at least 2 grid blocks (megacore)
    tm = max(8, (tm // 8) * 8)
    t = tm
    while t >= 8:
        if m % t == 0:
            return t
        if tm - t >= 256:
            break
        t -= 8
    return tm                            # partial last block: padded rows are discarded


# --------------------------- in-kernel helpers (VMEM values) ----------------------------

def _ln(x, g, b, eps=LN_EPS):
    xf = x.astype(jnp.float32)
    mu = jnp.mean(xf, axis=-1, keepdims=True)
    xc = xf - mu
    var = jnp.mean(xc * xc, axis=-1, keepdims=True)
    return xc * lax.rsqrt(var + eps) * g + b


def _swish(y):
    return y * jax.nn.sigmoid(y)


def _mm(a, w):
    # bf16 MXU operands, f32 accumulation.
    return jnp.dot(a.astype(jnp.bfloat16), w.astype(jnp.bfloat16),
                   preferred_element_type=jnp.float32)


# ------------------------------- encode + align -----------------------------------------

def _encode_align_kernel(texts_ref, align_ref, w_ref, b_ref, o_ref):
    te = _swish(_mm(texts_ref[0], w_ref[...]) + b_ref[...])             # (T_text, H)
    o_ref[0] = lax.dot_general(
        align_ref[0].astype(jnp.bfloat16), te.astype(jnp.bfloat16),
        (((0,), (0,)), ((), ())),                                       # contract T_text
        preferred_element_type=jnp.float32).astype(o_ref.dtype)         # (T_mel, H)


def encode_and_align(texts, alignment, w, b):
    B, T_text, P = texts.shape
    T_mel = alignment.shape[2]
    H = w.shape[1]
    return pl.pallas_call(
        _encode_align_kernel,
        grid=(B,),
        in_specs=[pl.BlockSpec((1, T_text, P), lambda i: (i, 0, 0)),
                  pl.BlockSpec((1, T_text, T_mel), lambda i: (i, 0, 0)),
                  pl.BlockSpec((P, H), lambda i: (0, 0)),
                  pl.BlockSpec((1, H), lambda i: (0, 0))],
        out_specs=pl.BlockSpec((1, T_mel, H), lambda i: (i, 0, 0)),
        out_shape=jax.ShapeDtypeStruct((B, T_mel, H), jnp.float32),
        compiler_params=_cparams("parallel"),
    )(texts, alignment, w, b)


# ------------------------------- fused Conformer refiner --------------------------------

_BLOCK_KEYS = (
    "ff1_ln_g", "ff1_ln_b", "ff1_w1", "ff1_b1", "ff1_w2", "ff1_b2",
    "attn_ln_g", "attn_ln_b", "attn_wqkv", "attn_wo", "attn_bo",
    "conv_ln_g", "conv_ln_b", "conv_pw1_w", "conv_pw1_b", "conv_dw_w", "conv_dw_b",
    "conv_bn_s", "conv_bn_b", "conv_pw2_w", "conv_pw2_b",
    "ff2_ln_g", "ff2_ln_b", "ff2_w1", "ff2_b1", "ff2_w2", "ff2_b2",
    "post_ln_g", "post_ln_b",
)


def _ff_half(x, g, b, w1, b1, w2, b2):
    h = _ln(x, g, b)
    h = _swish(_mm(h, w1) + b1)
    return x + 0.5 * (_mm(h, w2) + b2)


def _mhsa(x, g, b, wqkv, wo, bo, e, mbias, *, heads, dim_head):
    t = x.shape[0]
    inner = heads * dim_head
    h = _ln(x, g, b)
    qkv = _mm(h, wqkv)                                  # (T, 3*inner); Q-scale folded in
    q_all = qkv[:, :inner].astype(jnp.bfloat16)
    k_all = qkv[:, inner:2 * inner].astype(jnp.bfloat16)
    v_all = qkv[:, 2 * inner:].astype(jnp.bfloat16)
    lp = e.shape[0]
    outs = []
    for hd in range(heads):                             # static unroll, heads is small
        lo = hd * dim_head
        q = q_all[:, lo:lo + dim_head]
        k = k_all[:, lo:lo + dim_head]
        v = v_all[:, lo:lo + dim_head]
        s = lax.dot_general(q, k, (((1,), (1,)), ((), ())),
                            preferred_element_type=jnp.float32)          # (T, T)
        srel = lax.dot_general(q, e, (((1,), (1,)), ((), ())),
                               preferred_element_type=jnp.float32)       # (T, Lp)
        # "relative shift": table row c <-> distance (T-1)-c, so row i of the bias needs
        # srel[i, (T-1)-i+j]; a strided lane roll (XLU) by (lp-(T-1))+i gives exactly that
        # in the first T lanes (clipping is baked into the table ordering).
        pos = pltpu.roll(srel, lp - (t - 1), 1, stride=1, stride_axis=0)[:, :t]
        s = s + pos + mbias
        s = s - jnp.max(s, axis=-1, keepdims=True)
        p = jnp.exp(s)
        p = p / jnp.sum(p, axis=-1, keepdims=True)       # exact divide (accuracy)
        outs.append(jnp.dot(p.astype(jnp.bfloat16), v,
                            preferred_element_type=jnp.float32))          # (T, dh)
    o = jnp.concatenate(outs, axis=1)                    # (T, inner): one big out-proj
    return x + _mm(o, wo) + bo


def _conv_module(x, g, b, pw1w, pw1b, dww, dwb, bns, bnb, pw2w, pw2b, pad_ref, *, ksize):
    t = x.shape[0]
    pad = (ksize - 1) // 2
    rows = pad_ref.shape[0]
    ci = pad_ref.shape[1]
    h = _ln(x, g, b)
    u = _mm(h, pw1w) + pw1b                              # pointwise conv 1 -> (T, 2*ci)
    gl = u[:, :ci] * jax.nn.sigmoid(u[:, ci:])           # GLU, channels stay on lanes
    # zero ONLY the padding rows; GLU value stored at a sublane-aligned offset
    pad_ref[0:_GOFF, :] = jnp.zeros((_GOFF, ci), jnp.float32)
    pad_ref[_GOFF + t:rows, :] = jnp.zeros((rows - _GOFF - t, ci), jnp.float32)
    pad_ref[_GOFF:_GOFF + t, :] = gl
    w = dww                                              # (K, ci) loaded once (hoisted)
    base = _GOFF - pad
    acc = jnp.zeros((t, ci), jnp.float32)
    for k in range(ksize):                               # 31 static sublane-shifted taps
        acc = acc + pad_ref[base + k:base + k + t, :] * w[k:k + 1, :]
    y = acc + dwb
    y = y * bns + bnb                                    # folded eval-mode BatchNorm1d
    y = _swish(y)
    return x + _mm(y, pw2w) + pw2b


def _refiner_kernel(x_ref, mrow_ref, mcol_ref, *refs, heads, dim_head, ksize):
    nk = len(_BLOCK_KEYS)
    w = dict(zip(_BLOCK_KEYS, refs[:nk]))
    e_ref, o_ref, act_ref, pad_ref = refs[nk], refs[nk + 1], refs[nk + 2], refs[nk + 3]

    layer = pl.program_id(1)

    @pl.when(layer == 0)
    def _():                                             # load activation once per batch elem
        act_ref[...] = x_ref[0].astype(jnp.float32)

    x = act_ref[...]                                     # (T, H) f32, resident across depth

    # ---- 0.5 * FeedForward #1 ----
    x = _ff_half(x, w["ff1_ln_g"][0], w["ff1_ln_b"][0],
                 w["ff1_w1"][0], w["ff1_b1"][0], w["ff1_w2"][0], w["ff1_b2"][0])

    # ---- MHSA with Shaw rel-pos + key/query mask ----
    mbias = jnp.where(mcol_ref[0] * mrow_ref[0] > 0.5, 0.0, NEG_INF)     # (T, T)
    x = _mhsa(x, w["attn_ln_g"][0], w["attn_ln_b"][0], w["attn_wqkv"][0],
              w["attn_wo"][0], w["attn_bo"][0], e_ref[0], mbias,
              heads=heads, dim_head=dim_head)

    # ---- Conformer conv module ----
    x = _conv_module(x, w["conv_ln_g"][0], w["conv_ln_b"][0],
                     w["conv_pw1_w"][0], w["conv_pw1_b"][0],
                     w["conv_dw_w"][0], w["conv_dw_b"][0],
                     w["conv_bn_s"][0], w["conv_bn_b"][0],
                     w["conv_pw2_w"][0], w["conv_pw2_b"][0],
                     pad_ref, ksize=ksize)

    # ---- 0.5 * FeedForward #2 ----
    x = _ff_half(x, w["ff2_ln_g"][0], w["ff2_ln_b"][0],
                 w["ff2_w1"][0], w["ff2_b1"][0], w["ff2_w2"][0], w["ff2_b2"][0])

    # ---- post-LN ----
    x = _ln(x, w["post_ln_g"][0], w["post_ln_b"][0])

    act_ref[...] = x
    o_ref[0] = x.astype(o_ref.dtype)                     # resident out block, one HBM writeback


def refiner(x, bp, mel_mask, *, heads, dim_head, ksize):
    B, T, H = x.shape
    depth = bp["ff1_w1"].shape[0]
    ci = bp["conv_pw2_w"].shape[1]
    mask_row = mel_mask[:, None, :]                      # (B, 1, T)
    mask_col = mel_mask[:, :, None]                      # (B, T, 1)

    # Trimmed + reordered Shaw rel-pos table per layer: row c <-> relative distance (T-1)-c
    # (clipped exactly like the reference); zero-padded to a 128 lane multiple for the roll.
    L = 2 * T - 1
    Lp = max(128, ((L + 127) // 128) * 128)
    idx = jnp.clip((T - 1) - jnp.arange(L), -MAX_POS_EMB, MAX_POS_EMB) + MAX_POS_EMB
    e = jnp.take(bp["attn_rel"], idx, axis=1).astype(jnp.bfloat16)       # (depth, L, dh)
    e = jnp.concatenate(
        [e, jnp.zeros((depth, Lp - L, e.shape[2]), jnp.bfloat16)], axis=1)

    pad = (ksize - 1) // 2
    rows = ((_GOFF + T + pad + 7) // 8) * 8              # depthwise-conv scratch rows

    layer_arrays = [bp[k] for k in _BLOCK_KEYS]          # all (depth, ., .) stacked
    layer_specs = [pl.BlockSpec((1,) + a.shape[1:], lambda b, l: (l, 0, 0))
                   for a in layer_arrays]                # layer-indexed -> weight prefetch
    e_spec = pl.BlockSpec((1, Lp, e.shape[2]), lambda b, l: (l, 0, 0))

    kern = functools.partial(_refiner_kernel, heads=heads, dim_head=dim_head, ksize=ksize)
    return pl.pallas_call(
        kern,
        grid=(B, depth),
        in_specs=[pl.BlockSpec((1, T, H), lambda b, l: (b, 0, 0)),
                  pl.BlockSpec((1, 1, T), lambda b, l: (b, 0, 0)),
                  pl.BlockSpec((1, T, 1), lambda b, l: (b, 0, 0))]
                 + layer_specs + [e_spec],
        out_specs=pl.BlockSpec((1, T, H), lambda b, l: (b, 0, 0)),
        out_shape=jax.ShapeDtypeStruct((B, T, H), jnp.float32),
        scratch_shapes=[pltpu.VMEM((T, H), jnp.float32),          # running activation
                        pltpu.VMEM((rows, ci), jnp.float32)],     # conv zero-pad buffer
        compiler_params=_cparams("parallel", "arbitrary"),
    )(x, mask_row, mask_col, *layer_arrays, e)


# ------------------------------------ VQ heads -------------------------------------------

def _heads_kernel(x_ref, w1c_ref, b1c_ref, w2_ref, b2_ref, w3_ref, b3_ref,
                  w4_ref, b4_ref, o_ref, *, n_heads, h2, cb, out_w):
    x = x_ref[...].astype(jnp.float32)                               # (tm, H)
    h1 = _swish(_mm(x, w1c_ref[...]) + b1c_ref[...])                 # one (H, n*h2) matmul
    outs = []
    for i in range(n_heads):                                         # static unroll
        h = h1[:, i * h2:(i + 1) * h2]
        h = _swish(_mm(h, w2_ref[i]) + b2_ref[i])
        h = _swish(_mm(h, w3_ref[i]) + b3_ref[i])
        outs.append(_mm(h, w4_ref[i]) + b4_ref[i])                   # (tm, cb)
    if out_w > n_heads * cb:                                         # lane-pad -> dense store
        outs.append(jnp.zeros((x.shape[0], out_w - n_heads * cb), jnp.float32))
    o_ref[...] = jnp.concatenate(outs, axis=1).astype(o_ref.dtype)   # single store


def _const_spec(a):
    nd = a.ndim
    return pl.BlockSpec(a.shape, lambda i, _nd=nd: (0,) * _nd)


def vq_heads(x, hp):
    B, T, H = x.shape
    M = B * T
    n, h2, h4 = hp["w2"].shape
    cb = hp["w4"].shape[2]
    out_w = ((n * cb + 127) // 128) * 128
    weight_arrays = [hp[k] for k in ("w1cat", "b1cat", "w2", "b2", "w3", "b3", "w4", "b4")]
    resident = sum(int(a.size) * a.dtype.itemsize for a in weight_arrays)
    row_bytes = 4 * (H + n * h2 + n * h4 + out_w)
    tm = _pick_m_tile(M, row_bytes, resident, _vmem_budget())
    out = pl.pallas_call(
        functools.partial(_heads_kernel, n_heads=n, h2=h2, cb=cb, out_w=out_w),
        grid=(pl.cdiv(M, tm),),
        in_specs=[pl.BlockSpec((tm, H), lambda i: (i, 0))]
                 + [_const_spec(a) for a in weight_arrays],
        out_specs=pl.BlockSpec((tm, out_w), lambda i: (i, 0)),
        out_shape=jax.ShapeDtypeStruct((M, out_w), jnp.float32),
        compiler_params=_cparams("parallel"),
    )(x.reshape(M, H), *weight_arrays)
    return out[:, :n * cb].reshape(B, T, n, cb)


# --------------------------------- forward ----------------------------------------------

def vq_indexer_forward(params, texts, text_lengths, mel_lengths, alignment,
                       *, attn_heads, dim_head, conv_kernel):
    del text_lengths                                     # unused by the reference forward
    T_mel = alignment.shape[2]
    mel_mask = (jnp.arange(T_mel)[None, :] < mel_lengths[:, None]).astype(jnp.float32)
    x = encode_and_align(texts, alignment, params["te_w"], params["te_b"])
    x = refiner(x, params["blocks"], mel_mask,
                heads=attn_heads, dim_head=dim_head, ksize=conv_kernel)
    return vq_heads(x, params["heads"])                  # (B, T_mel, n_vq, codebook)


# ------------------------------- parameter init -----------------------------------------

def _dense(key, fan_in, fan_out, w_dtype=jnp.bfloat16):
    kw, kb = jax.random.split(key)
    w = (jax.random.normal(kw, (fan_in, fan_out), jnp.float32)
         * (fan_in ** -0.5)).astype(w_dtype)
    b = (jax.random.normal(kb, (fan_out,), jnp.float32) * 0.01).reshape(1, fan_out)
    return w, b


def _init_block(key, H, attn_heads, dim_head, ff_mult, conv_expansion, conv_kernel):
    keys = jax.random.split(key, 12)
    inner = attn_heads * dim_head
    ci = H * conv_expansion
    F = H * ff_mult
    p = {}
    for name, k1, k2 in (("ff1", keys[0], keys[1]), ("ff2", keys[2], keys[3])):
        w1, b1 = _dense(k1, H, F)
        w2, b2 = _dense(k2, F, H)
        p[name + "_ln_g"] = jnp.ones((1, H), jnp.float32)
        p[name + "_ln_b"] = jnp.zeros((1, H), jnp.float32)
        p[name + "_w1"], p[name + "_b1"] = w1, b1
        p[name + "_w2"], p[name + "_b2"] = w2, b2
    # attention: dim_head**-0.5 folded into the Q columns of the fused Wqkv (bias-free q/kv)
    scale = dim_head ** -0.5
    wq = jax.random.normal(keys[4], (H, inner), jnp.float32) * (H ** -0.5) * scale
    wkv = jax.random.normal(keys[5], (H, 2 * inner), jnp.float32) * (H ** -0.5)
    wo, bo = _dense(keys[6], inner, H)
    p["attn_ln_g"] = jnp.ones((1, H), jnp.float32)
    p["attn_ln_b"] = jnp.zeros((1, H), jnp.float32)
    p["attn_wqkv"] = jnp.concatenate([wq, wkv], axis=1).astype(jnp.bfloat16)
    p["attn_wo"], p["attn_bo"] = wo, bo
    p["attn_rel"] = (jax.random.normal(keys[7], (2 * MAX_POS_EMB + 1, dim_head),
                                       jnp.float32) * 0.02)
    # conv module
    pw1_w, pw1_b = _dense(keys[8], H, 2 * ci)
    pw2_w, pw2_b = _dense(keys[9], ci, H)
    dw_w = (jax.random.normal(keys[10], (conv_kernel, ci), jnp.float32)
            * (conv_kernel ** -0.5))
    dw_b = (jax.random.normal(keys[11], (ci,), jnp.float32) * 0.01).reshape(1, ci)
    p["conv_ln_g"] = jnp.ones((1, H), jnp.float32)
    p["conv_ln_b"] = jnp.zeros((1, H), jnp.float32)
    p["conv_pw1_w"], p["conv_pw1_b"] = pw1_w, pw1_b
    p["conv_dw_w"], p["conv_dw_b"] = dw_w, dw_b
    # TODO(synk): fold real running_mean/var/gamma/beta here when loading a checkpoint.
    p["conv_bn_s"] = jnp.full((1, ci), 1.0 / math.sqrt(1.0 + BN_EPS), jnp.float32)
    p["conv_bn_b"] = jnp.zeros((1, ci), jnp.float32)
    p["conv_pw2_w"], p["conv_pw2_b"] = pw2_w, pw2_b
    p["post_ln_g"] = jnp.ones((1, H), jnp.float32)
    p["post_ln_b"] = jnp.zeros((1, H), jnp.float32)
    return p


def _init_heads(key, H, codebook, n_heads):
    dims = [H, H // 2, H // 4, H // 8, codebook]
    per = [[] for _ in range(4)]
    perb = [[] for _ in range(4)]
    for hk in jax.random.split(key, n_heads):
        for i, k in enumerate(jax.random.split(hk, 4)):
            w, b = _dense(k, dims[i], dims[i + 1])
            per[i].append(w)
            perb[i].append(b)
    w1 = jnp.stack(per[0])                               # (n, H, H//2) bf16
    b1 = jnp.stack(perb[0])                              # (n, 1, H//2) f32
    hp = {"w1cat": jnp.transpose(w1, (1, 0, 2)).reshape(H, n_heads * dims[1]),
          "b1cat": jnp.transpose(b1, (1, 0, 2)).reshape(1, n_heads * dims[1])}
    for i in range(1, 4):
        hp["w%d" % (i + 1)] = jnp.stack(per[i])          # (n, d_in, d_out) bf16
        hp["b%d" % (i + 1)] = jnp.stack(perb[i])         # (n, 1, d_out)    f32
    return hp


def init_vq_indexer(key, plbert_dim, hidden_dim, codebook_size, n_vq_heads,
                    depth=8, attn_heads=4, ff_mult=4, conv_expansion=2, conv_kernel=31):
    dim_head = hidden_dim // attn_heads
    k_te, k_blocks, k_heads = jax.random.split(key, 3)
    te_w, te_b = _dense(k_te, plbert_dim, hidden_dim)
    block_list = [_init_block(k, hidden_dim, attn_heads, dim_head, ff_mult,
                              conv_expansion, conv_kernel)
                  for k in jax.random.split(k_blocks, depth)]
    blocks = {k: jnp.stack([b[k] for b in block_list]) for k in block_list[0]}
    heads = _init_heads(k_heads, hidden_dim, codebook_size, n_vq_heads)
    return dict(te_w=te_w, te_b=te_b, blocks=blocks, heads=heads)


# ------------------------------------ main -----------------------------------------------

if __name__ == "__main__":
    B, T_text, T_mel = 2, 8, 16
    PLBERT_DIM, HIDDEN, CODEBOOK, VQ_HEADS = 24, 32, 10, 2
    ATTN_HEADS, CONV_K, DEPTH = 4, 31, 8
    DIM_HEAD = HIDDEN // ATTN_HEADS

    key = jax.random.PRNGKey(0)
    kp, kt, ka = jax.random.split(key, 3)
    params = init_vq_indexer(kp, PLBERT_DIM, HIDDEN, CODEBOOK, VQ_HEADS,
                             depth=DEPTH, attn_heads=ATTN_HEADS, conv_kernel=CONV_K)

    texts = jax.random.normal(kt, (B, T_text, PLBERT_DIM), jnp.float32)
    alignment = jax.nn.softmax(
        jax.random.normal(ka, (B, T_text, T_mel), jnp.float32), axis=1)
    text_lengths = jnp.array([T_text, T_text - 2], jnp.int32)
    mel_lengths = jnp.array([T_mel, T_mel - 4], jnp.int32)

    fwd = jax.jit(functools.partial(vq_indexer_forward,
                                    attn_heads=ATTN_HEADS, dim_head=DIM_HEAD,
                                    conv_kernel=CONV_K))
    out = fwd(params, texts, text_lengths, mel_lengths, alignment)
    jax.block_until_ready(out)
    assert out.shape == (B, T_mel, VQ_HEADS, CODEBOOK), out.shape
    assert bool(jnp.all(jnp.isfinite(out)))
    print("KERNEL_OK")
</pallas_src>

<mosaic_0001>
module attributes {stable_mosaic.version = 11 : i64} {
  func.func @_encode_align_kernel(%arg0: i32, %arg1: memref<1x8x24xf32, #tpu.memory_space<vmem>>, %arg2: memref<1x8x16xf32, #tpu.memory_space<vmem>>, %arg3: memref<24x32xbf16, #tpu.memory_space<vmem>>, %arg4: memref<1x32xf32, #tpu.memory_space<vmem>>, %arg5: memref<1x16x32xf32, #tpu.memory_space<vmem>>) attributes {dimension_semantics = [#tpu.dimension_semantics<parallel>], iteration_bounds = array<i64: 2>, scalar_prefetch = 0 : i64, scratch_operands = 0 : i64, tpu.core_type = #tpu.core_type<tc>, window_params = [{transform_indices = @transform_0, window_bounds = array<i64: 1, 8, 24>}, {transform_indices = @transform_1, window_bounds = array<i64: 1, 8, 16>}, {pipeline_mode = #tpu.pipeline_mode<synchronous>, transform_indices = @transform_2, window_bounds = array<i64: 24, 32>}, {pipeline_mode = #tpu.pipeline_mode<synchronous>, transform_indices = @transform_3, window_bounds = array<i64: 1, 32>}, {transform_indices = @transform_4, window_bounds = array<i64: 1, 16, 32>}]} {
    %c0 = arith.constant 0 : index
    %c0_0 = arith.constant 0 : index
    %c0_1 = arith.constant 0 : index
    %0 = vector.load %arg1[%c0, %c0_0, %c0_1] : memref<1x8x24xf32, #tpu.memory_space<vmem>>, vector<1x8x24xf32>
    %1 = vector.shape_cast %0 : vector<1x8x24xf32> to vector<8x24xf32>
    %c0_2 = arith.constant 0 : index
    %c0_3 = arith.constant 0 : index
    %2 = vector.load %arg3[%c0_2, %c0_3] : memref<24x32xbf16, #tpu.memory_space<vmem>>, vector<24x32xbf16>
    %3 = arith.truncf %1 : vector<8x24xf32> to vector<8x24xbf16>
    %cst = arith.constant dense<0.000000e+00> : vector<8x32xf32>
    %4 = tpu.matmul %3, %2, %cst {dimension_numbers = #tpu.dot_dimension_numbers<[1], [0], [0], [1], [0, 0, 1, 1], [], []>} : vector<8x24xbf16>, vector<24x32xbf16>, vector<8x32xf32> -> vector<8x32xf32>
    %c0_4 = arith.constant 0 : index
    %c0_5 = arith.constant 0 : index
    %5 = vector.load %arg4[%c0_4, %c0_5] : memref<1x32xf32, #tpu.memory_space<vmem>>, vector<1x32xf32>
    %6 = vector.broadcast %5 : vector<1x32xf32> to vector<8x32xf32>
    %7 = arith.addf %4, %6 : vector<8x32xf32>
    %8 = arith.negf %7 : vector<8x32xf32>
    %9 = math.exp %8 : vector<8x32xf32>
    %cst_6 = arith.constant 1.000000e+00 : f32
    %10 = vector.broadcast %cst_6 : f32 to vector<8x32xf32>
    %11 = arith.addf %10, %9 : vector<8x32xf32>
    %12 = arith.divf %10, %11 : vector<8x32xf32>
    %13 = arith.mulf %7, %12 : vector<8x32xf32>
    %c0_7 = arith.constant 0 : index
    %c0_8 = arith.constant 0 : index
    %c0_9 = arith.constant 0 : index
    %14 = vector.load %arg2[%c0_7, %c0_8, %c0_9] : memref<1x8x16xf32, #tpu.memory_space<vmem>>, vector<1x8x16xf32>
    %15 = vector.shape_cast %14 : vector<1x8x16xf32> to vector<8x16xf32>
    %16 = arith.truncf %15 : vector<8x16xf32> to vector<8x16xbf16>
    %17 = arith.truncf %13 : vector<8x32xf32> to vector<8x32xbf16>
    %cst_10 = arith.constant dense<0.000000e+00> : vector<16x32xf32>
    %18 = tpu.matmul %16, %17, %cst_10 {dimension_numbers = #tpu.dot_dimension_numbers<[0], [0], [1], [1], [0, 1, 1, 1], [], []>} : vector<8x16xbf16>, vector<8x32xbf16>, vector<16x32xf32> -> vector<16x32xf32>
    %c0_11 = arith.constant 0 : index
    %c0_12 = arith.constant 0 : index
    %c0_13 = arith.constant 0 : index
    %19 = vector.load %arg5[%c0_11, %c0_12, %c0_13] : memref<1x16x32xf32, #tpu.memory_space<vmem>>, vector<1x16x32xf32>
    %20 = vector.shape_cast %19 : vector<1x16x32xf32> to vector<16x32xf32>
    %21 = vector.shape_cast %18 : vector<16x32xf32> to vector<1x16x32xf32>
    tpu.vector_store %arg5[%c0_11, %c0_12, %c0_13], %21 {strides = array<i32>} : memref<1x16x32xf32, #tpu.memory_space<vmem>>, vector<1x16x32xf32>,
    return
  }
  func.func @transform_0(%arg0: i32) -> (i32, i32, i32) {
    %c0_i32 = arith.constant 0 : i32
    %c0_i32_0 = arith.constant 0 : i32
    %c0_i32_1 = arith.constant 0 : i32
    return %arg0, %c0_i32, %c0_i32_0 : i32, i32, i32
  }
  func.func @transform_1(%arg0: i32) -> (i32, i32, i32) {
    %c0_i32 = arith.constant 0 : i32
    %c0_i32_0 = arith.constant 0 : i32
    %c0_i32_1 = arith.constant 0 : i32
    return %arg0, %c0_i32, %c0_i32_0 : i32, i32, i32
  }
  func.func @transform_2(%arg0: i32) -> (i32, i32) {
    %c0_i32 = arith.constant 0 : i32
    %c0_i32_0 = arith.constant 0 : i32
    %c0_i32_1 = arith.constant 0 : i32
    return %c0_i32, %c0_i32_0 : i32, i32
  }
  func.func @transform_3(%arg0: i32) -> (i32, i32) {
    %c0_i32 = arith.constant 0 : i32
    %c0_i32_0 = arith.constant 0 : i32
    %c0_i32_1 = arith.constant 0 : i32
    return %c0_i32, %c0_i32_0 : i32, i32
  }
  func.func @transform_4(%arg0: i32) -> (i32, i32, i32) {
    %c0_i32 = arith.constant 0 : i32
    %c0_i32_0 = arith.constant 0 : i32
    %c0_i32_1 = arith.constant 0 : i32
    return %arg0, %c0_i32, %c0_i32_0 : i32, i32, i32
  }
}

module attributes {stable_mosaic.version = 11 : i64} {
  func.func @_refiner_kernel(%arg0: i32, %arg1: i32, %arg2: memref<1x16x32xf32, #tpu.memory_space<vmem>>, %arg3: memref<1x1x16xf32, #tpu.memory_space<vmem>>, %arg4: memref<1x16x1xf32, #tpu.memory_space<vmem>>, %arg5: memref<1x1x32xf32, #tpu.memory_space<vmem>>, %arg6: memref<1x1x32xf32, #tpu.memory_space<vmem>>, %arg7: memref<1x32x128xbf16, #tpu.memory_space<vmem>>, %arg8: memref<1x1x128xf32, #tpu.memory_space<vmem>>, %arg9: memref<1x128x32xbf16, #tpu.memory_space<vmem>>, %arg10: memref<1x1x32xf32, #tpu.memory_space<vmem>>, %arg11: memref<1x1x32xf32, #tpu.memory_space<vmem>>, %arg12: memref<1x1x32xf32, #tpu.memory_space<vmem>>, %arg13: memref<1x32x96xbf16, #tpu.memory_space<vmem>>, %arg14: memref<1x32x32xbf16, #tpu.memory_space<vmem>>, %arg15: memref<1x1x32xf32, #tpu.memory_space<vmem>>, %arg16: memref<1x1x32xf32, #tpu.memory_space<vmem>>, %arg17: memref<1x1x32xf32, #tpu.memory_space<vmem>>, %arg18: memref<1x32x128xbf16, #tpu.memory_space<vmem>>, %arg19: memref<1x1x128xf32, #tpu.memory_space<vmem>>, %arg20: memref<1x31x64xf32, #tpu.memory_space<vmem>>, %arg21: memref<1x1x64xf32, #tpu.memory_space<vmem>>, %arg22: memref<1x1x64xf32, #tpu.memory_space<vmem>>, %arg23: memref<1x1x64xf32, #tpu.memory_space<vmem>>, %arg24: memref<1x64x32xbf16, #tpu.memory_space<vmem>>, %arg25: memref<1x1x32xf32, #tpu.memory_space<vmem>>, %arg26: memref<1x1x32xf32, #tpu.memory_space<vmem>>, %arg27: memref<1x1x32xf32, #tpu.memory_space<vmem>>, %arg28: memref<1x32x128xbf16, #tpu.memory_space<vmem>>, %arg29: memref<1x1x128xf32, #tpu.memory_space<vmem>>, %arg30: memref<1x128x32xbf16, #tpu.memory_space<vmem>>, %arg31: memref<1x1x32xf32, #tpu.memory_space<vmem>>, %arg32: memref<1x1x32xf32, #tpu.memory_space<vmem>>, %arg33: memref<1x1x32xf32, #tpu.memory_space<vmem>>, %arg34: memref<1x128x8xbf16, #tpu.memory_space<vmem>>, %arg35: memref<1x16x32xf32, #tpu.memory_space<vmem>>, %arg36: memref<16x32xf32, #tpu.memory_space<vmem>>, %arg37: memref<48x64xf32, #tpu.memory_space<vmem>>) attributes {dimension_semantics = [#tpu.dimension_semantics<parallel>, #tpu.dimension_semantics<arbitrary>], iteration_bounds = array<i64: 2, 8>, scalar_prefetch = 0 : i64, scratch_operands = 2 : i64, tpu.core_type = #tpu.core_type<tc>, window_params = [{transform_indices = @transform_0, window_bounds = array<i64: 1, 16, 32>}, {transform_indices = @transform_1, window_bounds = array<i64: 1, 1, 16>}, {transform_indices = @transform_2, window_bounds = array<i64: 1, 16, 1>}, {transform_indices = @transform_3, window_bounds = array<i64: 1, 1, 32>}, {transform_indices = @transform_4, window_bounds = array<i64: 1, 1, 32>}, {transform_indices = @transform_5, window_bounds = array<i64: 1, 32, 128>}, {transform_indices = @transform_6, window_bounds = array<i64: 1, 1, 128>}, {transform_indices = @transform_7, window_bounds = array<i64: 1, 128, 32>}, {transform_indices = @transform_8, window_bounds = array<i64: 1, 1, 32>}, {transform_indices = @transform_9, window_bounds = array<i64: 1, 1, 32>}, {transform_indices = @transform_10, window_bounds = array<i64: 1, 1, 32>}, {transform_indices = @transform_11, window_bounds = array<i64: 1, 32, 96>}, {transform_indices = @transform_12, window_bounds = array<i64: 1, 32, 32>}, {transform_indices = @transform_13, window_bounds = array<i64: 1, 1, 32>}, {transform_indices = @transform_14, window_bounds = array<i64: 1, 1, 32>}, {transform_indices = @transform_15, window_bounds = array<i64: 1, 1, 32>}, {transform_indices = @transform_16, window_bounds = array<i64: 1, 32, 128>}, {transform_indices = @transform_17, window_bounds = array<i64: 1, 1, 128>}, {transform_indices = @transform_18, window_bounds = array<i64: 1, 31, 64>}, {transform_indices = @transform_19, window_bounds = array<i64: 1, 1, 64>}, {transform_indices = @transform_20, window_bounds = array<i64: 1, 1, 64>}, {transform_indices = @transform_21, window_bounds = array<i64: 1, 1, 64>}, {transform_indices = @transform_22, window_bounds = array<i64: 1, 64, 32>}, {transform_indices = @transform_23, window_bounds = array<i64: 1, 1, 32>}, {transform_indices = @transform_24, window_bounds = array<i64: 1, 1, 32>}, {transform_indices = @transform_25, window_bounds = array<i64: 1, 1, 32>}, {transform_indices = @transform_26, window_bounds = array<i64: 1, 32, 128>}, {transform_indices = @transform_27, window_bounds = array<i64: 1, 1, 128>}, {transform_indices = @transform_28, window_bounds = array<i64: 1, 128, 32>}, {transform_indices = @transform_29, window_bounds = array<i64: 1, 1, 32>}, {transform_indices = @transform_30, window_bounds = array<i64: 1, 1, 32>}, {transform_indices = @transform_31, window_bounds = array<i64: 1, 1, 32>}, {transform_indices = @transform_32, window_bounds = array<i64: 1, 128, 8>}, {transform_indices = @transform_33, window_bounds = array<i64: 1, 16, 32>}]} {
    %c0_i32 = arith.constant 0 : i32
    %0 = arith.cmpi eq, %arg1, %c0_i32 : i32
    %1 = arith.extui %0 : i1 to i32
    %c0_i32_0 = arith.constant 0 : i32
    %2 = arith.cmpi ne, %1, %c0_i32_0 : i32
    scf.if %2 {
      %c0_206 = arith.constant 0 : index
      %c0_207 = arith.constant 0 : index
      %c0_208 = arith.constant 0 : index
      %498 = vector.load %arg2[%c0_206, %c0_207, %c0_208] : memref<1x16x32xf32, #tpu.memory_space<vmem>>, vector<1x16x32xf32>
      %499 = vector.shape_cast %498 : vector<1x16x32xf32> to vector<16x32xf32>
      %c0_209 = arith.constant 0 : index
      %c0_210 = arith.constant 0 : index
      %500 = vector.load %arg36[%c0_209, %c0_210] : memref<16x32xf32, #tpu.memory_space<vmem>>, vector<16x32xf32>
      tpu.vector_store %arg36[%c0_209, %c0_210], %499 {strides = array<i32>} : memref<16x32xf32, #tpu.memory_space<vmem>>, vector<16x32xf32>,
    } else {
    }
    %c0 = arith.constant 0 : index
    %c0_1 = arith.constant 0 : index
    %3 = vector.load %arg36[%c0, %c0_1] : memref<16x32xf32, #tpu.memory_space<vmem>>, vector<16x32xf32>
    %c0_2 = arith.constant 0 : index
    %c0_3 = arith.constant 0 : index
    %c0_4 = arith.constant 0 : index
    %4 = vector.load %arg5[%c0_2, %c0_3, %c0_4] : memref<1x1x32xf32, #tpu.memory_space<vmem>>, vector<1x1x32xf32>
    %5 = vector.shape_cast %4 : vector<1x1x32xf32> to vector<1x32xf32>
    %c0_5 = arith.constant 0 : index
    %c0_6 = arith.constant 0 : index
    %c0_7 = arith.constant 0 : index
    %6 = vector.load %arg6[%c0_5, %c0_6, %c0_7] : memref<1x1x32xf32, #tpu.memory_space<vmem>>, vector<1x1x32xf32>
    %7 = vector.shape_cast %6 : vector<1x1x32xf32> to vector<1x32xf32>
    %c0_8 = arith.constant 0 : index
    %c0_9 = arith.constant 0 : index
    %c0_10 = arith.constant 0 : index
    %8 = vector.load %arg7[%c0_8, %c0_9, %c0_10] : memref<1x32x128xbf16, #tpu.memory_space<vmem>>, vector<1x32x128xbf16>
    %9 = vector.shape_cast %8 : vector<1x32x128xbf16> to vector<32x128xbf16>
    %c0_11 = arith.constant 0 : index
    %c0_12 = arith.constant 0 : index
    %c0_13 = arith.constant 0 : index
    %10 = vector.load %arg8[%c0_11, %c0_12, %c0_13] : memref<1x1x128xf32, #tpu.memory_space<vmem>>, vector<1x1x128xf32>
    %11 = vector.shape_cast %10 : vector<1x1x128xf32> to vector<1x128xf32>
    %c0_14 = arith.constant 0 : index
    %c0_15 = arith.constant 0 : index
    %c0_16 = arith.constant 0 : index
    %12 = vector.load %arg9[%c0_14, %c0_15, %c0_16] : memref<1x128x32xbf16, #tpu.memory_space<vmem>>, vector<1x128x32xbf16>
    %13 = vector.shape_cast %12 : vector<1x128x32xbf16> to vector<128x32xbf16>
    %c0_17 = arith.constant 0 : index
    %c0_18 = arith.constant 0 : index
    %c0_19 = arith.constant 0 : index
    %14 = vector.load %arg10[%c0_17, %c0_18, %c0_19] : memref<1x1x32xf32, #tpu.memory_space<vmem>>, vector<1x1x32xf32>
    %15 = vector.shape_cast %14 : vector<1x1x32xf32> to vector<1x32xf32>
    %cst = arith.constant dense<0.000000e+00> : vector<16xf32>
    %16 = vector.multi_reduction <add>, %3, %cst [1] : vector<16x32xf32> to vector<16xf32>
    %17 = vector.shape_cast %16 : vector<16xf32> to vector<16x1xf32>
    %cst_20 = arith.constant 3.200000e+01 : f32
    %18 = vector.broadcast %cst_20 : f32 to vector<16x1xf32>
    %19 = arith.divf %17, %18 : vector<16x1xf32>
    %20 = vector.broadcast %19 : vector<16x1xf32> to vector<16x32xf32>
    %21 = arith.subf %3, %20 : vector<16x32xf32>
    %22 = arith.mulf %21, %21 : vector<16x32xf32>
    %cst_21 = arith.constant dense<0.000000e+00> : vector<16xf32>
    %23 = vector.multi_reduction <add>, %22, %cst_21 [1] : vector<16x32xf32> to vector<16xf32>
    %24 = vector.shape_cast %23 : vector<16xf32> to vector<16x1xf32>
    %cst_22 = arith.constant 3.200000e+01 : f32
    %25 = vector.broadcast %cst_22 : f32 to vector<16x1xf32>
    %26 = arith.divf %24, %25 : vector<16x1xf32>
    %cst_23 = arith.constant 9.99999974E-6 : f32
    %27 = vector.broadcast %cst_23 : f32 to vector<16x1xf32>
    %28 = arith.addf %26, %27 : vector<16x1xf32>
    %29 = math.rsqrt %28 : vector<16x1xf32>
    %30 = vector.broadcast %29 : vector<16x1xf32> to vector<16x32xf32>
    %31 = arith.mulf %21, %30 : vector<16x32xf32>
    %32 = vector.broadcast %5 : vector<1x32xf32> to vector<16x32xf32>
    %33 = arith.mulf %31, %32 : vector<16x32xf32>
    %34 = vector.broadcast %7 : vector<1x32xf32> to vector<16x32xf32>
    %35 = arith.addf %33, %34 : vector<16x32xf32>
    %36 = arith.truncf %35 : vector<16x32xf32> to vector<16x32xbf16>
    %cst_24 = arith.constant dense<0.000000e+00> : vector<16x128xf32>
    %37 = tpu.matmul %36, %9, %cst_24 {dimension_numbers = #tpu.dot_dimension_numbers<[1], [0], [0], [1], [0, 0, 1, 1], [], []>} : vector<16x32xbf16>, vector<32x128xbf16>, vector<16x128xf32> -> vector<16x128xf32>
    %38 = vector.broadcast %11 : vector<1x128xf32> to vector<16x128xf32>
    %39 = arith.addf %37, %38 : vector<16x128xf32>
    %40 = arith.negf %39 : vector<16x128xf32>
    %41 = math.exp %40 : vector<16x128xf32>
    %cst_25 = arith.constant 1.000000e+00 : f32
    %42 = vector.broadcast %cst_25 : f32 to vector<16x128xf32>
    %43 = arith.addf %42, %41 : vector<16x128xf32>
    %44 = arith.divf %42, %43 : vector<16x128xf32>
    %45 = arith.mulf %39, %44 : vector<16x128xf32>
    %46 = arith.truncf %45 : vector<16x128xf32> to vector<16x128xbf16>
    %cst_26 = arith.constant dense<0.000000e+00> : vector<16x32xf32>
    %47 = tpu.matmul %46, %13, %cst_26 {dimension_numbers = #tpu.dot_dimension_numbers<[1], [0], [0], [1], [0, 0, 1, 1], [], []>} : vector<16x128xbf16>, vector<128x32xbf16>, vector<16x32xf32> -> vector<16x32xf32>
    %48 = vector.broadcast %15 : vector<1x32xf32> to vector<16x32xf32>
    %49 = arith.addf %47, %48 : vector<16x32xf32>
    %cst_27 = arith.constant 5.000000e-01 : f32
    %50 = vector.broadcast %cst_27 : f32 to vector<16x32xf32>
    %51 = arith.mulf %50, %49 : vector<16x32xf32>
    %52 = arith.addf %3, %51 : vector<16x32xf32>
    %c0_28 = arith.constant 0 : index
    %c0_29 = arith.constant 0 : index
    %c0_30 = arith.constant 0 : index
    %53 = vector.load %arg4[%c0_28, %c0_29, %c0_30] : memref<1x16x1xf32, #tpu.memory_space<vmem>>, vector<1x16x1xf32>
    %54 = vector.shape_cast %53 : vector<1x16x1xf32> to vector<16x1xf32>
    %c0_31 = arith.constant 0 : index
    %c0_32 = arith.constant 0 : index
    %c0_33 = arith.constant 0 : index
    %55 = vector.load %arg3[%c0_31, %c0_32, %c0_33] : memref<1x1x16xf32, #tpu.memory_space<vmem>>, vector<1x1x16xf32>
    %56 = vector.shape_cast %55 : vector<1x1x16xf32> to vector<1x16xf32>
    %57 = vector.broadcast %54 : vector<16x1xf32> to vector<16x16xf32>
    %58 = vector.broadcast %56 : vector<1x16xf32> to vector<16x16xf32>
    %59 = arith.mulf %57, %58 : vector<16x16xf32>
    %cst_34 = arith.constant 5.000000e-01 : f32
    %60 = vector.broadcast %cst_34 : f32 to vector<16x16xf32>
    %61 = arith.cmpf ogt, %59, %60 : vector<16x16xf32>
    %cst_35 = arith.constant 0.000000e+00 : f32
    %cst_36 = arith.constant -1.000000e+30 : f32
    %62 = vector.broadcast %cst_35 : f32 to vector<16x16xf32>
    %63 = vector.broadcast %cst_36 : f32 to vector<16x16xf32>
    %64 = arith.select %61, %62, %63 : vector<16x16xi1>, vector<16x16xf32>
    %c0_37 = arith.constant 0 : index
    %c0_38 = arith.constant 0 : index
    %c0_39 = arith.constant 0 : index
    %65 = vector.load %arg11[%c0_37, %c0_38, %c0_39] : memref<1x1x32xf32, #tpu.memory_space<vmem>>, vector<1x1x32xf32>
    %66 = vector.shape_cast %65 : vector<1x1x32xf32> to vector<1x32xf32>
    %c0_40 = arith.constant 0 : index
    %c0_41 = arith.constant 0 : index
    %c0_42 = arith.constant 0 : index
    %67 = vector.load %arg12[%c0_40, %c0_41, %c0_42] : memref<1x1x32xf32, #tpu.memory_space<vmem>>, vector<1x1x32xf32>
    %68 = vector.shape_cast %67 : vector<1x1x32xf32> to vector<1x32xf32>
    %c0_43 = arith.constant 0 : index
    %c0_44 = arith.constant 0 : index
    %c0_45 = arith.constant 0 : index
    %69 = vector.load %arg13[%c0_43, %c0_44, %c0_45] : memref<1x32x96xbf16, #tpu.memory_space<vmem>>, vector<1x32x96xbf16>
    %70 = vector.shape_cast %69 : vector<1x32x96xbf16> to vector<32x96xbf16>
    %c0_46 = arith.constant 0 : index
    %c0_47 = arith.constant 0 : index
    %c0_48 = arith.constant 0 : index
    %71 = vector.load %arg14[%c0_46, %c0_47, %c0_48] : memref<1x32x32xbf16, #tpu.memory_space<vmem>>, vector<1x32x32xbf16>
    %72 = vector.shape_cast %71 : vector<1x32x32xbf16> to vector<32x32xbf16>
    %c0_49 = arith.constant 0 : index
    %c0_50 = arith.constant 0 : index
    %c0_51 = arith.constant 0 : index
    %73 = vector.load %arg15[%c0_49, %c0_50, %c0_51] : memref<1x1x32xf32, #tpu.memory_space<vmem>>, vector<1x1x32xf32>
    %74 = vector.shape_cast %73 : vector<1x1x32xf32> to vector<1x32xf32>
    %c0_52 = arith.constant 0 : index
    %c0_53 = arith.constant 0 : index
    %c0_54 = arith.constant 0 : index
    %75 = vector.load %arg34[%c0_52, %c0_53, %c0_54] : memref<1x128x8xbf16, #tpu.memory_space<vmem>>, vector<1x128x8xbf16>
    %76 = vector.shape_cast %75 : vector<1x128x8xbf16> to vector<128x8xbf16>
    %cst_55 = arith.constant dense<0.000000e+00> : vector<16xf32>
    %77 = vector.multi_reduction <add>, %52, %cst_55 [1] : vector<16x32xf32> to vector<16xf32>
    %78 = vector.shape_cast %77 : vector<16xf32> to vector<16x1xf32>
    %cst_56 = arith.constant 3.200000e+01 : f32
    %79 = vector.broadcast %cst_56 : f32 to vector<16x1xf32>
    %80 = arith.divf %78, %79 : vector<16x1xf32>
    %81 = vector.broadcast %80 : vector<16x1xf32> to vector<16x32xf32>
    %82 = arith.subf %52, %81 : vector<16x32xf32>
    %83 = arith.mulf %82, %82 : vector<16x32xf32>
    %cst_57 = arith.constant dense<0.000000e+00> : vector<16xf32>
    %84 = vector.multi_reduction <add>, %83, %cst_57 [1] : vector<16x32xf32> to vector<16xf32>
    %85 = vector.shape_cast %84 : vector<16xf32> to vector<16x1xf32>
    %cst_58 = arith.constant 3.200000e+01 : f32
    %86 = vector.broadcast %cst_58 : f32 to vector<16x1xf32>
    %87 = arith.divf %85, %86 : vector<16x1xf32>
    %cst_59 = arith.constant 9.99999974E-6 : f32
    %88 = vector.broadcast %cst_59 : f32 to vector<16x1xf32>
    %89 = arith.addf %87, %88 : vector<16x1xf32>
    %90 = math.rsqrt %89 : vector<16x1xf32>
    %91 = vector.broadcast %90 : vector<16x1xf32> to vector<16x32xf32>
    %92 = arith.mulf %82, %91 : vector<16x32xf32>
    %93 = vector.broadcast %66 : vector<1x32xf32> to vector<16x32xf32>
    %94 = arith.mulf %92, %93 : vector<16x32xf32>
    %95 = vector.broadcast %68 : vector<1x32xf32> to vector<16x32xf32>
    %96 = arith.addf %94, %95 : vector<16x32xf32>
    %97 = arith.truncf %96 : vector<16x32xf32> to vector<16x32xbf16>
    %cst_60 = arith.constant dense<0.000000e+00> : vector<16x96xf32>
    %98 = tpu.matmul %97, %70, %cst_60 {dimension_numbers = #tpu.dot_dimension_numbers<[1], [0], [0], [1], [0, 0, 1, 1], [], []>} : vector<16x32xbf16>, vector<32x96xbf16>, vector<16x96xf32> -> vector<16x96xf32>
    %99 = vector.extract_strided_slice %98 {offsets = [0, 0], sizes = [16, 32], strides = [1, 1]} : vector<16x96xf32> to vector<16x32xf32>
    %100 = arith.truncf %99 : vector<16x32xf32> to vector<16x32xbf16>
    %101 = vector.extract_strided_slice %98 {offsets = [0, 32], sizes = [16, 32], strides = [1, 1]} : vector<16x96xf32> to vector<16x32xf32>
    %102 = arith.truncf %101 : vector<16x32xf32> to vector<16x32xbf16>
    %103 = vector.extract_strided_slice %98 {offsets = [0, 64], sizes = [16, 32], strides = [1, 1]} : vector<16x96xf32> to vector<16x32xf32>
    %104 = arith.truncf %103 : vector<16x32xf32> to vector<16x32xbf16>
    %105 = vector.extract_strided_slice %100 {offsets = [0, 0], sizes = [16, 8], strides = [1, 1]} : vector<16x32xbf16> to vector<16x8xbf16>
    %106 = vector.extract_strided_slice %102 {offsets = [0, 0], sizes = [16, 8], strides = [1, 1]} : vector<16x32xbf16> to vector<16x8xbf16>
    %107 = vector.extract_strided_slice %104 {offsets = [0, 0], sizes = [16, 8], strides = [1, 1]} : vector<16x32xbf16> to vector<16x8xbf16>
    %cst_61 = arith.constant dense<0.000000e+00> : vector<16x16xf32>
    %108 = tpu.matmul %105, %106, %cst_61 {dimension_numbers = #tpu.dot_dimension_numbers<[1], [1], [0], [0], [0, 0, 1, 0], [], []>} : vector<16x8xbf16>, vector<16x8xbf16>, vector<16x16xf32> -> vector<16x16xf32>
    %cst_62 = arith.constant dense<0.000000e+00> : vector<16x128xf32>
    %109 = tpu.matmul %105, %76, %cst_62 {dimension_numbers = #tpu.dot_dimension_numbers<[1], [1], [0], [0], [0, 0, 1, 0], [], []>} : vector<16x8xbf16>, vector<128x8xbf16>, vector<16x128xf32> -> vector<16x128xf32>
    %c113_i32 = arith.constant 113 : i32
    %110 = tpu.dynamic_rotate %109 by %c113_i32 dim 1 {stride = 1 : si32, stride_dimension = 0 : si32} : vector<16x128xf32>, i32 -> vector<16x128xf32>
    %111 = vector.extract_strided_slice %110 {offsets = [0, 0], sizes = [16, 16], strides = [1, 1]} : vector<16x128xf32> to vector<16x16xf32>
    %112 = arith.addf %108, %111 : vector<16x16xf32>
    %113 = arith.addf %112, %64 : vector<16x16xf32>
    %cst_63 = arith.constant dense<0xFF800000> : vector<16xf32>
    %114 = vector.multi_reduction <maximumf>, %113, %cst_63 [1] : vector<16x16xf32> to vector<16xf32>
    %115 = vector.shape_cast %114 : vector<16xf32> to vector<16x1xf32>
    %116 = vector.broadcast %115 : vector<16x1xf32> to vector<16x16xf32>
    %117 = arith.subf %113, %116 : vector<16x16xf32>
    %118 = math.exp %117 : vector<16x16xf32>
    %cst_64 = arith.constant dense<0.000000e+00> : vector<16xf32>
    %119 = vector.multi_reduction <add>, %118, %cst_64 [1] : vector<16x16xf32> to vector<16xf32>
    %120 = vector.shape_cast %119 : vector<16xf32> to vector<16x1xf32>
    %121 = vector.broadcast %120 : vector<16x1xf32> to vector<16x16xf32>
    %122 = arith.divf %118, %121 : vector<16x16xf32>
    %123 = arith.truncf %122 : vector<16x16xf32> to vector<16x16xbf16>
    %cst_65 = arith.constant dense<0.000000e+00> : vector<16x8xf32>
    %124 = tpu.matmul %123, %107, %cst_65 {dimension_numbers = #tpu.dot_dimension_numbers<[1], [0], [0], [1], [0, 0, 1, 1], [], []>} : vector<16x16xbf16>, vector<16x8xbf16>, vector<16x8xf32> -> vector<16x8xf32>
    %125 = vector.extract_strided_slice %100 {offsets = [0, 8], sizes = [16, 8], strides = [1, 1]} : vector<16x32xbf16> to vector<16x8xbf16>
    %126 = vector.extract_strided_slice %102 {offsets = [0, 8], sizes = [16, 8], strides = [1, 1]} : vector<16x32xbf16> to vector<16x8xbf16>
    %127 = vector.extract_strided_slice %104 {offsets = [0, 8], sizes = [16, 8], strides = [1, 1]} : vector<16x32xbf16> to vector<16x8xbf16>
    %cst_66 = arith.constant dense<0.000000e+00> : vector<16x16xf32>
    %128 = tpu.matmul %125, %126, %cst_66 {dimension_numbers = #tpu.dot_dimension_numbers<[1], [1], [0], [0], [0, 0, 1, 0], [], []>} : vector<16x8xbf16>, vector<16x8xbf16>, vector<16x16xf32> -> vector<16x16xf32>
    %cst_67 = arith.constant dense<0.000000e+00> : vector<16x128xf32>
    %129 = tpu.matmul %125, %76, %cst_67 {dimension_numbers = #tpu.dot_dimension_numbers<[1], [1], [0], [0], [0, 0, 1, 0], [], []>} : vector<16x8xbf16>, vector<128x8xbf16>, vector<16x128xf32> -> vector<16x128xf32>
    %c113_i32_68 = arith.constant 113 : i32
    %130 = tpu.dynamic_rotate %129 by %c113_i32_68 dim 1 {stride = 1 : si32, stride_dimension = 0 : si32} : vector<16x128xf32>, i32 -> vector<16x128xf32>
    %131 = vector.extract_strided_slice %130 {offsets = [0, 0], sizes = [16, 16], strides = [1, 1]} : vector<16x128xf32> to vector<16x16xf32>
    %132 = arith.addf %128, %131 : vector<16x16xf32>
    %133 = arith.addf %132, %64 : vector<16x16xf32>
    %cst_69 = arith.constant dense<0xFF800000> : vector<16xf32>
    %134 = vector.multi_reduction <maximumf>, %133, %cst_69 [1] : vector<16x16xf32> to vector<16xf32>
    %135 = vector.shape_cast %134 : vector<16xf32> to vector<16x1xf32>
    %136 = vector.broadcast %135 : vector<16x1xf32> to vector<16x16xf32>
    %137 = arith.subf %133, %136 : vector<16x16xf32>
    %138 = math.exp %137 : vector<16x16xf32>
    %cst_70 = arith.constant dense<0.000000e+00> : vector<16xf32>
    %139 = vector.multi_reduction <add>, %138, %cst_70 [1] : vector<16x16xf32> to vector<16xf32>
    %140 = vector.shape_cast %139 : vector<16xf32> to vector<16x1xf32>
    %141 = vector.broadcast %140 : vector<16x1xf32> to vector<16x16xf32>
    %142 = arith.divf %138, %141 : vector<16x16xf32>
    %143 = arith.truncf %142 : vector<16x16xf32> to vector<16x16xbf16>
    %cst_71 = arith.constant dense<0.000000e+00> : vector<16x8xf32>
    %144 = tpu.matmul %143, %127, %cst_71 {dimension_numbers = #tpu.dot_dimension_numbers<[1], [0], [0], [1], [0, 0, 1, 1], [], []>} : vector<16x16xbf16>, vector<16x8xbf16>, vector<16x8xf32> -> vector<16x8xf32>
    %145 = vector.extract_strided_slice %100 {offsets = [0, 16], sizes = [16, 8], strides = [1, 1]} : vector<16x32xbf16> to vector<16x8xbf16>
    %146 = vector.extract_strided_slice %102 {offsets = [0, 16], sizes = [16, 8], strides = [1, 1]} : vector<16x32xbf16> to vector<16x8xbf16>
    %147 = vector.extract_strided_slice %104 {offsets = [0, 16], sizes = [16, 8], strides = [1, 1]} : vector<16x32xbf16> to vector<16x8xbf16>
    %cst_72 = arith.constant dense<0.000000e+00> : vector<16x16xf32>
    %148 = tpu.matmul %145, %146, %cst_72 {dimension_numbers = #tpu.dot_dimension_numbers<[1], [1], [0], [0], [0, 0, 1, 0], [], []>} : vector<16x8xbf16>, vector<16x8xbf16>, vector<16x16xf32> -> vector<16x16xf32>
    %cst_73 = arith.constant dense<0.000000e+00> : vector<16x128xf32>
    %149 = tpu.matmul %145, %76, %cst_73 {dimension_numbers = #tpu.dot_dimension_numbers<[1], [1], [0], [0], [0, 0, 1, 0], [], []>} : vector<16x8xbf16>, vector<128x8xbf16>, vector<16x128xf32> -> vector<16x128xf32>
    %c113_i32_74 = arith.constant 113 : i32
    %150 = tpu.dynamic_rotate %149 by %c113_i32_74 dim 1 {stride = 1 : si32, stride_dimension = 0 : si32} : vector<16x128xf32>, i32 -> vector<16x128xf32>
    %151 = vector.extract_strided_slice %150 {offsets = [0, 0], sizes = [16, 16], strides = [1, 1]} : vector<16x128xf32> to vector<16x16xf32>
    %152 = arith.addf %148, %151 : vector<16x16xf32>
    %153 = arith.addf %152, %64 : vector<16x16xf32>
    %cst_75 = arith.constant dense<0xFF800000> : vector<16xf32>
    %154 = vector.multi_reduction <maximumf>, %153, %cst_75 [1] : vector<16x16xf32> to vector<16xf32>
    %155 = vector.shape_cast %154 : vector<16xf32> to vector<16x1xf32>
    %156 = vector.broadcast %155 : vector<16x1xf32> to vector<16x16xf32>
    %157 = arith.subf %153, %156 : vector<16x16xf32>
    %158 = math.exp %157 : vector<16x16xf32>
    %cst_76 = arith.constant dense<0.000000e+00> : vector<16xf32>
    %159 = vector.multi_reduction <add>, %158, %cst_76 [1] : vector<16x16xf32> to vector<16xf32>
    %160 = vector.shape_cast %159 : vector<16xf32> to vector<16x1xf32>
    %161 = vector.broadcast %160 : vector<16x1xf32> to vector<16x16xf32>
    %162 = arith.divf %158, %161 : vector<16x16xf32>
    %163 = arith.truncf %162 : vector<16x16xf32> to vector<16x16xbf16>
    %cst_77 = arith.constant dense<0.000000e+00> : vector<16x8xf32>
    %164 = tpu.matmul %163, %147, %cst_77 {dimension_numbers = #tpu.dot_dimension_numbers<[1], [0], [0], [1], [0, 0, 1, 1], [], []>} : vector<16x16xbf16>, vector<16x8xbf16>, vector<16x8xf32> -> vector<16x8xf32>
    %165 = vector.extract_strided_slice %100 {offsets = [0, 24], sizes = [16, 8], strides = [1, 1]} : vector<16x32xbf16> to vector<16x8xbf16>
    %166 = vector.extract_strided_slice %102 {offsets = [0, 24], sizes = [16, 8], strides = [1, 1]} : vector<16x32xbf16> to vector<16x8xbf16>
    %167 = vector.extract_strided_slice %104 {offsets = [0, 24], sizes = [16, 8], strides = [1, 1]} : vector<16x32xbf16> to vector<16x8xbf16>
    %cst_78 = arith.constant dense<0.000000e+00> : vector<16x16xf32>
    %168 = tpu.matmul %165, %166, %cst_78 {dimension_numbers = #tpu.dot_dimension_numbers<[1], [1], [0], [0], [0, 0, 1, 0], [], []>} : vector<16x8xbf16>, vector<16x8xbf16>, vector<16x16xf32> -> vector<16x16xf32>
    %cst_79 = arith.constant dense<0.000000e+00> : vector<16x128xf32>
    %169 = tpu.matmul %165, %76, %cst_79 {dimension_numbers = #tpu.dot_dimension_numbers<[1], [1], [0], [0], [0, 0, 1, 0], [], []>} : vector<16x8xbf16>, vector<128x8xbf16>, vector<16x128xf32> -> vector<16x128xf32>
    %c113_i32_80 = arith.constant 113 : i32
    %170 = tpu.dynamic_rotate %169 by %c113_i32_80 dim 1 {stride = 1 : si32, stride_dimension = 0 : si32} : vector<16x128xf32>, i32 -> vector<16x128xf32>
    %171 = vector.extract_strided_slice %170 {offsets = [0, 0], sizes = [16, 16], strides = [1, 1]} : vector<16x128xf32> to vector<16x16xf32>
    %172 = arith.addf %168, %171 : vector<16x16xf32>
    %173 = arith.addf %172, %64 : vector<16x16xf32>
    %cst_81 = arith.constant dense<0xFF800000> : vector<16xf32>
    %174 = vector.multi_reduction <maximumf>, %173, %cst_81 [1] : vector<16x16xf32> to vector<16xf32>
    %175 = vector.shape_cast %174 : vector<16xf32> to vector<16x1xf32>
    %176 = vector.broadcast %175 : vector<16x1xf32> to vector<16x16xf32>
    %177 = arith.subf %173, %176 : vector<16x16xf32>
    %178 = math.exp %177 : vector<16x16xf32>
    %cst_82 = arith.constant dense<0.000000e+00> : vector<16xf32>
    %179 = vector.multi_reduction <add>, %178, %cst_82 [1] : vector<16x16xf32> to vector<16xf32>
    %180 = vector.shape_cast %179 : vector<16xf32> to vector<16x1xf32>
    %181 = vector.broadcast %180 : vector<16x1xf32> to vector<16x16xf32>
    %182 = arith.divf %178, %181 : vector<16x16xf32>
    %183 = arith.truncf %182 : vector<16x16xf32> to vector<16x16xbf16>
    %cst_83 = arith.constant dense<0.000000e+00> : vector<16x8xf32>
    %184 = tpu.matmul %183, %167, %cst_83 {dimension_numbers = #tpu.dot_dimension_numbers<[1], [0], [0], [1], [0, 0, 1, 1], [], []>} : vector<16x16xbf16>, vector<16x8xbf16>, vector<16x8xf32> -> vector<16x8xf32>
    %185 = tpu.concatenate %124, %144, %164, %184 in 1 : vector<16x8xf32>, vector<16x8xf32>, vector<16x8xf32>, vector<16x8xf32> -> vector<16x32xf32>
    %186 = arith.truncf %185 : vector<16x32xf32> to vector<16x32xbf16>
    %cst_84 = arith.constant dense<0.000000e+00> : vector<16x32xf32>
    %187 = tpu.matmul %186, %72, %cst_84 {dimension_numbers = #tpu.dot_dimension_numbers<[1], [0], [0], [1], [0, 0, 1, 1], [], []>} : vector<16x32xbf16>, vector<32x32xbf16>, vector<16x32xf32> -> vector<16x32xf32>
    %188 = arith.addf %52, %187 : vector<16x32xf32>
    %189 = vector.broadcast %74 : vector<1x32xf32> to vector<16x32xf32>
    %190 = arith.addf %188, %189 : vector<16x32xf32>
    %c0_85 = arith.constant 0 : index
    %c0_86 = arith.constant 0 : index
    %c0_87 = arith.constant 0 : index
    %191 = vector.load %arg16[%c0_85, %c0_86, %c0_87] : memref<1x1x32xf32, #tpu.memory_space<vmem>>, vector<1x1x32xf32>
    %192 = vector.shape_cast %191 : vector<1x1x32xf32> to vector<1x32xf32>
    %c0_88 = arith.constant 0 : index
    %c0_89 = arith.constant 0 : index
    %c0_90 = arith.constant 0 : index
    %193 = vector.load %arg17[%c0_88, %c0_89, %c0_90] : memref<1x1x32xf32, #tpu.memory_space<vmem>>, vector<1x1x32xf32>
    %194 = vector.shape_cast %193 : vector<1x1x32xf32> to vector<1x32xf32>
    %c0_91 = arith.constant 0 : index
    %c0_92 = arith.constant 0 : index
    %c0_93 = arith.constant 0 : index
    %195 = vector.load %arg18[%c0_91, %c0_92, %c0_93] : memref<1x32x128xbf16, #tpu.memory_space<vmem>>, vector<1x32x128xbf16>
    %196 = vector.shape_cast %195 : vector<1x32x128xbf16> to vector<32x128xbf16>
    %c0_94 = arith.constant 0 : index
    %c0_95 = arith.constant 0 : index
    %c0_96 = arith.constant 0 : index
    %197 = vector.load %arg19[%c0_94, %c0_95, %c0_96] : memref<1x1x128xf32, #tpu.memory_space<vmem>>, vector<1x1x128xf32>
    %198 = vector.shape_cast %197 : vector<1x1x128xf32> to vector<1x128xf32>
    %c0_97 = arith.constant 0 : index
    %c0_98 = arith.constant 0 : index
    %c0_99 = arith.constant 0 : index
    %199 = vector.load %arg20[%c0_97, %c0_98, %c0_99] : memref<1x31x64xf32, #tpu.memory_space<vmem>>, vector<1x31x64xf32>
    %200 = vector.shape_cast %199 : vector<1x31x64xf32> to vector<31x64xf32>
    %c0_100 = arith.constant 0 : index
    %c0_101 = arith.constant 0 : index
    %c0_102 = arith.constant 0 : index
    %201 = vector.load %arg21[%c0_100, %c0_101, %c0_102] : memref<1x1x64xf32, #tpu.memory_space<vmem>>, vector<1x1x64xf32>
    %202 = vector.shape_cast %201 : vector<1x1x64xf32> to vector<1x64xf32>
    %c0_103 = arith.constant 0 : index
    %c0_104 = arith.constant 0 : index
    %c0_105 = arith.constant 0 : index
    %203 = vector.load %arg22[%c0_103, %c0_104, %c0_105] : memref<1x1x64xf32, #tpu.memory_space<vmem>>, vector<1x1x64xf32>
    %204 = vector.shape_cast %203 : vector<1x1x64xf32> to vector<1x64xf32>
    %c0_106 = arith.constant 0 : index
    %c0_107 = arith.constant 0 : index
    %c0_108 = arith.constant 0 : index
    %205 = vector.load %arg23[%c0_106, %c0_107, %c0_108] : memref<1x1x64xf32, #tpu.memory_space<vmem>>, vector<1x1x64xf32>
    %206 = vector.shape_cast %205 : vector<1x1x64xf32> to vector<1x64xf32>
    %c0_109 = arith.constant 0 : index
    %c0_110 = arith.constant 0 : index
    %c0_111 = arith.constant 0 : index
    %207 = vector.load %arg24[%c0_109, %c0_110, %c0_111] : memref<1x64x32xbf16, #tpu.memory_space<vmem>>, vector<1x64x32xbf16>
    %208 = vector.shape_cast %207 : vector<1x64x32xbf16> to vector<64x32xbf16>
    %c0_112 = arith.constant 0 : index
    %c0_113 = arith.constant 0 : index
    %c0_114 = arith.constant 0 : index
    %209 = vector.load %arg25[%c0_112, %c0_113, %c0_114] : memref<1x1x32xf32, #tpu.memory_space<vmem>>, vector<1x1x32xf32>
    %210 = vector.shape_cast %209 : vector<1x1x32xf32> to vector<1x32xf32>
    %cst_115 = arith.constant dense<0.000000e+00> : vector<16xf32>
    %211 = vector.multi_reduction <add>, %190, %cst_115 [1] : vector<16x32xf32> to vector<16xf32>
    %212 = vector.shape_cast %211 : vector<16xf32> to vector<16x1xf32>
    %cst_116 = arith.constant 3.200000e+01 : f32
    %213 = vector.broadcast %cst_116 : f32 to vector<16x1xf32>
    %214 = arith.divf %212, %213 : vector<16x1xf32>
    %215 = vector.broadcast %214 : vector<16x1xf32> to vector<16x32xf32>
    %216 = arith.subf %190, %215 : vector<16x32xf32>
    %217 = arith.mulf %216, %216 : vector<16x32xf32>
    %cst_117 = arith.constant dense<0.000000e+00> : vector<16xf32>
    %218 = vector.multi_reduction <add>, %217, %cst_117 [1] : vector<16x32xf32> to vector<16xf32>
    %219 = vector.shape_cast %218 : vector<16xf32> to vector<16x1xf32>
    %cst_118 = arith.constant 3.200000e+01 : f32
    %220 = vector.broadcast %cst_118 : f32 to vector<16x1xf32>
    %221 = arith.divf %219, %220 : vector<16x1xf32>
    %cst_119 = arith.constant 9.99999974E-6 : f32
    %222 = vector.broadcast %cst_119 : f32 to vector<16x1xf32>
    %223 = arith.addf %221, %222 : vector<16x1xf32>
    %224 = math.rsqrt %223 : vector<16x1xf32>
    %225 = vector.broadcast %224 : vector<16x1xf32> to vector<16x32xf32>
    %226 = arith.mulf %216, %225 : vector<16x32xf32>
    %227 = vector.broadcast %192 : vector<1x32xf32> to vector<16x32xf32>
    %228 = arith.mulf %226, %227 : vector<16x32xf32>
    %229 = vector.broadcast %194 : vector<1x32xf32> to vector<16x32xf32>
    %230 = arith.addf %228, %229 : vector<16x32xf32>
    %231 = arith.truncf %230 : vector<16x32xf32> to vector<16x32xbf16>
    %cst_120 = arith.constant dense<0.000000e+00> : vector<16x128xf32>
    %232 = tpu.matmul %231, %196, %cst_120 {dimension_numbers = #tpu.dot_dimension_numbers<[1], [0], [0], [1], [0, 0, 1, 1], [], []>} : vector<16x32xbf16>, vector<32x128xbf16>, vector<16x128xf32> -> vector<16x128xf32>
    %233 = vector.broadcast %198 : vector<1x128xf32> to vector<16x128xf32>
    %234 = arith.addf %232, %233 : vector<16x128xf32>
    %235 = vector.extract_strided_slice %234 {offsets = [0, 0], sizes = [16, 64], strides = [1, 1]} : vector<16x128xf32> to vector<16x64xf32>
    %236 = vector.extract_strided_slice %234 {offsets = [0, 64], sizes = [16, 64], strides = [1, 1]} : vector<16x128xf32> to vector<16x64xf32>
    %237 = arith.negf %236 : vector<16x64xf32>
    %238 = math.exp %237 : vector<16x64xf32>
    %cst_121 = arith.constant 1.000000e+00 : f32
    %239 = vector.broadcast %cst_121 : f32 to vector<16x64xf32>
    %240 = arith.addf %239, %238 : vector<16x64xf32>
    %241 = arith.divf %239, %240 : vector<16x64xf32>
    %242 = arith.mulf %235, %241 : vector<16x64xf32>
    %cst_122 = arith.constant 0.000000e+00 : f32
    %243 = vector.broadcast %cst_122 : f32 to vector<16x64xf32>
    %c0_123 = arith.constant 0 : index
    %c0_124 = arith.constant 0 : index
    %244 = vector.load %arg37[%c0_123, %c0_124] : memref<48x64xf32, #tpu.memory_space<vmem>>, vector<16x64xf32>
    tpu.vector_store %arg37[%c0_123, %c0_124], %243 {strides = array<i32>} : memref<48x64xf32, #tpu.memory_space<vmem>>, vector<16x64xf32>,
    %cst_125 = arith.constant 0.000000e+00 : f32
    %245 = vector.broadcast %cst_125 : f32 to vector<16x64xf32>
    %c32 = arith.constant 32 : index
    %c0_126 = arith.constant 0 : index
    %246 = vector.load %arg37[%c32, %c0_126] : memref<48x64xf32, #tpu.memory_space<vmem>>, vector<16x64xf32>
    tpu.vector_store %arg37[%c32, %c0_126], %245 {strides = array<i32>} : memref<48x64xf32, #tpu.memory_space<vmem>>, vector<16x64xf32>,
    %c16 = arith.constant 16 : index
    %c0_127 = arith.constant 0 : index
    %247 = vector.load %arg37[%c16, %c0_127] : memref<48x64xf32, #tpu.memory_space<vmem>>, vector<16x64xf32>
    tpu.vector_store %arg37[%c16, %c0_127], %242 {strides = array<i32>} : memref<48x64xf32, #tpu.memory_space<vmem>>, vector<16x64xf32>,
    %cst_128 = arith.constant 0.000000e+00 : f32
    %248 = vector.broadcast %cst_128 : f32 to vector<16x64xf32>
    %c1 = arith.constant 1 : index
    %c0_129 = arith.constant 0 : index
    %249 = vector.load %arg37[%c1, %c0_129] : memref<48x64xf32, #tpu.memory_space<vmem>>, vector<16x64xf32>
    %250 = vector.extract_strided_slice %200 {offsets = [0, 0], sizes = [1, 64], strides = [1, 1]} : vector<31x64xf32> to vector<1x64xf32>
    %251 = vector.broadcast %250 : vector<1x64xf32> to vector<16x64xf32>
    %252 = arith.mulf %249, %251 : vector<16x64xf32>
    %253 = arith.addf %248, %252 : vector<16x64xf32>
    %c2 = arith.constant 2 : index
    %c0_130 = arith.constant 0 : index
    %254 = vector.load %arg37[%c2, %c0_130] : memref<48x64xf32, #tpu.memory_space<vmem>>, vector<16x64xf32>
    %255 = vector.extract_strided_slice %200 {offsets = [1, 0], sizes = [1, 64], strides = [1, 1]} : vector<31x64xf32> to vector<1x64xf32>
    %256 = vector.broadcast %255 : vector<1x64xf32> to vector<16x64xf32>
    %257 = arith.mulf %254, %256 : vector<16x64xf32>
    %258 = arith.addf %253, %257 : vector<16x64xf32>
    %c3 = arith.constant 3 : index
    %c0_131 = arith.constant 0 : index
    %259 = vector.load %arg37[%c3, %c0_131] : memref<48x64xf32, #tpu.memory_space<vmem>>, vector<16x64xf32>
    %260 = vector.extract_strided_slice %200 {offsets = [2, 0], sizes = [1, 64], strides = [1, 1]} : vector<31x64xf32> to vector<1x64xf32>
    %261 = vector.broadcast %260 : vector<1x64xf32> to vector<16x64xf32>
    %262 = arith.mulf %259, %261 : vector<16x64xf32>
    %263 = arith.addf %258, %262 : vector<16x64xf32>
    %c4 = arith.constant 4 : index
    %c0_132 = arith.constant 0 : index
    %264 = vector.load %arg37[%c4, %c0_132] : memref<48x64xf32, #tpu.memory_space<vmem>>, vector<16x64xf32>
    %265 = vector.extract_strided_slice %200 {offsets = [3, 0], sizes = [1, 64], strides = [1, 1]} : vector<31x64xf32> to vector<1x64xf32>
    %266 = vector.broadcast %265 : vector<1x64xf32> to vector<16x64xf32>
    %267 = arith.mulf %264, %266 : vector<16x64xf32>
    %268 = arith.addf %263, %267 : vector<16x64xf32>
    %c5 = arith.constant 5 : index
    %c0_133 = arith.constant 0 : index
    %269 = vector.load %arg37[%c5, %c0_133] : memref<48x64xf32, #tpu.memory_space<vmem>>, vector<16x64xf32>
    %270 = vector.extract_strided_slice %200 {offsets = [4, 0], sizes = [1, 64], strides = [1, 1]} : vector<31x64xf32> to vector<1x64xf32>
    %271 = vector.broadcast %270 : vector<1x64xf32> to vector<16x64xf32>
    %272 = arith.mulf %269, %271 : vector<16x64xf32>
    %273 = arith.addf %268, %272 : vector<16x64xf32>
    %c6 = arith.constant 6 : index
    %c0_134 = arith.constant 0 : index
    %274 = vector.load %arg37[%c6, %c0_134] : memref<48x64xf32, #tpu.memory_space<vmem>>, vector<16x64xf32>
    %275 = vector.extract_strided_slice %200 {offsets = [5, 0], sizes = [1, 64], strides = [1, 1]} : vector<31x64xf32> to vector<1x64xf32>
    %276 = vector.broadcast %275 : vector<1x64xf32> to vector<16x64xf32>
    %277 = arith.mulf %274, %276 : vector<16x64xf32>
    %278 = arith.addf %273, %277 : vector<16x64xf32>
    %c7 = arith.constant 7 : index
    %c0_135 = arith.constant 0 : index
    %279 = vector.load %arg37[%c7, %c0_135] : memref<48x64xf32, #tpu.memory_space<vmem>>, vector<16x64xf32>
    %280 = vector.extract_strided_slice %200 {offsets = [6, 0], sizes = [1, 64], strides = [1, 1]} : vector<31x64xf32> to vector<1x64xf32>
    %281 = vector.broadcast %280 : vector<1x64xf32> to vector<16x64xf32>
    %282 = arith.mulf %279, %281 : vector<16x64xf32>
    %283 = arith.addf %278, %282 : vector<16x64xf32>
    %c8 = arith.constant 8 : index
    %c0_136 = arith.constant 0 : index
    %284 = vector.load %arg37[%c8, %c0_136] : memref<48x64xf32, #tpu.memory_space<vmem>>, vector<16x64xf32>
    %285 = vector.extract_strided_slice %200 {offsets = [7, 0], sizes = [1, 64], strides = [1, 1]} : vector<31x64xf32> to vector<1x64xf32>
    %286 = vector.broadcast %285 : vector<1x64xf32> to vector<16x64xf32>
    %287 = arith.mulf %284, %286 : vector<16x64xf32>
    %288 = arith.addf %283, %287 : vector<16x64xf32>
    %c9 = arith.constant 9 : index
    %c0_137 = arith.constant 0 : index
    %289 = vector.load %arg37[%c9, %c0_137] : memref<48x64xf32, #tpu.memory_space<vmem>>, vector<16x64xf32>
    %290 = vector.extract_strided_slice %200 {offsets = [8, 0], sizes = [1, 64], strides = [1, 1]} : vector<31x64xf32> to vector<1x64xf32>
    %291 = vector.broadcast %290 : vector<1x64xf32> to vector<16x64xf32>
    %292 = arith.mulf %289, %291 : vector<16x64xf32>
    %293 = arith.addf %288, %292 : vector<16x64xf32>
    %c10 = arith.constant 10 : index
    %c0_138 = arith.constant 0 : index
    %294 = vector.load %arg37[%c10, %c0_138] : memref<48x64xf32, #tpu.memory_space<vmem>>, vector<16x64xf32>
    %295 = vector.extract_strided_slice %200 {offsets = [9, 0], sizes = [1, 64], strides = [1, 1]} : vector<31x64xf32> to vector<1x64xf32>
    %296 = vector.broadcast %295 : vector<1x64xf32> to vector<16x64xf32>
    %297 = arith.mulf %294, %296 : vector<16x64xf32>
    %298 = arith.addf %293, %297 : vector<16x64xf32>
    %c11 = arith.constant 11 : index
    %c0_139 = arith.constant 0 : index
    %299 = vector.load %arg37[%c11, %c0_139] : memref<48x64xf32, #tpu.memory_space<vmem>>, vector<16x64xf32>
    %300 = vector.extract_strided_slice %200 {offsets = [10, 0], sizes = [1, 64], strides = [1, 1]} : vector<31x64xf32> to vector<1x64xf32>
    %301 = vector.broadcast %300 : vector<1x64xf32> to vector<16x64xf32>
    %302 = arith.mulf %299, %301 : vector<16x64xf32>
    %303 = arith.addf %298, %302 : vector<16x64xf32>
    %c12 = arith.constant 12 : index
    %c0_140 = arith.constant 0 : index
    %304 = vector.load %arg37[%c12, %c0_140] : memref<48x64xf32, #tpu.memory_space<vmem>>, vector<16x64xf32>
    %305 = vector.extract_strided_slice %200 {offsets = [11, 0], sizes = [1, 64], strides = [1, 1]} : vector<31x64xf32> to vector<1x64xf32>
    %306 = vector.broadcast %305 : vector<1x64xf32> to vector<16x64xf32>
    %307 = arith.mulf %304, %306 : vector<16x64xf32>
    %308 = arith.addf %303, %307 : vector<16x64xf32>
    %c13 = arith.constant 13 : index
    %c0_141 = arith.constant 0 : index
    %309 = vector.load %arg37[%c13, %c0_141] : memref<48x64xf32, #tpu.memory_space<vmem>>, vector<16x64xf32>
    %310 = vector.extract_strided_slice %200 {offsets = [12, 0], sizes = [1, 64], strides = [1, 1]} : vector<31x64xf32> to vector<1x64xf32>
    %311 = vector.broadcast %310 : vector<1x64xf32> to vector<16x64xf32>
    %312 = arith.mulf %309, %311 : vector<16x64xf32>
    %313 = arith.addf %308, %312 : vector<16x64xf32>
    %c14 = arith.constant 14 : index
    %c0_142 = arith.constant 0 : index
    %314 = vector.load %arg37[%c14, %c0_142] : memref<48x64xf32, #tpu.memory_space<vmem>>, vector<16x64xf32>
    %315 = vector.extract_strided_slice %200 {offsets = [13, 0], sizes = [1, 64], strides = [1, 1]} : vector<31x64xf32> to vector<1x64xf32>
    %316 = vector.broadcast %315 : vector<1x64xf32> to vector<16x64xf32>
    %317 = arith.mulf %314, %316 : vector<16x64xf32>
    %318 = arith.addf %313, %317 : vector<16x64xf32>
    %c15 = arith.constant 15 : index
    %c0_143 = arith.constant 0 : index
    %319 = vector.load %arg37[%c15, %c0_143] : memref<48x64xf32, #tpu.memory_space<vmem>>, vector<16x64xf32>
    %320 = vector.extract_strided_slice %200 {offsets = [14, 0], sizes = [1, 64], strides = [1, 1]} : vector<31x64xf32> to vector<1x64xf32>
    %321 = vector.broadcast %320 : vector<1x64xf32> to vector<16x64xf32>
    %322 = arith.mulf %319, %321 : vector<16x64xf32>
    %323 = arith.addf %318, %322 : vector<16x64xf32>
    %c16_144 = arith.constant 16 : index
    %c0_145 = arith.constant 0 : index
    %324 = vector.load %arg37[%c16_144, %c0_145] : memref<48x64xf32, #tpu.memory_space<vmem>>, vector<16x64xf32>
    %325 = vector.extract_strided_slice %200 {offsets = [15, 0], sizes = [1, 64], strides = [1, 1]} : vector<31x64xf32> to vector<1x64xf32>
    %326 = vector.broadcast %325 : vector<1x64xf32> to vector<16x64xf32>
    %327 = arith.mulf %324, %326 : vector<16x64xf32>
    %328 = arith.addf %323, %327 : vector<16x64xf32>
    %c17 = arith.constant 17 : index
    %c0_146 = arith.constant 0 : index
    %329 = vector.load %arg37[%c17, %c0_146] : memref<48x64xf32, #tpu.memory_space<vmem>>, vector<16x64xf32>
    %330 = vector.extract_strided_slice %200 {offsets = [16, 0], sizes = [1, 64], strides = [1, 1]} : vector<31x64xf32> to vector<1x64xf32>
    %331 = vector.broadcast %330 : vector<1x64xf32> to vector<16x64xf32>
    %332 = arith.mulf %329, %331 : vector<16x64xf32>
    %333 = arith.addf %328, %332 : vector<16x64xf32>
    %c18 = arith.constant 18 : index
    %c0_147 = arith.constant 0 : index
    %334 = vector.load %arg37[%c18, %c0_147] : memref<48x64xf32, #tpu.memory_space<vmem>>, vector<16x64xf32>
    %335 = vector.extract_strided_slice %200 {offsets = [17, 0], sizes = [1, 64], strides = [1, 1]} : vector<31x64xf32> to vector<1x64xf32>
    %336 = vector.broadcast %335 : vector<1x64xf32> to vector<16x64xf32>
    %337 = arith.mulf %334, %336 : vector<16x64xf32>
    %338 = arith.addf %333, %337 : vector<16x64xf32>
    %c19 = arith.constant 19 : index
    %c0_148 = arith.constant 0 : index
    %339 = vector.load %arg37[%c19, %c0_148] : memref<48x64xf32, #tpu.memory_space<vmem>>, vector<16x64xf32>
    %340 = vector.extract_strided_slice %200 {offsets = [18, 0], sizes = [1, 64], strides = [1, 1]} : vector<31x64xf32> to vector<1x64xf32>
    %341 = vector.broadcast %340 : vector<1x64xf32> to vector<16x64xf32>
    %342 = arith.mulf %339, %341 : vector<16x64xf32>
    %343 = arith.addf %338, %342 : vector<16x64xf32>
    %c20 = arith.constant 20 : index
    %c0_149 = arith.constant 0 : index
    %344 = vector.load %arg37[%c20, %c0_149] : memref<48x64xf32, #tpu.memory_space<vmem>>, vector<16x64xf32>
    %345 = vector.extract_strided_slice %200 {offsets = [19, 0], sizes = [1, 64], strides = [1, 1]} : vector<31x64xf32> to vector<1x64xf32>
    %346 = vector.broadcast %345 : vector<1x64xf32> to vector<16x64xf32>
    %347 = arith.mulf %344, %346 : vector<16x64xf32>
    %348 = arith.addf %343, %347 : vector<16x64xf32>
    %c21 = arith.constant 21 : index
    %c0_150 = arith.constant 0 : index
    %349 = vector.load %arg37[%c21, %c0_150] : memref<48x64xf32, #tpu.memory_space<vmem>>, vector<16x64xf32>
    %350 = vector.extract_strided_slice %200 {offsets = [20, 0], sizes = [1, 64], strides = [1, 1]} : vector<31x64xf32> to vector<1x64xf32>
    %351 = vector.broadcast %350 : vector<1x64xf32> to vector<16x64xf32>
    %352 = arith.mulf %349, %351 : vector<16x64xf32>
    %353 = arith.addf %348, %352 : vector<16x64xf32>
    %c22 = arith.constant 22 : index
    %c0_151 = arith.constant 0 : index
    %354 = vector.load %arg37[%c22, %c0_151] : memref<48x64xf32, #tpu.memory_space<vmem>>, vector<16x64xf32>
    %355 = vector.extract_strided_slice %200 {offsets = [21, 0], sizes = [1, 64], strides = [1, 1]} : vector<31x64xf32> to vector<1x64xf32>
    %356 = vector.broadcast %355 : vector<1x64xf32> to vector<16x64xf32>
    %357 = arith.mulf %354, %356 : vector<16x64xf32>
    %358 = arith.addf %353, %357 : vector<16x64xf32>
    %c23 = arith.constant 23 : index
    %c0_152 = arith.constant 0 : index
    %359 = vector.load %arg37[%c23, %c0_152] : memref<48x64xf32, #tpu.memory_space<vmem>>, vector<16x64xf32>
    %360 = vector.extract_strided_slice %200 {offsets = [22, 0], sizes = [1, 64], strides = [1, 1]} : vector<31x64xf32> to vector<1x64xf32>
    %361 = vector.broadcast %360 : vector<1x64xf32> to vector<16x64xf32>
    %362 = arith.mulf %359, %361 : vector<16x64xf32>
    %363 = arith.addf %358, %362 : vector<16x64xf32>
    %c24 = arith.constant 24 : index
    %c0_153 = arith.constant 0 : index
    %364 = vector.load %arg37[%c24, %c0_153] : memref<48x64xf32, #tpu.memory_space<vmem>>, vector<16x64xf32>
    %365 = vector.extract_strided_slice %200 {offsets = [23, 0], sizes = [1, 64], strides = [1, 1]} : vector<31x64xf32> to vector<1x64xf32>
    %366 = vector.broadcast %365 : vector<1x64xf32> to vector<16x64xf32>
    %367 = arith.mulf %364, %366 : vector<16x64xf32>
    %368 = arith.addf %363, %367 : vector<16x64xf32>
    %c25 = arith.constant 25 : index
    %c0_154 = arith.constant 0 : index
    %369 = vector.load %arg37[%c25, %c0_154] : memref<48x64xf32, #tpu.memory_space<vmem>>, vector<16x64xf32>
    %370 = vector.extract_strided_slice %200 {offsets = [24, 0], sizes = [1, 64], strides = [1, 1]} : vector<31x64xf32> to vector<1x64xf32>
    %371 = vector.broadcast %370 : vector<1x64xf32> to vector<16x64xf32>
    %372 = arith.mulf %369, %371 : vector<16x64xf32>
    %373 = arith.addf %368, %372 : vector<16x64xf32>
    %c26 = arith.constant 26 : index
    %c0_155 = arith.constant 0 : index
    %374 = vector.load %arg37[%c26, %c0_155] : memref<48x64xf32, #tpu.memory_space<vmem>>, vector<16x64xf32>
    %375 = vector.extract_strided_slice %200 {offsets = [25, 0], sizes = [1, 64], strides = [1, 1]} : vector<31x64xf32> to vector<1x64xf32>
    %376 = vector.broadcast %375 : vector<1x64xf32> to vector<16x64xf32>
    %377 = arith.mulf %374, %376 : vector<16x64xf32>
    %378 = arith.addf %373, %377 : vector<16x64xf32>
    %c27 = arith.constant 27 : index
    %c0_156 = arith.constant 0 : index
    %379 = vector.load %arg37[%c27, %c0_156] : memref<48x64xf32, #tpu.memory_space<vmem>>, vector<16x64xf32>
    %380 = vector.extract_strided_slice %200 {offsets = [26, 0], sizes = [1, 64], strides = [1, 1]} : vector<31x64xf32> to vector<1x64xf32>
    %381 = vector.broadcast %380 : vector<1x64xf32> to vector<16x64xf32>
    %382 = arith.mulf %379, %381 : vector<16x64xf32>
    %383 = arith.addf %378, %382 : vector<16x64xf32>
    %c28 = arith.constant 28 : index
    %c0_157 = arith.constant 0 : index
    %384 = vector.load %arg37[%c28, %c0_157] : memref<48x64xf32, #tpu.memory_space<vmem>>, vector<16x64xf32>
    %385 = vector.extract_strided_slice %200 {offsets = [27, 0], sizes = [1, 64], strides = [1, 1]} : vector<31x64xf32> to vector<1x64xf32>
    %386 = vector.broadcast %385 : vector<1x64xf32> to vector<16x64xf32>
    %387 = arith.mulf %384, %386 : vector<16x64xf32>
    %388 = arith.addf %383, %387 : vector<16x64xf32>
    %c29 = arith.constant 29 : index
    %c0_158 = arith.constant 0 : index
    %389 = vector.load %arg37[%c29, %c0_158] : memref<48x64xf32, #tpu.memory_space<vmem>>, vector<16x64xf32>
    %390 = vector.extract_strided_slice %200 {offsets = [28, 0], sizes = [1, 64], strides = [1, 1]} : vector<31x64xf32> to vector<1x64xf32>
    %391 = vector.broadcast %390 : vector<1x64xf32> to vector<16x64xf32>
    %392 = arith.mulf %389, %391 : vector<16x64xf32>
    %393 = arith.addf %388, %392 : vector<16x64xf32>
    %c30 = arith.constant 30 : index
    %c0_159 = arith.constant 0 : index
    %394 = vector.load %arg37[%c30, %c0_159] : memref<48x64xf32, #tpu.memory_space<vmem>>, vector<16x64xf32>
    %395 = vector.extract_strided_slice %200 {offsets = [29, 0], sizes = [1, 64], strides = [1, 1]} : vector<31x64xf32> to vector<1x64xf32>
    %396 = vector.broadcast %395 : vector<1x64xf32> to vector<16x64xf32>
    %397 = arith.mulf %394, %396 : vector<16x64xf32>
    %398 = arith.addf %393, %397 : vector<16x64xf32>
    %c31 = arith.constant 31 : index
    %c0_160 = arith.constant 0 : index
    %399 = vector.load %arg37[%c31, %c0_160] : memref<48x64xf32, #tpu.memory_space<vmem>>, vector<16x64xf32>
    %400 = vector.extract_strided_slice %200 {offsets = [30, 0], sizes = [1, 64], strides = [1, 1]} : vector<31x64xf32> to vector<1x64xf32>
    %401 = vector.broadcast %400 : vector<1x64xf32> to vector<16x64xf32>
    %402 = arith.mulf %399, %401 : vector<16x64xf32>
    %403 = arith.addf %398, %402 : vector<16x64xf32>
    %404 = vector.broadcast %202 : vector<1x64xf32> to vector<16x64xf32>
    %405 = arith.addf %403, %404 : vector<16x64xf32>
    %406 = vector.broadcast %204 : vector<1x64xf32> to vector<16x64xf32>
    %407 = arith.mulf %405, %406 : vector<16x64xf32>
    %408 = vector.broadcast %206 : vector<1x64xf32> to vector<16x64xf32>
    %409 = arith.addf %407, %408 : vector<16x64xf32>
    %410 = arith.negf %409 : vector<16x64xf32>
    %411 = math.exp %410 : vector<16x64xf32>
    %cst_161 = arith.constant 1.000000e+00 : f32
    %412 = vector.broadcast %cst_161 : f32 to vector<16x64xf32>
    %413 = arith.addf %412, %411 : vector<16x64xf32>
    %414 = arith.divf %412, %413 : vector<16x64xf32>
    %415 = arith.mulf %409, %414 : vector<16x64xf32>
    %416 = arith.truncf %415 : vector<16x64xf32> to vector<16x64xbf16>
    %cst_162 = arith.constant dense<0.000000e+00> : vector<16x32xf32>
    %417 = tpu.matmul %416, %208, %cst_162 {dimension_numbers = #tpu.dot_dimension_numbers<[1], [0], [0], [1], [0, 0, 1, 1], [], []>} : vector<16x64xbf16>, vector<64x32xbf16>, vector<16x32xf32> -> vector<16x32xf32>
    %418 = arith.addf %190, %417 : vector<16x32xf32>
    %419 = vector.broadcast %210 : vector<1x32xf32> to vector<16x32xf32>
    %420 = arith.addf %418, %419 : vector<16x32xf32>
    %c0_163 = arith.constant 0 : index
    %c0_164 = arith.constant 0 : index
    %c0_165 = arith.constant 0 : index
    %421 = vector.load %arg26[%c0_163, %c0_164, %c0_165] : memref<1x1x32xf32, #tpu.memory_space<vmem>>, vector<1x1x32xf32>
    %422 = vector.shape_cast %421 : vector<1x1x32xf32> to vector<1x32xf32>
    %c0_166 = arith.constant 0 : index
    %c0_167 = arith.constant 0 : index
    %c0_168 = arith.constant 0 : index
    %423 = vector.load %arg27[%c0_166, %c0_167, %c0_168] : memref<1x1x32xf32, #tpu.memory_space<vmem>>, vector<1x1x32xf32>
    %424 = vector.shape_cast %423 : vector<1x1x32xf32> to vector<1x32xf32>
    %c0_169 = arith.constant 0 : index
    %c0_170 = arith.constant 0 : index
    %c0_171 = arith.constant 0 : index
    %425 = vector.load %arg28[%c0_169, %c0_170, %c0_171] : memref<1x32x128xbf16, #tpu.memory_space<vmem>>, vector<1x32x128xbf16>
    %426 = vector.shape_cast %425 : vector<1x32x128xbf16> to vector<32x128xbf16>
    %c0_172 = arith.constant 0 : index
    %c0_173 = arith.constant 0 : index
    %c0_174 = arith.constant 0 : index
    %427 = vector.load %arg29[%c0_172, %c0_173, %c0_174] : memref<1x1x128xf32, #tpu.memory_space<vmem>>, vector<1x1x128xf32>
    %428 = vector.shape_cast %427 : vector<1x1x128xf32> to vector<1x128xf32>
    %c0_175 = arith.constant 0 : index
    %c0_176 = arith.constant 0 : index
    %c0_177 = arith.constant 0 : index
    %429 = vector.load %arg30[%c0_175, %c0_176, %c0_177] : memref<1x128x32xbf16, #tpu.memory_space<vmem>>, vector<1x128x32xbf16>
    %430 = vector.shape_cast %429 : vector<1x128x32xbf16> to vector<128x32xbf16>
    %c0_178 = arith.constant 0 : index
    %c0_179 = arith.constant 0 : index
    %c0_180 = arith.constant 0 : index
    %431 = vector.load %arg31[%c0_178, %c0_179, %c0_180] : memref<1x1x32xf32, #tpu.memory_space<vmem>>, vector<1x1x32xf32>
    %432 = vector.shape_cast %431 : vector<1x1x32xf32> to vector<1x32xf32>
    %cst_181 = arith.constant dense<0.000000e+00> : vector<16xf32>
    %433 = vector.multi_reduction <add>, %420, %cst_181 [1] : vector<16x32xf32> to vector<16xf32>
    %434 = vector.shape_cast %433 : vector<16xf32> to vector<16x1xf32>
    %cst_182 = arith.constant 3.200000e+01 : f32
    %435 = vector.broadcast %cst_182 : f32 to vector<16x1xf32>
    %436 = arith.divf %434, %435 : vector<16x1xf32>
    %437 = vector.broadcast %436 : vector<16x1xf32> to vector<16x32xf32>
    %438 = arith.subf %420, %437 : vector<16x32xf32>
    %439 = arith.mulf %438, %438 : vector<16x32xf32>
    %cst_183 = arith.constant dense<0.000000e+00> : vector<16xf32>
    %440 = vector.multi_reduction <add>, %439, %cst_183 [1] : vector<16x32xf32> to vector<16xf32>
    %441 = vector.shape_cast %440 : vector<16xf32> to vector<16x1xf32>
    %cst_184 = arith.constant 3.200000e+01 : f32
    %442 = vector.broadcast %cst_184 : f32 to vector<16x1xf32>
    %443 = arith.divf %441, %442 : vector<16x1xf32>
    %cst_185 = arith.constant 9.99999974E-6 : f32
    %444 = vector.broadcast %cst_185 : f32 to vector<16x1xf32>
    %445 = arith.addf %443, %444 : vector<16x1xf32>
    %446 = math.rsqrt %445 : vector<16x1xf32>
    %447 = vector.broadcast %446 : vector<16x1xf32> to vector<16x32xf32>
    %448 = arith.mulf %438, %447 : vector<16x32xf32>
    %449 = vector.broadcast %422 : vector<1x32xf32> to vector<16x32xf32>
    %450 = arith.mulf %448, %449 : vector<16x32xf32>
    %451 = vector.broadcast %424 : vector<1x32xf32> to vector<16x32xf32>
    %452 = arith.addf %450, %451 : vector<16x32xf32>
    %453 = arith.truncf %452 : vector<16x32xf32> to vector<16x32xbf16>
    %cst_186 = arith.constant dense<0.000000e+00> : vector<16x128xf32>
    %454 = tpu.matmul %453, %426, %cst_186 {dimension_numbers = #tpu.dot_dimension_numbers<[1], [0], [0], [1], [0, 0, 1, 1], [], []>} : vector<16x32xbf16>, vector<32x128xbf16>, vector<16x128xf32> -> vector<16x128xf32>
    %455 = vector.broadcast %428 : vector<1x128xf32> to vector<16x128xf32>
    %456 = arith.addf %454, %455 : vector<16x128xf32>
    %457 = arith.negf %456 : vector<16x128xf32>
    %458 = math.exp %457 : vector<16x128xf32>
    %cst_187 = arith.constant 1.000000e+00 : f32
    %459 = vector.broadcast %cst_187 : f32 to vector<16x128xf32>
    %460 = arith.addf %459, %458 : vector<16x128xf32>
    %461 = arith.divf %459, %460 : vector<16x128xf32>
    %462 = arith.mulf %456, %461 : vector<16x128xf32>
    %463 = arith.truncf %462 : vector<16x128xf32> to vector<16x128xbf16>
    %cst_188 = arith.constant dense<0.000000e+00> : vector<16x32xf32>
    %464 = tpu.matmul %463, %430, %cst_188 {dimension_numbers = #tpu.dot_dimension_numbers<[1], [0], [0], [1], [0, 0, 1, 1], [], []>} : vector<16x128xbf16>, vector<128x32xbf16>, vector<16x32xf32> -> vector<16x32xf32>
    %465 = vector.broadcast %432 : vector<1x32xf32> to vector<16x32xf32>
    %466 = arith.addf %464, %465 : vector<16x32xf32>
    %cst_189 = arith.constant 5.000000e-01 : f32
    %467 = vector.broadcast %cst_189 : f32 to vector<16x32xf32>
    %468 = arith.mulf %467, %466 : vector<16x32xf32>
    %469 = arith.addf %420, %468 : vector<16x32xf32>
    %c0_190 = arith.constant 0 : index
    %c0_191 = arith.constant 0 : index
    %c0_192 = arith.constant 0 : index
    %470 = vector.load %arg32[%c0_190, %c0_191, %c0_192] : memref<1x1x32xf32, #tpu.memory_space<vmem>>, vector<1x1x32xf32>
    %471 = vector.shape_cast %470 : vector<1x1x32xf32> to vector<1x32xf32>
    %c0_193 = arith.constant 0 : index
    %c0_194 = arith.constant 0 : index
    %c0_195 = arith.constant 0 : index
    %472 = vector.load %arg33[%c0_193, %c0_194, %c0_195] : memref<1x1x32xf32, #tpu.memory_space<vmem>>, vector<1x1x32xf32>
    %473 = vector.shape_cast %472 : vector<1x1x32xf32> to vector<1x32xf32>
    %cst_196 = arith.constant dense<0.000000e+00> : vector<16xf32>
    %474 = vector.multi_reduction <add>, %469, %cst_196 [1] : vector<16x32xf32> to vector<16xf32>
    %475 = vector.shape_cast %474 : vector<16xf32> to vector<16x1xf32>
    %cst_197 = arith.constant 3.200000e+01 : f32
    %476 = vector.broadcast %cst_197 : f32 to vector<16x1xf32>
    %477 = arith.divf %475, %476 : vector<16x1xf32>
    %478 = vector.broadcast %477 : vector<16x1xf32> to vector<16x32xf32>
    %479 = arith.subf %469, %478 : vector<16x32xf32>
    %480 = arith.mulf %479, %479 : vector<16x32xf32>
    %cst_198 = arith.constant dense<0.000000e+00> : vector<16xf32>
    %481 = vector.multi_reduction <add>, %480, %cst_198 [1] : vector<16x32xf32> to vector<16xf32>
    %482 = vector.shape_cast %481 : vector<16xf32> to vector<16x1xf32>
    %cst_199 = arith.constant 3.200000e+01 : f32
    %483 = vector.broadcast %cst_199 : f32 to vector<16x1xf32>
    %484 = arith.divf %482, %483 : vector<16x1xf32>
    %cst_200 = arith.constant 9.99999974E-6 : f32
    %485 = vector.broadcast %cst_200 : f32 to vector<16x1xf32>
    %486 = arith.addf %484, %485 : vector<16x1xf32>
    %487 = math.rsqrt %486 : vector<16x1xf32>
    %488 = vector.broadcast %487 : vector<16x1xf32> to vector<16x32xf32>
    %489 = arith.mulf %479, %488 : vector<16x32xf32>
    %490 = vector.broadcast %471 : vector<1x32xf32> to vector<16x32xf32>
    %491 = arith.mulf %489, %490 : vector<16x32xf32>
    %492 = vector.broadcast %473 : vector<1x32xf32> to vector<16x32xf32>
    %493 = arith.addf %491, %492 : vector<16x32xf32>
    %c0_201 = arith.constant 0 : index
    %c0_202 = arith.constant 0 : index
    %494 = vector.load %arg36[%c0_201, %c0_202] : memref<16x32xf32, #tpu.memory_space<vmem>>, vector<16x32xf32>
    tpu.vector_store %arg36[%c0_201, %c0_202], %493 {strides = array<i32>} : memref<16x32xf32, #tpu.memory_space<vmem>>, vector<16x32xf32>,
    %c0_203 = arith.constant 0 : index
    %c0_204 = arith.constant 0 : index
    %c0_205 = arith.constant 0 : index
    %495 = vector.load %arg35[%c0_203, %c0_204, %c0_205] : memref<1x16x32xf32, #tpu.memory_space<vmem>>, vector<1x16x32xf32>
    %496 = vector.shape_cast %495 : vector<1x16x32xf32> to vector<16x32xf32>
    %497 = vector.shape_cast %493 : vector<16x32xf32> to vector<1x16x32xf32>
    tpu.vector_store %arg35[%c0_203, %c0_204, %c0_205], %497 {strides = array<i32>} : memref<1x16x32xf32, #tpu.memory_space<vmem>>, vector<1x16x32xf32>,
    return
  }
  func.func @transform_0(%arg0: i32, %arg1: i32) -> (i32, i32, i32) {
    %c0_i32 = arith.constant 0 : i32
    %c0_i32_0 = arith.constant 0 : i32
    %c0_i32_1 = arith.constant 0 : i32
    return %arg0, %c0_i32, %c0_i32_0 : i32, i32, i32
  }
  func.func @transform_1(%arg0: i32, %arg1: i32) -> (i32, i32, i32) {
    %c0_i32 = arith.constant 0 : i32
    %c0_i32_0 = arith.constant 0 : i32
    %c0_i32_1 = arith.constant 0 : i32
    return %arg0, %c0_i32, %c0_i32_0 : i32, i32, i32
  }
  func.func @transform_2(%arg0: i32, %arg1: i32) -> (i32, i32, i32) {
    %c0_i32 = arith.constant 0 : i32
    %c0_i32_0 = arith.constant 0 : i32
    %c0_i32_1 = arith.constant 0 : i32
    return %arg0, %c0_i32, %c0_i32_0 : i32, i32, i32
  }
  func.func @transform_3(%arg0: i32, %arg1: i32) -> (i32, i32, i32) {
    %c0_i32 = arith.constant 0 : i32
    %c0_i32_0 = arith.constant 0 : i32
    %c0_i32_1 = arith.constant 0 : i32
    return %arg1, %c0_i32, %c0_i32_0 : i32, i32, i32
  }
  func.func @transform_4(%arg0: i32, %arg1: i32) -> (i32, i32, i32) {
    %c0_i32 = arith.constant 0 : i32
    %c0_i32_0 = arith.constant 0 : i32
    %c0_i32_1 = arith.constant 0 : i32
    return %arg1, %c0_i32, %c0_i32_0 : i32, i32, i32
  }
  func.func @transform_5(%arg0: i32, %arg1: i32) -> (i32, i32, i32) {
    %c0_i32 = arith.constant 0 : i32
    %c0_i32_0 = arith.constant 0 : i32
    %c0_i32_1 = arith.constant 0 : i32
    return %arg1, %c0_i32, %c0_i32_0 : i32, i32, i32
  }
  func.func @transform_6(%arg0: i32, %arg1: i32) -> (i32, i32, i32) {
    %c0_i32 = arith.constant 0 : i32
    %c0_i32_0 = arith.constant 0 : i32
    %c0_i32_1 = arith.constant 0 : i32
    return %arg1, %c0_i32, %c0_i32_0 : i32, i32, i32
  }
  func.func @transform_7(%arg0: i32, %arg1: i32) -> (i32, i32, i32) {
    %c0_i32 = arith.constant 0 : i32
    %c0_i32_0 = arith.constant 0 : i32
    %c0_i32_1 = arith.constant 0 : i32
    return %arg1, %c0_i32, %c0_i32_0 : i32, i32, i32
  }
  func.func @transform_8(%arg0: i32, %arg1: i32) -> (i32, i32, i32) {
    %c0_i32 = arith.constant 0 : i32
    %c0_i32_0 = arith.constant 0 : i32
    %c0_i32_1 = arith.constant 0 : i32
    return %arg1, %c0_i32, %c0_i32_0 : i32, i32, i32
  }
  func.func @transform_9(%arg0: i32, %arg1: i32) -> (i32, i32, i32) {
    %c0_i32 = arith.constant 0 : i32
    %c0_i32_0 = arith.constant 0 : i32
    %c0_i32_1 = arith.constant 0 : i32
    return %arg1, %c0_i32, %c0_i32_0 : i32, i32, i32
  }
  func.func @transform_10(%arg0: i32, %arg1: i32) -> (i32, i32, i32) {
    %c0_i32 = arith.constant 0 : i32
    %c0_i32_0 = arith.constant 0 : i32
    %c0_i32_1 = arith.constant 0 : i32
    return %arg1, %c0_i32, %c0_i32_0 : i32, i32, i32
  }
  func.func @transform_11(%arg0: i32, %arg1: i32) -> (i32, i32, i32) {
    %c0_i32 = arith.constant 0 : i32
    %c0_i32_0 = arith.constant 0 : i32
    %c0_i32_1 = arith.constant 0 : i32
    return %arg1, %c0_i32, %c0_i32_0 : i32, i32, i32
  }
  func.func @transform_12(%arg0: i32, %arg1: i32) -> (i32, i32, i32) {
    %c0_i32 = arith.constant 0 : i32
    %c0_i32_0 = arith.constant 0 : i32
    %c0_i32_1 = arith.constant 0 : i32
    return %arg1, %c0_i32, %c0_i32_0 : i32, i32, i32
  }
  func.func @transform_13(%arg0: i32, %arg1: i32) -> (i32, i32, i32) {
    %c0_i32 = arith.constant 0 : i32
    %c0_i32_0 = arith.constant 0 : i32
    %c0_i32_1 = arith.constant 0 : i32
    return %arg1, %c0_i32, %c0_i32_0 : i32, i32, i32
  }
  func.func @transform_14(%arg0: i32, %arg1: i32) -> (i32, i32, i32) {
    %c0_i32 = arith.constant 0 : i32
    %c0_i32_0 = arith.constant 0 : i32
    %c0_i32_1 = arith.constant 0 : i32
    return %arg1, %c0_i32, %c0_i32_0 : i32, i32, i32
  }
  func.func @transform_15(%arg0: i32, %arg1: i32) -> (i32, i32, i32) {
    %c0_i32 = arith.constant 0 : i32
    %c0_i32_0 = arith.constant 0 : i32
    %c0_i32_1 = arith.constant 0 : i32
    return %arg1, %c0_i32, %c0_i32_0 : i32, i32, i32
  }
  func.func @transform_16(%arg0: i32, %arg1: i32) -> (i32, i32, i32) {
    %c0_i32 = arith.constant 0 : i32
    %c0_i32_0 = arith.constant 0 : i32
    %c0_i32_1 = arith.constant 0 : i32
    return %arg1, %c0_i32, %c0_i32_0 : i32, i32, i32
  }
  func.func @transform_17(%arg0: i32, %arg1: i32) -> (i32, i32, i32) {
    %c0_i32 = arith.constant 0 : i32
    %c0_i32_0 = arith.constant 0 : i32
    %c0_i32_1 = arith.constant 0 : i32
    return %arg1, %c0_i32, %c0_i32_0 : i32, i32, i32
  }
  func.func @transform_18(%arg0: i32, %arg1: i32) -> (i32, i32, i32) {
    %c0_i32 = arith.constant 0 : i32
    %c0_i32_0 = arith.constant 0 : i32
    %c0_i32_1 = arith.constant 0 : i32
    return %arg1, %c0_i32, %c0_i32_0 : i32, i32, i32
  }
  func.func @transform_19(%arg0: i32, %arg1: i32) -> (i32, i32, i32) {
    %c0_i32 = arith.constant 0 : i32
    %c0_i32_0 = arith.constant 0 : i32
    %c0_i32_1 = arith.constant 0 : i32
    return %arg1, %c0_i32, %c0_i32_0 : i32, i32, i32
  }
  func.func @transform_20(%arg0: i32, %arg1: i32) -> (i32, i32, i32) {
    %c0_i32 = arith.constant 0 : i32
    %c0_i32_0 = arith.constant 0 : i32
    %c0_i32_1 = arith.constant 0 : i32
    return %arg1, %c0_i32, %c0_i32_0 : i32, i32, i32
  }
  func.func @transform_21(%arg0: i32, %arg1: i32) -> (i32, i32, i32) {
    %c0_i32 = arith.constant 0 : i32
    %c0_i32_0 = arith.constant 0 : i32
    %c0_i32_1 = arith.constant 0 : i32
    return %arg1, %c0_i32, %c0_i32_0 : i32, i32, i32
  }
  func.func @transform_22(%arg0: i32, %arg1: i32) -> (i32, i32, i32) {
    %c0_i32 = arith.constant 0 : i32
    %c0_i32_0 = arith.constant 0 : i32
    %c0_i32_1 = arith.constant 0 : i32
    return %arg1, %c0_i32, %c0_i32_0 : i32, i32, i32
  }
  func.func @transform_23(%arg0: i32, %arg1: i32) -> (i32, i32, i32) {
    %c0_i32 = arith.constant 0 : i32
    %c0_i32_0 = arith.constant 0 : i32
    %c0_i32_1 = arith.constant 0 : i32
    return %arg1, %c0_i32, %c0_i32_0 : i32, i32, i32
  }
  func.func @transform_24(%arg0: i32, %arg1: i32) -> (i32, i32, i32) {
    %c0_i32 = arith.constant 0 : i32
    %c0_i32_0 = arith.constant 0 : i32
    %c0_i32_1 = arith.constant 0 : i32
    return %arg1, %c0_i32, %c0_i32_0 : i32, i32, i32
  }
  func.func @transform_25(%arg0: i32, %arg1: i32) -> (i32, i32, i32) {
    %c0_i32 = arith.constant 0 : i32
    %c0_i32_0 = arith.constant 0 : i32
    %c0_i32_1 = arith.constant 0 : i32
    return %arg1, %c0_i32, %c0_i32_0 : i32, i32, i32
  }
  func.func @transform_26(%arg0: i32, %arg1: i32) -> (i32, i32, i32) {
    %c0_i32 = arith.constant 0 : i32
    %c0_i32_0 = arith.constant 0 : i32
    %c0_i32_1 = arith.constant 0 : i32
    return %arg1, %c0_i32, %c0_i32_0 : i32, i32, i32
  }
  func.func @transform_27(%arg0: i32, %arg1: i32) -> (i32, i32, i32) {
    %c0_i32 = arith.constant 0 : i32
    %c0_i32_0 = arith.constant 0 : i32
    %c0_i32_1 = arith.constant 0 : i32
    return %arg1, %c0_i32, %c0_i32_0 : i32, i32, i32
  }
  func.func @transform_28(%arg0: i32, %arg1: i32) -> (i32, i32, i32) {
    %c0_i32 = arith.constant 0 : i32
    %c0_i32_0 = arith.constant 0 : i32
    %c0_i32_1 = arith.constant 0 : i32
    return %arg1, %c0_i32, %c0_i32_0 : i32, i32, i32
  }
  func.func @transform_29(%arg0: i32, %arg1: i32) -> (i32, i32, i32) {
    %c0_i32 = arith.constant 0 : i32
    %c0_i32_0 = arith.constant 0 : i32
    %c0_i32_1 = arith.constant 0 : i32
    return %arg1, %c0_i32, %c0_i32_0 : i32, i32, i32
  }
  func.func @transform_30(%arg0: i32, %arg1: i32) -> (i32, i32, i32) {
    %c0_i32 = arith.constant 0 : i32
    %c0_i32_0 = arith.constant 0 : i32
    %c0_i32_1 = arith.constant 0 : i32
    return %arg1, %c0_i32, %c0_i32_0 : i32, i32, i32
  }
  func.func @transform_31(%arg0: i32, %arg1: i32) -> (i32, i32, i32) {
    %c0_i32 = arith.constant 0 : i32
    %c0_i32_0 = arith.constant 0 : i32
    %c0_i32_1 = arith.constant 0 : i32
    return %arg1, %c0_i32, %c0_i32_0 : i32, i32, i32
  }
  func.func @transform_32(%arg0: i32, %arg1: i32) -> (i32, i32, i32) {
    %c0_i32 = arith.constant 0 : i32
    %c0_i32_0 = arith.constant 0 : i32
    %c0_i32_1 = arith.constant 0 : i32
    return %arg1, %c0_i32, %c0_i32_0 : i32, i32, i32
  }
  func.func @transform_33(%arg0: i32, %arg1: i32) -> (i32, i32, i32) {
    %c0_i32 = arith.constant 0 : i32
    %c0_i32_0 = arith.constant 0 : i32
    %c0_i32_1 = arith.constant 0 : i32
    return %arg0, %c0_i32, %c0_i32_0 : i32, i32, i32
  }
}

module attributes {stable_mosaic.version = 11 : i64} {
  func.func @_heads_kernel(%arg0: i32, %arg1: memref<16x32xf32, #tpu.memory_space<vmem>>, %arg2: memref<32x32xbf16, #tpu.memory_space<vmem>>, %arg3: memref<1x32xf32, #tpu.memory_space<vmem>>, %arg4: memref<2x16x8xbf16, #tpu.memory_space<vmem>>, %arg5: memref<2x1x8xf32, #tpu.memory_space<vmem>>, %arg6: memref<2x8x4xbf16, #tpu.memory_space<vmem>>, %arg7: memref<2x1x4xf32, #tpu.memory_space<vmem>>, %arg8: memref<2x4x10xbf16, #tpu.memory_space<vmem>>, %arg9: memref<2x1x10xf32, #tpu.memory_space<vmem>>, %arg10: memref<16x128xf32, #tpu.memory_space<vmem>>) attributes {dimension_semantics = [#tpu.dimension_semantics<parallel>], iteration_bounds = array<i64: 2>, scalar_prefetch = 0 : i64, scratch_operands = 0 : i64, tpu.core_type = #tpu.core_type<tc>, window_params = [{transform_indices = @transform_0, window_bounds = array<i64: 16, 32>}, {pipeline_mode = #tpu.pipeline_mode<synchronous>, transform_indices = @transform_1, window_bounds = array<i64: 32, 32>}, {pipeline_mode = #tpu.pipeline_mode<synchronous>, transform_indices = @transform_2, window_bounds = array<i64: 1, 32>}, {pipeline_mode = #tpu.pipeline_mode<synchronous>, transform_indices = @transform_3, window_bounds = array<i64: 2, 16, 8>}, {pipeline_mode = #tpu.pipeline_mode<synchronous>, transform_indices = @transform_4, window_bounds = array<i64: 2, 1, 8>}, {pipeline_mode = #tpu.pipeline_mode<synchronous>, transform_indices = @transform_5, window_bounds = array<i64: 2, 8, 4>}, {pipeline_mode = #tpu.pipeline_mode<synchronous>, transform_indices = @transform_6, window_bounds = array<i64: 2, 1, 4>}, {pipeline_mode = #tpu.pipeline_mode<synchronous>, transform_indices = @transform_7, window_bounds = array<i64: 2, 4, 10>}, {pipeline_mode = #tpu.pipeline_mode<synchronous>, transform_indices = @transform_8, window_bounds = array<i64: 2, 1, 10>}, {transform_indices = @transform_9, window_bounds = array<i64: 16, 128>}]} {
    %c0 = arith.constant 0 : index
    %c0_0 = arith.constant 0 : index
    %0 = vector.load %arg1[%c0, %c0_0] : memref<16x32xf32, #tpu.memory_space<vmem>>, vector<16x32xf32>
    %c0_1 = arith.constant 0 : index
    %c0_2 = arith.constant 0 : index
    %1 = vector.load %arg2[%c0_1, %c0_2] : memref<32x32xbf16, #tpu.memory_space<vmem>>, vector<32x32xbf16>
    %2 = arith.truncf %0 : vector<16x32xf32> to vector<16x32xbf16>
    %cst = arith.constant dense<0.000000e+00> : vector<16x32xf32>
    %3 = tpu.matmul %2, %1, %cst {dimension_numbers = #tpu.dot_dimension_numbers<[1], [0], [0], [1], [0, 0, 1, 1], [], []>} : vector<16x32xbf16>, vector<32x32xbf16>, vector<16x32xf32> -> vector<16x32xf32>
    %c0_3 = arith.constant 0 : index
    %c0_4 = arith.constant 0 : index
    %4 = vector.load %arg3[%c0_3, %c0_4] : memref<1x32xf32, #tpu.memory_space<vmem>>, vector<1x32xf32>
    %5 = vector.broadcast %4 : vector<1x32xf32> to vector<16x32xf32>
    %6 = arith.addf %3, %5 : vector<16x32xf32>
    %7 = arith.negf %6 : vector<16x32xf32>
    %8 = math.exp %7 : vector<16x32xf32>
    %cst_5 = arith.constant 1.000000e+00 : f32
    %9 = vector.broadcast %cst_5 : f32 to vector<16x32xf32>
    %10 = arith.addf %9, %8 : vector<16x32xf32>
    %11 = arith.divf %9, %10 : vector<16x32xf32>
    %12 = arith.mulf %6, %11 : vector<16x32xf32>
    %13 = vector.extract_strided_slice %12 {offsets = [0, 0], sizes = [16, 16], strides = [1, 1]} : vector<16x32xf32> to vector<16x16xf32>
    %c0_6 = arith.constant 0 : index
    %c0_7 = arith.constant 0 : index
    %c0_8 = arith.constant 0 : index
    %14 = vector.load %arg4[%c0_6, %c0_7, %c0_8] : memref<2x16x8xbf16, #tpu.memory_space<vmem>>, vector<1x16x8xbf16>
    %15 = vector.shape_cast %14 : vector<1x16x8xbf16> to vector<16x8xbf16>
    %16 = arith.truncf %13 : vector<16x16xf32> to vector<16x16xbf16>
    %cst_9 = arith.constant dense<0.000000e+00> : vector<16x8xf32>
    %17 = tpu.matmul %16, %15, %cst_9 {dimension_numbers = #tpu.dot_dimension_numbers<[1], [0], [0], [1], [0, 0, 1, 1], [], []>} : vector<16x16xbf16>, vector<16x8xbf16>, vector<16x8xf32> -> vector<16x8xf32>
    %c0_10 = arith.constant 0 : index
    %c0_11 = arith.constant 0 : index
    %c0_12 = arith.constant 0 : index
    %18 = vector.load %arg5[%c0_10, %c0_11, %c0_12] : memref<2x1x8xf32, #tpu.memory_space<vmem>>, vector<1x1x8xf32>
    %19 = vector.shape_cast %18 : vector<1x1x8xf32> to vector<1x8xf32>
    %20 = vector.broadcast %19 : vector<1x8xf32> to vector<16x8xf32>
    %21 = arith.addf %17, %20 : vector<16x8xf32>
    %22 = arith.negf %21 : vector<16x8xf32>
    %23 = math.exp %22 : vector<16x8xf32>
    %cst_13 = arith.constant 1.000000e+00 : f32
    %24 = vector.broadcast %cst_13 : f32 to vector<16x8xf32>
    %25 = arith.addf %24, %23 : vector<16x8xf32>
    %26 = arith.divf %24, %25 : vector<16x8xf32>
    %27 = arith.mulf %21, %26 : vector<16x8xf32>
    %c0_14 = arith.constant 0 : index
    %c0_15 = arith.constant 0 : index
    %c0_16 = arith.constant 0 : index
    %28 = vector.load %arg6[%c0_14, %c0_15, %c0_16] : memref<2x8x4xbf16, #tpu.memory_space<vmem>>, vector<1x8x4xbf16>
    %29 = vector.shape_cast %28 : vector<1x8x4xbf16> to vector<8x4xbf16>
    %30 = arith.truncf %27 : vector<16x8xf32> to vector<16x8xbf16>
    %cst_17 = arith.constant dense<0.000000e+00> : vector<16x4xf32>
    %31 = tpu.matmul %30, %29, %cst_17 {dimension_numbers = #tpu.dot_dimension_numbers<[1], [0], [0], [1], [0, 0, 1, 1], [], []>} : vector<16x8xbf16>, vector<8x4xbf16>, vector<16x4xf32> -> vector<16x4xf32>
    %c0_18 = arith.constant 0 : index
    %c0_19 = arith.constant 0 : index
    %c0_20 = arith.constant 0 : index
    %32 = vector.load %arg7[%c0_18, %c0_19, %c0_20] : memref<2x1x4xf32, #tpu.memory_space<vmem>>, vector<1x1x4xf32>
    %33 = vector.shape_cast %32 : vector<1x1x4xf32> to vector<1x4xf32>
    %34 = vector.broadcast %33 : vector<1x4xf32> to vector<16x4xf32>
    %35 = arith.addf %31, %34 : vector<16x4xf32>
    %36 = arith.negf %35 : vector<16x4xf32>
    %37 = math.exp %36 : vector<16x4xf32>
    %cst_21 = arith.constant 1.000000e+00 : f32
    %38 = vector.broadcast %cst_21 : f32 to vector<16x4xf32>
    %39 = arith.addf %38, %37 : vector<16x4xf32>
    %40 = arith.divf %38, %39 : vector<16x4xf32>
    %41 = arith.mulf %35, %40 : vector<16x4xf32>
    %c0_22 = arith.constant 0 : index
    %c0_23 = arith.constant 0 : index
    %c0_24 = arith.constant 0 : index
    %42 = vector.load %arg8[%c0_22, %c0_23, %c0_24] : memref<2x4x10xbf16, #tpu.memory_space<vmem>>, vector<1x4x10xbf16>
    %43 = vector.shape_cast %42 : vector<1x4x10xbf16> to vector<4x10xbf16>
    %44 = arith.truncf %41 : vector<16x4xf32> to vector<16x4xbf16>
    %cst_25 = arith.constant dense<0.000000e+00> : vector<16x10xf32>
    %45 = tpu.matmul %44, %43, %cst_25 {dimension_numbers = #tpu.dot_dimension_numbers<[1], [0], [0], [1], [0, 0, 1, 1], [], []>} : vector<16x4xbf16>, vector<4x10xbf16>, vector<16x10xf32> -> vector<16x10xf32>
    %c0_26 = arith.constant 0 : index
    %c0_27 = arith.constant 0 : index
    %c0_28 = arith.constant 0 : index
    %46 = vector.load %arg9[%c0_26, %c0_27, %c0_28] : memref<2x1x10xf32, #tpu.memory_space<vmem>>, vector<1x1x10xf32>
    %47 = vector.shape_cast %46 : vector<1x1x10xf32> to vector<1x10xf32>
    %48 = vector.broadcast %47 : vector<1x10xf32> to vector<16x10xf32>
    %49 = arith.addf %45, %48 : vector<16x10xf32>
    %50 = vector.extract_strided_slice %12 {offsets = [0, 16], sizes = [16, 16], strides = [1, 1]} : vector<16x32xf32> to vector<16x16xf32>
    %c1 = arith.constant 1 : index
    %c0_29 = arith.constant 0 : index
    %c0_30 = arith.constant 0 : index
    %51 = vector.load %arg4[%c1, %c0_29, %c0_30] : memref<2x16x8xbf16, #tpu.memory_space<vmem>>, vector<1x16x8xbf16>
    %52 = vector.shape_cast %51 : vector<1x16x8xbf16> to vector<16x8xbf16>
    %53 = arith.truncf %50 : vector<16x16xf32> to vector<16x16xbf16>
    %cst_31 = arith.constant dense<0.000000e+00> : vector<16x8xf32>
    %54 = tpu.matmul %53, %52, %cst_31 {dimension_numbers = #tpu.dot_dimension_numbers<[1], [0], [0], [1], [0, 0, 1, 1], [], []>} : vector<16x16xbf16>, vector<16x8xbf16>, vector<16x8xf32> -> vector<16x8xf32>
    %c1_32 = arith.constant 1 : index
    %c0_33 = arith.constant 0 : index
    %c0_34 = arith.constant 0 : index
    %55 = vector.load %arg5[%c1_32, %c0_33, %c0_34] : memref<2x1x8xf32, #tpu.memory_space<vmem>>, vector<1x1x8xf32>
    %56 = vector.shape_cast %55 : vector<1x1x8xf32> to vector<1x8xf32>
    %57 = vector.broadcast %56 : vector<1x8xf32> to vector<16x8xf32>
    %58 = arith.addf %54, %57 : vector<16x8xf32>
    %59 = arith.negf %58 : vector<16x8xf32>
    %60 = math.exp %59 : vector<16x8xf32>
    %cst_35 = arith.constant 1.000000e+00 : f32
    %61 = vector.broadcast %cst_35 : f32 to vector<16x8xf32>
    %62 = arith.addf %61, %60 : vector<16x8xf32>
    %63 = arith.divf %61, %62 : vector<16x8xf32>
    %64 = arith.mulf %58, %63 : vector<16x8xf32>
    %c1_36 = arith.constant 1 : index
    %c0_37 = arith.constant 0 : index
    %c0_38 = arith.constant 0 : index
    %65 = vector.load %arg6[%c1_36, %c0_37, %c0_38] : memref<2x8x4xbf16, #tpu.memory_space<vmem>>, vector<1x8x4xbf16>
    %66 = vector.shape_cast %65 : vector<1x8x4xbf16> to vector<8x4xbf16>
    %67 = arith.truncf %64 : vector<16x8xf32> to vector<16x8xbf16>
    %cst_39 = arith.constant dense<0.000000e+00> : vector<16x4xf32>
    %68 = tpu.matmul %67, %66, %cst_39 {dimension_numbers = #tpu.dot_dimension_numbers<[1], [0], [0], [1], [0, 0, 1, 1], [], []>} : vector<16x8xbf16>, vector<8x4xbf16>, vector<16x4xf32> -> vector<16x4xf32>
    %c1_40 = arith.constant 1 : index
    %c0_41 = arith.constant 0 : index
    %c0_42 = arith.constant 0 : index
    %69 = vector.load %arg7[%c1_40, %c0_41, %c0_42] : memref<2x1x4xf32, #tpu.memory_space<vmem>>, vector<1x1x4xf32>
    %70 = vector.shape_cast %69 : vector<1x1x4xf32> to vector<1x4xf32>
    %71 = vector.broadcast %70 : vector<1x4xf32> to vector<16x4xf32>
    %72 = arith.addf %68, %71 : vector<16x4xf32>
    %73 = arith.negf %72 : vector<16x4xf32>
    %74 = math.exp %73 : vector<16x4xf32>
    %cst_43 = arith.constant 1.000000e+00 : f32
    %75 = vector.broadcast %cst_43 : f32 to vector<16x4xf32>
    %76 = arith.addf %75, %74 : vector<16x4xf32>
    %77 = arith.divf %75, %76 : vector<16x4xf32>
    %78 = arith.mulf %72, %77 : vector<16x4xf32>
    %c1_44 = arith.constant 1 : index
    %c0_45 = arith.constant 0 : index
    %c0_46 = arith.constant 0 : index
    %79 = vector.load %arg8[%c1_44, %c0_45, %c0_46] : memref<2x4x10xbf16, #tpu.memory_space<vmem>>, vector<1x4x10xbf16>
    %80 = vector.shape_cast %79 : vector<1x4x10xbf16> to vector<4x10xbf16>
    %81 = arith.truncf %78 : vector<16x4xf32> to vector<16x4xbf16>
    %cst_47 = arith.constant dense<0.000000e+00> : vector<16x10xf32>
    %82 = tpu.matmul %81, %80, %cst_47 {dimension_numbers = #tpu.dot_dimension_numbers<[1], [0], [0], [1], [0, 0, 1, 1], [], []>} : vector<16x4xbf16>, vector<4x10xbf16>, vector<16x10xf32> -> vector<16x10xf32>
    %c1_48 = arith.constant 1 : index
    %c0_49 = arith.constant 0 : index
    %c0_50 = arith.constant 0 : index
    %83 = vector.load %arg9[%c1_48, %c0_49, %c0_50] : memref<2x1x10xf32, #tpu.memory_space<vmem>>, vector<1x1x10xf32>
    %84 = vector.shape_cast %83 : vector<1x1x10xf32> to vector<1x10xf32>
    %85 = vector.broadcast %84 : vector<1x10xf32> to vector<16x10xf32>
    %86 = arith.addf %82, %85 : vector<16x10xf32>
    %cst_51 = arith.constant 0.000000e+00 : f32
    %87 = vector.broadcast %cst_51 : f32 to vector<16x108xf32>
    %88 = tpu.concatenate %49, %86, %87 in 1 : vector<16x10xf32>, vector<16x10xf32>, vector<16x108xf32> -> vector<16x128xf32>
    %c0_52 = arith.constant 0 : index
    %c0_53 = arith.constant 0 : index
    %89 = vector.load %arg10[%c0_52, %c0_53] : memref<16x128xf32, #tpu.memory_space<vmem>>, vector<16x128xf32>
    tpu.vector_store %arg10[%c0_52, %c0_53], %88 {strides = array<i32>} : memref<16x128xf32, #tpu.memory_space<vmem>>, vector<16x128xf32>,
    return
  }
  func.func @transform_0(%arg0: i32) -> (i32, i32) {
    %c0_i32 = arith.constant 0 : i32
    %c0_i32_0 = arith.constant 0 : i32
    return %arg0, %c0_i32 : i32, i32
  }
  func.func @transform_1(%arg0: i32) -> (i32, i32) {
    %c0_i32 = arith.constant 0 : i32
    %c0_i32_0 = arith.constant 0 : i32
    %c0_i32_1 = arith.constant 0 : i32
    return %c0_i32, %c0_i32_0 : i32, i32
  }
  func.func @transform_2(%arg0: i32) -> (i32, i32) {
    %c0_i32 = arith.constant 0 : i32
    %c0_i32_0 = arith.constant 0 : i32
    %c0_i32_1 = arith.constant 0 : i32
    return %c0_i32, %c0_i32_0 : i32, i32
  }
  func.func @transform_3(%arg0: i32) -> (i32, i32, i32) {
    %c0_i32 = arith.constant 0 : i32
    %c0_i32_0 = arith.constant 0 : i32
    %c0_i32_1 = arith.constant 0 : i32
    %c0_i32_2 = arith.constant 0 : i32
    return %c0_i32, %c0_i32_0, %c0_i32_1 : i32, i32, i32
  }
  func.func @transform_4(%arg0: i32) -> (i32, i32, i32) {
    %c0_i32 = arith.constant 0 : i32
    %c0_i32_0 = arith.constant 0 : i32
    %c0_i32_1 = arith.constant 0 : i32
    %c0_i32_2 = arith.constant 0 : i32
    return %c0_i32, %c0_i32_0, %c0_i32_1 : i32, i32, i32
  }
  func.func @transform_5(%arg0: i32) -> (i32, i32, i32) {
    %c0_i32 = arith.constant 0 : i32
    %c0_i32_0 = arith.constant 0 : i32
    %c0_i32_1 = arith.constant 0 : i32
    %c0_i32_2 = arith.constant 0 : i32
    return %c0_i32, %c0_i32_0, %c0_i32_1 : i32, i32, i32
  }
  func.func @transform_6(%arg0: i32) -> (i32, i32, i32) {
    %c0_i32 = arith.constant 0 : i32
    %c0_i32_0 = arith.constant 0 : i32
    %c0_i32_1 = arith.constant 0 : i32
    %c0_i32_2 = arith.constant 0 : i32
    return %c0_i32, %c0_i32_0, %c0_i32_1 : i32, i32, i32
  }
  func.func @transform_7(%arg0: i32) -> (i32, i32, i32) {
    %c0_i32 = arith.constant 0 : i32
    %c0_i32_0 = arith.constant 0 : i32
    %c0_i32_1 = arith.constant 0 : i32
    %c0_i32_2 = arith.constant 0 : i32
    return %c0_i32, %c0_i32_0, %c0_i32_1 : i32, i32, i32
  }
  func.func @transform_8(%arg0: i32) -> (i32, i32, i32) {
    %c0_i32 = arith.constant 0 : i32
    %c0_i32_0 = arith.constant 0 : i32
    %c0_i32_1 = arith.constant 0 : i32
    %c0_i32_2 = arith.constant 0 : i32
    return %c0_i32, %c0_i32_0, %c0_i32_1 : i32, i32, i32
  }
  func.func @transform_9(%arg0: i32) -> (i32, i32) {
    %c0_i32 = arith.constant 0 : i32
    %c0_i32_0 = arith.constant 0 : i32
    return %arg0, %c0_i32 : i32, i32
  }
}

</mosaic_0001>

<llo_original>
// kernel: vq_indexer_forward.3
$region0: #{vq_indexer_forward.3}
  #allocation0 [shape = 'u32[]', space=smem, size = 0x4, offset = 0x4, fixed_abs, tag = 'smem constant byte address 0x4 - core index']
  #allocation1 [shape = 'u32[72,128]{1,0:T(1,128)}', space=vmem, size = 0x9000, scoped, tag = 'internal scratch']
  %s0 = inlined_call_operand.vmem [shape: f32[2,8,24], index: 0, kind: input, shape index: {}]
  %s1 = inlined_call_operand.vmem [shape: f32[2,8,16], index: 1, kind: input, shape index: {}]
  %s2 = inlined_call_operand.vmem [shape: bf16[24,32], index: 2, kind: input, shape index: {}]
  %s3 = inlined_call_operand.hbm [shape: f32[1,32], index: 3, kind: input, shape index: {}]
  %s4 = inlined_call_operand.vmem [shape: f32[2,16,32], index: 4, kind: output, shape index: {}]
  %s5 = sld [smem:[#allocation0]]
  $region53: #{vq_indexer_forward.3} parent=0
    _
  %s7 = ssub.s32 1, %s5
  %s8 = scalar_select 0, %s7, %s5
  $region1: #{vq_indexer_forward.3} parent=0
    #allocation2 [shape = 'u8[512]{0}', space=vmem, size = 0x400, scoped, tag = 'input window, operand 3, single buffered']
    #allocation3 [shape = 's32[2]{0}', space=sflag, size = 0x8, scoped, tag = 'scoped memory for vq_indexer_forward.3']
    %9 = vsyncpa [#allocation3], 0
    loop: start=0, step=1, limit=4
    $region2: #{vq_indexer_forward.3} parent=1 // loop_pre_header
      _
    $region3: #{vq_indexer_forward.3} parent=1 // loop_header
      %s11 = sphi 0, %s15
      %p12 = scmp.ge.s32.totalorder %s11, 4
      %s21 = sphi 0, %s23
      %s24 = sphi 0, %s21
      %s25 = sphi 0, %s24
      %s41 = sphi 0, %s25
      %s47 = sphi 0, %s49
      %s50 = sphi 0, %s47
      %s51 = sphi 0, %s50
      %s67 = sphi 0, %s51
      %s71 = sphi 0, %s71
      %s73 = sphi 0, %s71
      %s74 = sphi 0, %s73
      %s88 = sphi 0, %s74
      %s92 = sphi 0, %s92
      %s94 = sphi 0, %s92
      %s95 = sphi 0, %s94
      %s109 = sphi 0, %s95
      %s115 = sphi 0, %s117
      %s118 = sphi 0, %s115
      %s119 = sphi 0, %s118
      %s135 = sphi 0, %s119
    $region4: #{vq_indexer_forward.3} parent=1 // loop_header_branch
      %14 = sbr.rel (%p12) target = $region8
    $region5: #{vq_indexer_forward.3} parent=1 // loop_body
      %s16 = ssub.s32 %s11, 1
      %s17 = ssub.s32 %s11, 2
      %s18 = sadd.s32 %s11, 1
      %s19 = ssub.s32 %s11, %s18
      %p20 = scmp.eq.s32.totalorder %s19, 0
      %s22 = sadd.s32 %s21, 1
      %s23 = scalar_select %p20, %s21, %s22
      %p26 = pneg %p20
      %p27 = scmp.eq.s32.totalorder %s11, 1
      %p28 = por %p26, %p27
      %p29 = scmp.ne.s32.totalorder %s21, %s24
      %p30 = scmp.eq.s32.totalorder %s11, 0
      %p31 = por %p29, %p30
      %p32 = scmp.ne.s32.totalorder %s21, %s24
      %p33 = scmp.eq.s32.totalorder %s16, 1
      %p34 = por %p32, %p33
      %p35 = scmp.ne.s32.totalorder %s24, %s25
      %p36 = scmp.eq.s32.totalorder %s16, 0
      %p37 = por %p35, %p36
      %p38 = scmp.ne.s32.totalorder %s24, %s25
      %p39 = scmp.eq.s32.totalorder %s17, 1
      %p40 = por %p38, %p39
      %p42 = scmp.ne.s32.totalorder %s25, %s41
      %p43 = scmp.eq.s32.totalorder %s17, 0
      %p44 = por %p42, %p43
      %s45 = ssub.s32 %s11, %s18
      %p46 = scmp.eq.s32.totalorder %s45, 0
      %s48 = sadd.s32 %s47, 1
      %s49 = scalar_select %p46, %s47, %s48
      %p52 = pneg %p46
      %p53 = scmp.eq.s32.totalorder %s11, 1
      %p54 = por %p52, %p53
      %p55 = scmp.ne.s32.totalorder %s47, %s50
      %p56 = scmp.eq.s32.totalorder %s11, 0
      %p57 = por %p55, %p56
      %p58 = scmp.ne.s32.totalorder %s47, %s50
      %p59 = scmp.eq.s32.totalorder %s16, 1
      %p60 = por %p58, %p59
      %p61 = scmp.ne.s32.totalorder %s50, %s51
      %p62 = scmp.eq.s32.totalorder %s16, 0
      %p63 = por %p61, %p62
      %p64 = scmp.ne.s32.totalorder %s50, %s51
      %p65 = scmp.eq.s32.totalorder %s17, 1
      %p66 = por %p64, %p65
      %p68 = scmp.ne.s32.totalorder %s51, %s67
      %p69 = scmp.eq.s32.totalorder %s17, 0
      %p70 = por %p68, %p69
      %s72 = sadd.s32 %s71, 1
      %p75 = scmp.eq.s32.totalorder %s11, 1
      %p76 = scmp.ne.s32.totalorder %s71, %s73
      %p77 = scmp.eq.s32.totalorder %s11, 0
      %p78 = por %p76, %p77
      %p79 = scmp.ne.s32.totalorder %s71, %s73
      %p80 = scmp.eq.s32.totalorder %s16, 1
      %p81 = por %p79, %p80
      %p82 = scmp.ne.s32.totalorder %s73, %s74
      %p83 = scmp.eq.s32.totalorder %s16, 0
      %p84 = por %p82, %p83
      %p85 = scmp.ne.s32.totalorder %s73, %s74
      %p86 = scmp.eq.s32.totalorder %s17, 1
      %p87 = por %p85, %p86
      %p89 = scmp.ne.s32.totalorder %s74, %s88
      %p90 = scmp.eq.s32.totalorder %s17, 0
      %p91 = por %p89, %p90
      %s93 = sadd.s32 %s92, 1
      %p96 = scmp.eq.s32.totalorder %s11, 1
      %p97 = scmp.ne.s32.totalorder %s92, %s94
      %p98 = scmp.eq.s32.totalorder %s11, 0
      %p99 = por %p97, %p98
      %p100 = scmp.ne.s32.totalorder %s92, %s94
      %p101 = scmp.eq.s32.totalorder %s16, 1
      %p102 = por %p100, %p101
      %p103 = scmp.ne.s32.totalorder %s94, %s95
      %p104 = scmp.eq.s32.totalorder %s16, 0
      %p105 = por %p103, %p104
      %p106 = scmp.ne.s32.totalorder %s94, %s95
      %p107 = scmp.eq.s32.totalorder %s17, 1
      %p108 = por %p106, %p107
      %p110 = scmp.ne.s32.totalorder %s95, %s109
      %p111 = scmp.eq.s32.totalorder %s17, 0
      %p112 = por %p110, %p111
      %s113 = ssub.s32 %s11, %s18
      %p114 = scmp.eq.s32.totalorder %s113, 0
      %s116 = sadd.s32 %s115, 1
      %s117 = scalar_select %p114, %s115, %s116
      %p120 = pneg %p114
      %p121 = scmp.eq.s32.totalorder %s11, 1
      %p122 = por %p120, %p121
      %p123 = scmp.ne.s32.totalorder %s115, %s118
      %p124 = scmp.eq.s32.totalorder %s11, 0
      %p125 = por %p123, %p124
      %p126 = scmp.ne.s32.totalorder %s115, %s118
      %p127 = scmp.eq.s32.totalorder %s16, 1
      %p128 = por %p126, %p127
      %p129 = scmp.ne.s32.totalorder %s118, %s119
      %p130 = scmp.eq.s32.totalorder %s16, 0
      %p131 = por %p129, %p130
      %p132 = scmp.ne.s32.totalorder %s118, %s119
      %p133 = scmp.eq.s32.totalorder %s17, 1
      %p134 = por %p132, %p133
      %p136 = scmp.ne.s32.totalorder %s119, %s135
      %p137 = scmp.eq.s32.totalorder %s17, 0
      %p138 = por %p136, %p137
      %p139 = scmp.le.s32.totalorder 1, %s11
      %p140 = scmp.lt.s32.totalorder %s11, 3
      %p141 = pnand %p139, %p140
      %p142 = pneg %p141
      // Predicated region
      $region9: #{vq_indexer_forward.3} parent=5 // pred_check
        _
      $region10: #{vq_indexer_forward.3} parent=5 // pred_check_branch
        %144 = sbr.rel (%p141) target = $region12
      $region11: #{vq_indexer_forward.3} parent=5 // pred_region
        %s145 = ssub.s32 %s11, 1
        // Predicated region
        $region13: #{vq_indexer_forward.3} parent=11 // pred_check
          %p146 = pneg %p84
        $region14: #{vq_indexer_forward.3} parent=11 // pred_check_branch
          %148 = sbr.rel (%p146) target = $region16
        $region15: #{vq_indexer_forward.3} parent=11 // pred_region
          _
        $region16: #{vq_indexer_forward.3} parent=11 // pred_fallthru
          _
        // Predicated region
        $region17: #{vq_indexer_forward.3} parent=11 // pred_check
          %p149 = pneg %p105
        $region18: #{vq_indexer_forward.3} parent=11 // pred_check_branch
          %151 = sbr.rel (%p149) target = $region20
        $region19: #{vq_indexer_forward.3} parent=11 // pred_region
          %153 = vsyncadd [#allocation3], 0
          %s155 = sshll.u32 %s3, 4
          %s156 = int_to_ptr.hbm [resolvable:$true] %s155
          %s157 = sshll.u32 [#allocation2], 4
          %s158 = int_to_ptr.vmem [resolvable:$true] %s157
          %160 = dma.hbm_to_vmem [thread:$0]  %s156, 16, %s158, [#allocation3]
        $region20: #{vq_indexer_forward.3} parent=11 // pred_fallthru
          _
      $region12: #{vq_indexer_forward.3} parent=5 // pred_fallthru
        _
      %p161 = scmp.lt.s32.totalorder %s11, 2
      // Predicated region
      $region21: #{vq_indexer_forward.3} parent=5 // pred_check
        %p162 = pneg %p161
      $region22: #{vq_indexer_forward.3} parent=5 // pred_check_branch
        %164 = sbr.rel (%p162) target = $region24
      $region23: #{vq_indexer_forward.3} parent=5 // pred_region
        // Predicated region
        $region25: #{vq_indexer_forward.3} parent=23 // pred_check
          %p165 = pneg %p31
        $region26: #{vq_indexer_forward.3} parent=23 // pred_check_branch
          %167 = sbr.rel (%p165) target = $region28
        $region27: #{vq_indexer_forward.3} parent=23 // pred_region
          %p168 = scmp.lt.s32.totalorder %s11, 1
          %s169 = scalar_select %p168, %s11, 1
          %s170 = smul.addr %s169, 8
          %s171 = scalar_lea.vmem %s0, %s170
        $region28: #{vq_indexer_forward.3} parent=23 // pred_fallthru
          _
        // Predicated region
        $region29: #{vq_indexer_forward.3} parent=23 // pred_check
          %p172 = pneg %p57
        $region30: #{vq_indexer_forward.3} parent=23 // pred_check_branch
          %174 = sbr.rel (%p172) target = $region32
        $region31: #{vq_indexer_forward.3} parent=23 // pred_region
          %p175 = scmp.lt.s32.totalorder %s11, 1
          %s176 = scalar_select %p175, %s11, 1
          %s177 = smul.addr %s176, 8
          %s178 = scalar_lea.vmem %s1, %s177
        $region32: #{vq_indexer_forward.3} parent=23 // pred_fallthru
          _
      $region24: #{vq_indexer_forward.3} parent=5 // pred_fallthru
        _
      %p179 = scmp.le.s32.totalorder 1, %s11
      %p180 = scmp.lt.s32.totalorder %s11, 3
      %p181 = pnand %p179, %p180
      %p182 = pneg %p181
      // Predicated region
      $region33: #{vq_indexer_forward.3} parent=5 // pred_check
        _
      $region34: #{vq_indexer_forward.3} parent=5 // pred_check_branch
        %184 = sbr.rel (%p181) target = $region36
      $region35: #{vq_indexer_forward.3} parent=5 // pred_region
        %s185 = ssub.s32 %s11, 1
        // Predicated region
        $region37: #{vq_indexer_forward.3} parent=35 // pred_check
          %p186 = pneg %p105
        $region38: #{vq_indexer_forward.3} parent=35 // pred_check_branch
          %188 = sbr.rel (%p186) target = $region40
        $region39: #{vq_indexer_forward.3} parent=35 // pred_region
          %190 = dma.done [#allocation3], 16
        $region40: #{vq_indexer_forward.3} parent=35 // pred_fallthru
          _
        %p191 = scmp.lt.s32.totalorder %s16, 1
        %s192 = scalar_select %p191, %s16, 1
        %s193 = smul.addr %s192, 8
        %s194 = scalar_lea.vmem %s0, %s193
        %p195 = pneg %p37
        %p196 = pneg %p34
        %p197 = scmp.lt.s32.totalorder %s16, 1
        %s198 = scalar_select %p197, %s16, 1
        %s199 = smul.addr %s198, 8
        %s200 = scalar_lea.vmem %s1, %s199
        %p201 = pneg %p63
        %p202 = pneg %p60
        %p203 = pneg %p84
        %p204 = pneg %p81
        %p205 = pneg %p105
        %p206 = pneg %p102
        %p207 = pneg %p131
        %p208 = pneg %p128
        %p209 = scmp.lt.s32.totalorder %s16, 1
        %s210 = scalar_select %p209, %s16, 1
        %s211 = smul.addr %s210, 2
        %s212 = smul.addr %s211, 8
        %s213 = scalar_lea.vmem %s4, %s212
        %p214 = scmp.lt.s32.totalorder %s16, 1
        %s215 = scalar_select %p214, %s16, 1
        %s216 = smul.addr %s215, 8
        %s217 = scalar_lea.vmem %s0, %s216
        %p218 = scmp.lt.s32.totalorder %s16, 1
        %s219 = scalar_select %p218, %s16, 1
        %s220 = smul.addr %s219, 8
        %s221 = scalar_lea.vmem %s1, %s220
        %p222 = scmp.lt.s32.totalorder %s16, 1
        %s223 = scalar_select %p222, %s16, 1
        %s224 = smul.addr %s223, 2
        %s225 = smul.addr %s224, 8
        %s226 = scalar_lea.vmem %s4, %s225
        %v228 = vld [vmem:[%s217] sm:$0xff]
        %v229 = vld [vmem:[%s2] sm:$0xf]
        %v230 = vld [vmem:[%s2 + $0x4] sm:$0xf]
        %v231 = vld [vmem:[%s2 + $0x8] sm:$0xf]
        %v232 = vpack.c.bf16 %v228, %v228
        %v233 = vld [vmem:[#allocation2] sm:$0x1]
        %v235 = vperm.slane %v233, 0
        %v240 = vunpack.c.l.b16 %v229
        %v241 = vunpack.c.l.b16 %v230
        %v242 = vunpack.c.l.b16 %v231
        %v243 = vpack.c.b16 %v241, %v240
        %v244 = vpack.c.b16 %v242, %v242
        %vm246 = vcmask 195584
        %v248 = vsel %vm246, %v232, 0
        %vm250 = vcmask 1043456
        %v252 = vsel %vm250, %v244, 0
        %254 = vmatpush.bf16.msra.mxu0 0
        %255 = vmatpush.bf16.msra.mxu0 0
        %256 = vmatpush.bf16.msra.mxu0 0
        %257 = vmatpush.bf16.msra.mxu0 0
        %258 = vmatpush.bf16.msra.mxu0 0
        %259 = vmatpush.bf16.msra.mxu0 0
        %260 = vmatpush.bf16.msra.mxu0 %v252
        %261 = vmatpush.bf16.msra.mxu0 %v243
        %262 = vmatmul.bf16.gmra.mxu0 %v248
        %v263 = vpop.f32.mrf.mxu0
        %v264 = vadd.f32 %v235, %v263
        %v265 = vpop.f32.mrf.mxu0
        %266 = vdwg.mxu0
        %v267 = vxor.u32 %v264, 2147483648
        %v268 = vmul.f32 %v267, 1.442695
        %v269 = vpow.pop %v268
        %v270 = vadd.f32 %v269, 1.0
        %v271 = vrcp.pop %v270
        %v272 = vmul.f32 %v270, %v271
        %v273 = vsub.f32 1.0, %v272
        %v274 = vmul.f32 %v271, %v273
        %v275 = vadd.f32 %v271, %v274
        %vm276 = vweird.f32 %v270
        %vm277 = vweird.f32 %v271
        %vm278 = vmor %vm276, %vm277
        %v279 = vsel %vm278, %v271, %v275
        %v280 = vand.u32 2147483647, %v270
        %vm281 = vcmp.eq.f32.partialorder %v280, 8.507059e+37
        %v282 = vand.u32 %v270, 2147483648
        %v283 = vor.u32 1.1754944e-38, %v282
        %v284 = vsel %vm281, %v283, %v279
        %v285 = vmul.f32 1.0, %v284
        %v286 = vmul.f32 %v264, %v285
        %v287 = vld [vmem:[%s221] sm:$0xff]
        %v288 = vpack.c.bf16 %v287, %v287
        %v289 = vpack.c.bf16 %v286, %v286
        %290 = vxpose.xlu0.c.b16.start [1/8] %v288, 128
        %291 = vxpose.xlu0.c.b16.cont [2/8] 0, 128
        %292 = vxpose.xlu0.c.b16.cont [3/8] 0, 128
        %293 = vxpose.xlu0.c.b16.cont [4/8] 0, 128
        %294 = vxpose.xlu0.c.b16.cont [5/8] 0, 128
        %295 = vxpose.xlu0.c.b16.cont [6/8] 0, 128
        %296 = vxpose.xlu0.c.b16.cont [7/8] 0, 128
        %297 = vxpose.xlu0.c.b16.end [8/8] 0, 128
        %v298 = vpop.trf.xlu0
        %v299 = vpop.trf.xlu0
        %v300 = vpop.trf.xlu0
        %v301 = vpop.trf.xlu0
        %v302 = vpop.trf.xlu0
        %v303 = vpop.trf.xlu0
        %v304 = vpop.trf.xlu0
        %v305 = vpop.trf.xlu0
        %vm306 = vcmask 64512
        %v308 = vsel %vm306, %v298, 0
        %v311 = vsel %vm250, %v289, 0
        %313 = vmatpush.bf16.msra.mxu0 0
        %314 = vmatpush.bf16.msra.mxu0 0
        %315 = vmatpush.bf16.msra.mxu0 0
        %316 = vmatpush.bf16.msra.mxu0 0
        %317 = vmatpush.bf16.msra.mxu0 0
        %318 = vmatpush.bf16.msra.mxu0 0
        %319 = vmatpush.bf16.msra.mxu0 0
        %320 = vmatpush.bf16.msra.mxu0 %v311
        %321 = vmatmul.bf16.gmra.mxu0 %v308
        %v322 = vpop.f32.mrf.mxu0
        %v323 = vadd.f32 0.0, %v322
        %v324 = vpop.f32.mrf.mxu0
        %v325 = vadd.f32 0.0, %v324
        %326 = vdwg.mxu0
        %vm327 = vcmask 261120
        %328 = vst.msk [vmem:[%s226] sm:$0xff] %vm327, %v323
        %329 = vst.msk [vmem:[%s226 + $0x8] sm:$0xff] %vm327, %v325
        %p330 = scmp.lt.s32.totalorder %s16, 1
        %s331 = scalar_select %p330, %s16, 1
        %s332 = smul.addr %s331, 2
        %s333 = smul.addr %s332, 8
        %s334 = scalar_lea.vmem %s4, %s333
        // Predicated region
        $region41: #{vq_indexer_forward.3} parent=35 // pred_check
          %p335 = pneg %p128
        $region42: #{vq_indexer_forward.3} parent=35 // pred_check_branch
          %337 = sbr.rel (%p335) target = $region44
        $region43: #{vq_indexer_forward.3} parent=35 // pred_region
          _
        $region44: #{vq_indexer_forward.3} parent=35 // pred_fallthru
          _
      $region36: #{vq_indexer_forward.3} parent=5 // pred_fallthru
        _
      %p338 = scmp.le.s32.totalorder 2, %s11
      // Predicated region
      $region45: #{vq_indexer_forward.3} parent=5 // pred_check
        %p339 = pneg %p338
      $region46: #{vq_indexer_forward.3} parent=5 // pred_check_branch
        %341 = sbr.rel (%p339) target = $region48
      $region47: #{vq_indexer_forward.3} parent=5 // pred_region
        %s342 = ssub.s32 %s11, 2
        // Predicated region
        $region49: #{vq_indexer_forward.3} parent=47 // pred_check
          %p343 = pneg %p134
        $region50: #{vq_indexer_forward.3} parent=47 // pred_check_branch
          %345 = sbr.rel (%p343) target = $region52
        $region51: #{vq_indexer_forward.3} parent=47 // pred_region
          %p346 = scmp.lt.s32.totalorder %s17, 1
          %s347 = scalar_select %p346, %s17, 1
          %s348 = smul.addr %s347, 2
          %s349 = smul.addr %s348, 8
          %s350 = scalar_lea.vmem %s4, %s349
        $region52: #{vq_indexer_forward.3} parent=47 // pred_fallthru
          _
      $region48: #{vq_indexer_forward.3} parent=5 // pred_fallthru
        _
    $region6: #{vq_indexer_forward.3} parent=1 // loop_footer
      %s15 = sadd.s32 1, %s11
    $region7: #{vq_indexer_forward.3} parent=1 // loop_footer_branch
      %10 = sbr.rel target = $region3
    $region8: #{vq_indexer_forward.3} parent=1 // loop_exit
      _
    %351 = vsyncpa [#allocation3], 1
    %s352 = scalar_lea.sflag [#allocation3], 1
    %353 = vsyncpa %s352, 1

// kernel: vq_indexer_forward.5
$region0: #{vq_indexer_forward.5}
  #allocation0 [shape = 'u32[]', space=smem, size = 0x4, offset = 0x4, fixed_abs, tag = 'smem constant byte address 0x4 - core index']
  #allocation1 [shape = 'u32[72,128]{1,0:T(1,128)}', space=vmem, size = 0x9000, scoped, tag = 'internal scratch']
  %s0 = inlined_call_operand.vmem [shape: f32[32,32], index: 0, kind: input, shape index: {}]
  %s1 = inlined_call_operand.vmem [shape: bf16[32,32], index: 1, kind: input, shape index: {}]
  %s2 = inlined_call_operand.hbm [shape: f32[1,32], index: 2, kind: input, shape index: {}]
  %s3 = inlined_call_operand.vmem [shape: bf16[2,16,8], index: 3, kind: input, shape index: {}]
  %s4 = inlined_call_operand.vmem [shape: f32[2,1,8], index: 4, kind: input, shape index: {}]
  %s5 = inlined_call_operand.vmem [shape: bf16[2,8,4], index: 5, kind: input, shape index: {}]
  %s6 = inlined_call_operand.vmem [shape: f32[2,1,4], index: 6, kind: input, shape index: {}]
  %s7 = inlined_call_operand.vmem [shape: bf16[2,4,10], index: 7, kind: input, shape index: {}]
  %s8 = inlined_call_operand.vmem [shape: f32[2,1,10], index: 8, kind: input, shape index: {}]
  %s9 = inlined_call_operand.vmem [shape: f32[32,128], index: 9, kind: output, shape index: {}]
  %s10 = sld [smem:[#allocation0]]
  $region73: #{vq_indexer_forward.5} parent=0
    _
  %s12 = ssub.s32 1, %s10
  %s13 = scalar_select 0, %s12, %s10
  $region1: #{vq_indexer_forward.5} parent=0
    #allocation2 [shape = 'u8[512]{0}', space=vmem, size = 0x400, scoped, tag = 'input window, operand 2, single buffered']
    #allocation3 [shape = 's32[2]{0}', space=sflag, size = 0x8, scoped, tag = 'scoped memory for vq_indexer_forward.5']
    %14 = vsyncpa [#allocation3], 0
    loop: start=0, step=1, limit=4
    $region2: #{vq_indexer_forward.5} parent=1 // loop_pre_header
      _
    $region3: #{vq_indexer_forward.5} parent=1 // loop_header
      %s16 = sphi 0, %s20
      %p17 = scmp.ge.s32.totalorder %s16, 4
      %s26 = sphi 0, %s28
      %s29 = sphi 0, %s26
      %s30 = sphi 0, %s29
      %s46 = sphi 0, %s30
      %s50 = sphi 0, %s50
      %s52 = sphi 0, %s50
      %s53 = sphi 0, %s52
      %s67 = sphi 0, %s53
      %s71 = sphi 0, %s71
      %s73 = sphi 0, %s71
      %s74 = sphi 0, %s73
      %s88 = sphi 0, %s74
      %s92 = sphi 0, %s92
      %s94 = sphi 0, %s92
      %s95 = sphi 0, %s94
      %s109 = sphi 0, %s95
      %s113 = sphi 0, %s113
      %s115 = sphi 0, %s113
      %s116 = sphi 0, %s115
      %s130 = sphi 0, %s116
      %s134 = sphi 0, %s134
      %s136 = sphi 0, %s134
      %s137 = sphi 0, %s136
      %s151 = sphi 0, %s137
      %s155 = sphi 0, %s155
      %s157 = sphi 0, %s155
      %s158 = sphi 0, %s157
      %s172 = sphi 0, %s158
      %s176 = sphi 0, %s176
      %s178 = sphi 0, %s176
      %s179 = sphi 0, %s178
      %s193 = sphi 0, %s179
      %s197 = sphi 0, %s197
      %s199 = sphi 0, %s197
      %s200 = sphi 0, %s199
      %s214 = sphi 0, %s200
      %s220 = sphi 0, %s222
      %s223 = sphi 0, %s220
      %s224 = sphi 0, %s223
      %s240 = sphi 0, %s224
    $region4: #{vq_indexer_forward.5} parent=1 // loop_header_branch
      %19 = sbr.rel (%p17) target = $region8
    $region5: #{vq_indexer_forward.5} parent=1 // loop_body
      %s21 = ssub.s32 %s16, 1
      %s22 = ssub.s32 %s16, 2
      %s23 = sadd.s32 %s16, 1
      %s24 = ssub.s32 %s16, %s23
      %p25 = scmp.eq.s32.totalorder %s24, 0
      %s27 = sadd.s32 %s26, 1
      %s28 = scalar_select %p25, %s26, %s27
      %p31 = pneg %p25
      %p32 = scmp.eq.s32.totalorder %s16, 1
      %p33 = por %p31, %p32
      %p34 = scmp.ne.s32.totalorder %s26, %s29
      %p35 = scmp.eq.s32.totalorder %s16, 0
      %p36 = por %p34, %p35
      %p37 = scmp.ne.s32.totalorder %s26, %s29
      %p38 = scmp.eq.s32.totalorder %s21, 1
      %p39 = por %p37, %p38
      %p40 = scmp.ne.s32.totalorder %s29, %s30
      %p41 = scmp.eq.s32.totalorder %s21, 0
      %p42 = por %p40, %p41
      %p43 = scmp.ne.s32.totalorder %s29, %s30
      %p44 = scmp.eq.s32.totalorder %s22, 1
      %p45 = por %p43, %p44
      %p47 = scmp.ne.s32.totalorder %s30, %s46
      %p48 = scmp.eq.s32.totalorder %s22, 0
      %p49 = por %p47, %p48
      %s51 = sadd.s32 %s50, 1
      %p54 = scmp.eq.s32.totalorder %s16, 1
      %p55 = scmp.ne.s32.totalorder %s50, %s52
      %p56 = scmp.eq.s32.totalorder %s16, 0
      %p57 = por %p55, %p56
      %p58 = scmp.ne.s32.totalorder %s50, %s52
      %p59 = scmp.eq.s32.totalorder %s21, 1
      %p60 = por %p58, %p59
      %p61 = scmp.ne.s32.totalorder %s52, %s53
      %p62 = scmp.eq.s32.totalorder %s21, 0
      %p63 = por %p61, %p62
      %p64 = scmp.ne.s32.totalorder %s52, %s53
      %p65 = scmp.eq.s32.totalorder %s22, 1
      %p66 = por %p64, %p65
      %p68 = scmp.ne.s32.totalorder %s53, %s67
      %p69 = scmp.eq.s32.totalorder %s22, 0
      %p70 = por %p68, %p69
      %s72 = sadd.s32 %s71, 1
      %p75 = scmp.eq.s32.totalorder %s16, 1
      %p76 = scmp.ne.s32.totalorder %s71, %s73
      %p77 = scmp.eq.s32.totalorder %s16, 0
      %p78 = por %p76, %p77
      %p79 = scmp.ne.s32.totalorder %s71, %s73
      %p80 = scmp.eq.s32.totalorder %s21, 1
      %p81 = por %p79, %p80
      %p82 = scmp.ne.s32.totalorder %s73, %s74
      %p83 = scmp.eq.s32.totalorder %s21, 0
      %p84 = por %p82, %p83
      %p85 = scmp.ne.s32.totalorder %s73, %s74
      %p86 = scmp.eq.s32.totalorder %s22, 1
      %p87 = por %p85, %p86
      %p89 = scmp.ne.s32.totalorder %s74, %s88
      %p90 = scmp.eq.s32.totalorder %s22, 0
      %p91 = por %p89, %p90
      %s93 = sadd.s32 %s92, 1
      %p96 = scmp.eq.s32.totalorder %s16, 1
      %p97 = scmp.ne.s32.totalorder %s92, %s94
      %p98 = scmp.eq.s32.totalorder %s16, 0
      %p99 = por %p97, %p98
      %p100 = scmp.ne.s32.totalorder %s92, %s94
      %p101 = scmp.eq.s32.totalorder %s21, 1
      %p102 = por %p100, %p101
      %p103 = scmp.ne.s32.totalorder %s94, %s95
      %p104 = scmp.eq.s32.totalorder %s21, 0
      %p105 = por %p103, %p104
      %p106 = scmp.ne.s32.totalorder %s94, %s95
      %p107 = scmp.eq.s32.totalorder %s22, 1
      %p108 = por %p106, %p107
      %p110 = scmp.ne.s32.totalorder %s95, %s109
      %p111 = scmp.eq.s32.totalorder %s22, 0
      %p112 = por %p110, %p111
      %s114 = sadd.s32 %s113, 1
      %p117 = scmp.eq.s32.totalorder %s16, 1
      %p118 = scmp.ne.s32.totalorder %s113, %s115
      %p119 = scmp.eq.s32.totalorder %s16, 0
      %p120 = por %p118, %p119
      %p121 = scmp.ne.s32.totalorder %s113, %s115
      %p122 = scmp.eq.s32.totalorder %s21, 1
      %p123 = por %p121, %p122
      %p124 = scmp.ne.s32.totalorder %s115, %s116
      %p125 = scmp.eq.s32.totalorder %s21, 0
      %p126 = por %p124, %p125
      %p127 = scmp.ne.s32.totalorder %s115, %s116
      %p128 = scmp.eq.s32.totalorder %s22, 1
      %p129 = por %p127, %p128
      %p131 = scmp.ne.s32.totalorder %s116, %s130
      %p132 = scmp.eq.s32.totalorder %s22, 0
      %p133 = por %p131, %p132
      %s135 = sadd.s32 %s134, 1
      %p138 = scmp.eq.s32.totalorder %s16, 1
      %p139 = scmp.ne.s32.totalorder %s134, %s136
      %p140 = scmp.eq.s32.totalorder %s16, 0
      %p141 = por %p139, %p140
      %p142 = scmp.ne.s32.totalorder %s134, %s136
      %p143 = scmp.eq.s32.totalorder %s21, 1
      %p144 = por %p142, %p143
      %p145 = scmp.ne.s32.totalorder %s136, %s137
      %p146 = scmp.eq.s32.totalorder %s21, 0
      %p147 = por %p145, %p146
      %p148 = scmp.ne.s32.totalorder %s136, %s137
      %p149 = scmp.eq.s32.totalorder %s22, 1
      %p150 = por %p148, %p149
      %p152 = scmp.ne.s32.totalorder %s137, %s151
      %p153 = scmp.eq.s32.totalorder %s22, 0
      %p154 = por %p152, %p153
      %s156 = sadd.s32 %s155, 1
      %p159 = scmp.eq.s32.totalorder %s16, 1
      %p160 = scmp.ne.s32.totalorder %s155, %s157
      %p161 = scmp.eq.s32.totalorder %s16, 0
      %p162 = por %p160, %p161
      %p163 = scmp.ne.s32.totalorder %s155, %s157
      %p164 = scmp.eq.s32.totalorder %s21, 1
      %p165 = por %p163, %p164
      %p166 = scmp.ne.s32.totalorder %s157, %s158
      %p167 = scmp.eq.s32.totalorder %s21, 0
      %p168 = por %p166, %p167
      %p169 = scmp.ne.s32.totalorder %s157, %s158
      %p170 = scmp.eq.s32.totalorder %s22, 1
      %p171 = por %p169, %p170
      %p173 = scmp.ne.s32.totalorder %s158, %s172
      %p174 = scmp.eq.s32.totalorder %s22, 0
      %p175 = por %p173, %p174
      %s177 = sadd.s32 %s176, 1
      %p180 = scmp.eq.s32.totalorder %s16, 1
      %p181 = scmp.ne.s32.totalorder %s176, %s178
      %p182 = scmp.eq.s32.totalorder %s16, 0
      %p183 = por %p181, %p182
      %p184 = scmp.ne.s32.totalorder %s176, %s178
      %p185 = scmp.eq.s32.totalorder %s21, 1
      %p186 = por %p184, %p185
      %p187 = scmp.ne.s32.totalorder %s178, %s179
      %p188 = scmp.eq.s32.totalorder %s21, 0
      %p189 = por %p187, %p188
      %p190 = scmp.ne.s32.totalorder %s178, %s179
      %p191 = scmp.eq.s32.totalorder %s22, 1
      %p192 = por %p190, %p191
      %p194 = scmp.ne.s32.totalorder %s179, %s193
      %p195 = scmp.eq.s32.totalorder %s22, 0
      %p196 = por %p194, %p195
      %s198 = sadd.s32 %s197, 1
      %p201 = scmp.eq.s32.totalorder %s16, 1
      %p202 = scmp.ne.s32.totalorder %s197, %s199
      %p203 = scmp.eq.s32.totalorder %s16, 0
      %p204 = por %p202, %p203
      %p205 = scmp.ne.s32.totalorder %s197, %s199
      %p206 = scmp.eq.s32.totalorder %s21, 1
      %p207 = por %p205, %p206
      %p208 = scmp.ne.s32.totalorder %s199, %s200
      %p209 = scmp.eq.s32.totalorder %s21, 0
      %p210 = por %p208, %p209
      %p211 = scmp.ne.s32.totalorder %s199, %s200
      %p212 = scmp.eq.s32.totalorder %s22, 1
      %p213 = por %p211, %p212
      %p215 = scmp.ne.s32.totalorder %s200, %s214
      %p216 = scmp.eq.s32.totalorder %s22, 0
      %p217 = por %p215, %p216
      %s218 = ssub.s32 %s16, %s23
      %p219 = scmp.eq.s32.totalorder %s218, 0
      %s221 = sadd.s32 %s220, 1
      %s222 = scalar_select %p219, %s220, %s221
      %p225 = pneg %p219
      %p226 = scmp.eq.s32.totalorder %s16, 1
      %p227 = por %p225, %p226
      %p228 = scmp.ne.s32.totalorder %s220, %s223
      %p229 = scmp.eq.s32.totalorder %s16, 0
      %p230 = por %p228, %p229
      %p231 = scmp.ne.s32.totalorder %s220, %s223
      %p232 = scmp.eq.s32.totalorder %s21, 1
      %p233 = por %p231, %p232
      %p234 = scmp.ne.s32.totalorder %s223, %s224
      %p235 = scmp.eq.s32.totalorder %s21, 0
      %p236 = por %p234, %p235
      %p237 = scmp.ne.s32.totalorder %s223, %s224
      %p238 = scmp.eq.s32.totalorder %s22, 1
      %p239 = por %p237, %p238
      %p241 = scmp.ne.s32.totalorder %s224, %s240
      %p242 = scmp.eq.s32.totalorder %s22, 0
      %p243 = por %p241, %p242
      %p244 = scmp.le.s32.totalorder 1, %s16
      %p245 = scmp.lt.s32.totalorder %s16, 3
      %p246 = pnand %p244, %p245
      %p247 = pneg %p246
      // Predicated region
      $region9: #{vq_indexer_forward.5} parent=5 // pred_check
        _
      $region10: #{vq_indexer_forward.5} parent=5 // pred_check_branch
        %249 = sbr.rel (%p246) target = $region12
      $region11: #{vq_indexer_forward.5} parent=5 // pred_region
        %s250 = ssub.s32 %s16, 1
        // Predicated region
        $region13: #{vq_indexer_forward.5} parent=11 // pred_check
          %p251 = pneg %p63
        $region14: #{vq_indexer_forward.5} parent=11 // pred_check_branch
          %253 = sbr.rel (%p251) target = $region16
        $region15: #{vq_indexer_forward.5} parent=11 // pred_region
          _
        $region16: #{vq_indexer_forward.5} parent=11 // pred_fallthru
          _
        // Predicated region
        $region17: #{vq_indexer_forward.5} parent=11 // pred_check
          %p254 = pneg %p84
        $region18: #{vq_indexer_forward.5} parent=11 // pred_check_branch
          %256 = sbr.rel (%p254) target = $region20
        $region19: #{vq_indexer_forward.5} parent=11 // pred_region
          %258 = vsyncadd [#allocation3], 0
          %s260 = sshll.u32 %s2, 4
          %s261 = int_to_ptr.hbm [resolvable:$true] %s260
          %s262 = sshll.u32 [#allocation2], 4
          %s263 = int_to_ptr.vmem [resolvable:$true] %s262
          %265 = dma.hbm_to_vmem [thread:$0]  %s261, 16, %s263, [#allocation3]
        $region20: #{vq_indexer_forward.5} parent=11 // pred_fallthru
          _
        // Predicated region
        $region21: #{vq_indexer_forward.5} parent=11 // pred_check
          %p266 = pneg %p105
        $region22: #{vq_indexer_forward.5} parent=11 // pred_check_branch
          %268 = sbr.rel (%p266) target = $region24
        $region23: #{vq_indexer_forward.5} parent=11 // pred_region
          _
        $region24: #{vq_indexer_forward.5} parent=11 // pred_fallthru
          _
        // Predicated region
        $region25: #{vq_indexer_forward.5} parent=11 // pred_check
          %p269 = pneg %p126
        $region26: #{vq_indexer_forward.5} parent=11 // pred_check_branch
          %271 = sbr.rel (%p269) target = $region28
        $region27: #{vq_indexer_forward.5} parent=11 // pred_region
          _
        $region28: #{vq_indexer_forward.5} parent=11 // pred_fallthru
          _
        // Predicated region
        $region29: #{vq_indexer_forward.5} parent=11 // pred_check
          %p272 = pneg %p147
        $region30: #{vq_indexer_forward.5} parent=11 // pred_check_branch
          %274 = sbr.rel (%p272) target = $region32
        $region31: #{vq_indexer_forward.5} parent=11 // pred_region
          _
        $region32: #{vq_indexer_forward.5} parent=11 // pred_fallthru
          _
        // Predicated region
        $region33: #{vq_indexer_forward.5} parent=11 // pred_check
          %p275 = pneg %p168
        $region34: #{vq_indexer_forward.5} parent=11 // pred_check_branch
          %277 = sbr.rel (%p275) target = $region36
        $region35: #{vq_indexer_forward.5} parent=11 // pred_region
          _
        $region36: #{vq_indexer_forward.5} parent=11 // pred_fallthru
          _
        // Predicated region
        $region37: #{vq_indexer_forward.5} parent=11 // pred_check
          %p278 = pneg %p189
        $region38: #{vq_indexer_forward.5} parent=11 // pred_check_branch
          %280 = sbr.rel (%p278) target = $region40
        $region39: #{vq_indexer_forward.5} parent=11 // pred_region
          _
        $region40: #{vq_indexer_forward.5} parent=11 // pred_fallthru
          _
        // Predicated region
        $region41: #{vq_indexer_forward.5} parent=11 // pred_check
          %p281 = pneg %p210
        $region42: #{vq_indexer_forward.5} parent=11 // pred_check_branch
          %283 = sbr.rel (%p281) target = $region44
        $region43: #{vq_indexer_forward.5} parent=11 // pred_region
          _
        $region44: #{vq_indexer_forward.5} parent=11 // pred_fallthru
          _
      $region12: #{vq_indexer_forward.5} parent=5 // pred_fallthru
        _
      %p284 = scmp.lt.s32.totalorder %s16, 2
      // Predicated region
      $region45: #{vq_indexer_forward.5} parent=5 // pred_check
        %p285 = pneg %p284
      $region46: #{vq_indexer_forward.5} parent=5 // pred_check_branch
        %287 = sbr.rel (%p285) target = $region48
      $region47: #{vq_indexer_forward.5} parent=5 // pred_region
        // Predicated region
        $region49: #{vq_indexer_forward.5} parent=47 // pred_check
          %p288 = pneg %p36
        $region50: #{vq_indexer_forward.5} parent=47 // pred_check_branch
          %290 = sbr.rel (%p288) target = $region52
        $region51: #{vq_indexer_forward.5} parent=47 // pred_region
          %s291 = smul.u32 2, %s16
          %p292 = scmp.lt.s32.totalorder %s291, 3
          %s293 = scalar_select %p292, %s291, 3
          %s294 = smul.addr %s293, 8
          %s295 = scalar_lea.vmem %s0, %s294
          %s296 = smul.u32 2, %s16
        $region52: #{vq_indexer_forward.5} parent=47 // pred_fallthru
          _
      $region48: #{vq_indexer_forward.5} parent=5 // pred_fallthru
        _
      %p297 = scmp.le.s32.totalorder 1, %s16
      %p298 = scmp.lt.s32.totalorder %s16, 3
      %p299 = pnand %p297, %p298
      %p300 = pneg %p299
      // Predicated region
      $region53: #{vq_indexer_forward.5} parent=5 // pred_check
        _
      $region54: #{vq_indexer_forward.5} parent=5 // pred_check_branch
        %302 = sbr.rel (%p299) target = $region56
      $region55: #{vq_indexer_forward.5} parent=5 // pred_region
        %s303 = ssub.s32 %s16, 1
        // Predicated region
        $region57: #{vq_indexer_forward.5} parent=55 // pred_check
          %p304 = pneg %p84
        $region58: #{vq_indexer_forward.5} parent=55 // pred_check_branch
          %306 = sbr.rel (%p304) target = $region60
        $region59: #{vq_indexer_forward.5} parent=55 // pred_region
          %308 = dma.done [#allocation3], 16
        $region60: #{vq_indexer_forward.5} parent=55 // pred_fallthru
          _
        %s309 = smul.u32 2, %s21
        %p310 = scmp.lt.s32.totalorder %s309, 3
        %s311 = scalar_select %p310, %s309, 3
        %s312 = smul.addr %s311, 8
        %s313 = scalar_lea.vmem %s0, %s312
        %p314 = pneg %p42
        %p315 = pneg %p39
        %p316 = pneg %p63
        %p317 = pneg %p60
        %p318 = pneg %p84
        %p319 = pneg %p81
        %p320 = pneg %p105
        %p321 = pneg %p102
        %p322 = pneg %p126
        %p323 = pneg %p123
        %p324 = pneg %p147
        %p325 = pneg %p144
        %p326 = pneg %p168
        %p327 = pneg %p165
        %p328 = pneg %p189
        %p329 = pneg %p186
        %p330 = pneg %p210
        %p331 = pneg %p207
        %p332 = pneg %p236
        %p333 = pneg %p233
        %s334 = smul.u32 2, %s21
        %p335 = scmp.lt.s32.totalorder %s334, 3
        %s336 = scalar_select %p335, %s334, 3
        %s337 = smul.addr %s336, 8
        %s338 = scalar_lea.vmem %s9, %s337
        %s339 = smul.u32 2, %s21
        %p340 = scmp.lt.s32.totalorder %s339, 3
        %s341 = scalar_select %p340, %s339, 3
        %s342 = smul.addr %s341, 8
        %s343 = scalar_lea.vmem %s0, %s342
        %s344 = smul.u32 2, %s21
        %s345 = smul.u32 2, %s21
        %p346 = scmp.lt.s32.totalorder %s345, 3
        %s347 = scalar_select %p346, %s345, 3
        %s348 = smul.addr %s347, 8
        %s349 = scalar_lea.vmem %s9, %s348
        %s350 = smul.u32 2, %s21
        %v352 = vld [vmem:[%s343] sm:$0xff]
        %v353 = vld [vmem:[%s343 + $0x8] sm:$0xff]
        %v354 = vld [vmem:[%s1] sm:$0xf]
        %v355 = vld [vmem:[%s1 + $0x4] sm:$0xf]
        %v356 = vld [vmem:[%s1 + $0x8] sm:$0xf]
        %v357 = vld [vmem:[%s1 + $0xc] sm:$0xf]
        %v358 = vpack.c.bf16 %v353, %v352
        %v359 = vld [vmem:[#allocation2] sm:$0x1]
        %v361 = vperm.slane %v359, 0
        %v367 = vunpack.c.l.b16 %v354
        %v368 = vunpack.c.l.b16 %v355
        %v369 = vunpack.c.l.b16 %v356
        %v370 = vunpack.c.l.b16 %v357
        %v371 = vpack.c.b16 %v368, %v367
        %v372 = vpack.c.b16 %v370, %v369
        %vm375 = vcmask 261120
        %v377 = vsel %vm375, %v358, 0
        %379 = vmatpush.bf16.msra.mxu0 0
        %380 = vmatpush.bf16.msra.mxu0 0
        %381 = vmatpush.bf16.msra.mxu0 0
        %382 = vmatpush.bf16.msra.mxu0 0
        %383 = vmatpush.bf16.msra.mxu0 0
        %384 = vmatpush.bf16.msra.mxu0 0
        %385 = vmatpush.bf16.msra.mxu0 %v372
        %386 = vmatpush.bf16.msra.mxu0 %v371
        %387 = vmatmul.bf16.gmra.mxu0 %v377
        %v388 = vpop.f32.mrf.mxu0
        %v389 = vadd.f32 %v361, %v388
        %v390 = vpop.f32.mrf.mxu0
        %v391 = vadd.f32 %v361, %v390
        %392 = vdwg.mxu0
        %v393 = vxor.u32 %v389, 2147483648
        %v394 = vxor.u32 %v391, 2147483648
        %v395 = vmul.f32 %v393, 1.442695
        %v396 = vpow.pop %v395
        %v397 = vmul.f32 %v394, 1.442695
        %v398 = vpow.pop %v397
        %v399 = vadd.f32 %v396, 1.0
        %v400 = vadd.f32 %v398, 1.0
        %v401 = vrcp.pop %v399
        %v402 = vmul.f32 %v399, %v401
        %v403 = vsub.f32 1.0, %v402
        %v404 = vmul.f32 %v401, %v403
        %v405 = vadd.f32 %v401, %v404
        %vm406 = vweird.f32 %v399
        %vm407 = vweird.f32 %v401
        %vm408 = vmor %vm406, %vm407
        %v409 = vsel %vm408, %v401, %v405
        %v410 = vand.u32 2147483647, %v399
        %vm411 = vcmp.eq.f32.partialorder %v410, 8.507059e+37
        %v412 = vand.u32 %v399, 2147483648
        %v413 = vor.u32 1.1754944e-38, %v412
        %v414 = vsel %vm411, %v413, %v409
        %v415 = vmul.f32 1.0, %v414
        %v416 = vrcp.pop %v400
        %v417 = vmul.f32 %v400, %v416
        %v418 = vsub.f32 1.0, %v417
        %v419 = vmul.f32 %v416, %v418
        %v420 = vadd.f32 %v416, %v419
        %vm421 = vweird.f32 %v400
        %vm422 = vweird.f32 %v416
        %vm423 = vmor %vm421, %vm422
        %v424 = vsel %vm423, %v416, %v420
        %v425 = vand.u32 2147483647, %v400
        %vm426 = vcmp.eq.f32.partialorder %v425, 8.507059e+37
        %v427 = vand.u32 %v400, 2147483648
        %v428 = vor.u32 1.1754944e-38, %v427
        %v429 = vsel %vm426, %v428, %v424
        %v430 = vmul.f32 1.0, %v429
        %v431 = vmul.f32 %v389, %v415
        %v432 = vmul.f32 %v391, %v430
        %v433 = vld [vmem:[%s3] sm:$0xf]
        %v434 = vld [vmem:[%s3 + $0x4] sm:$0xf]
        %v435 = vpack.c.bf16 %v432, %v431
        %v436 = vld [vmem:[%s4] sm:$0x1]
        %v438 = vperm.slane %v436, 0
        %v442 = vunpack.c.l.b16 %v433
        %v443 = vunpack.c.l.b16 %v434
        %v444 = vpack.c.b16 %v443, %v442
        %vm446 = vcmask 130048
        %v448 = vsel %vm446, %v435, 0
        %450 = vmatpush.bf16.msra.mxu0 0
        %451 = vmatpush.bf16.msra.mxu0 0
        %452 = vmatpush.bf16.msra.mxu0 0
        %453 = vmatpush.bf16.msra.mxu0 0
        %454 = vmatpush.bf16.msra.mxu0 0
        %455 = vmatpush.bf16.msra.mxu0 0
        %456 = vmatpush.bf16.msra.mxu0 0
        %457 = vmatpush.bf16.msra.mxu0 %v444
        %458 = vmatmul.bf16.gmra.mxu0 %v448
        %v459 = vpop.f32.mrf.mxu0
        %v460 = vadd.f32 %v438, %v459
        %v461 = vpop.f32.mrf.mxu0
        %v462 = vadd.f32 %v438, %v461
        %463 = vdwg.mxu0
        %v464 = vxor.u32 %v460, 2147483648
        %v465 = vxor.u32 %v462, 2147483648
        %v466 = vmul.f32 %v464, 1.442695
        %v467 = vpow.pop %v466
        %v468 = vmul.f32 %v465, 1.442695
        %v469 = vpow.pop %v468
        %v470 = vadd.f32 %v467, 1.0
        %v471 = vadd.f32 %v469, 1.0
        %v472 = vrcp.pop %v470
        %v473 = vmul.f32 %v470, %v472
        %v474 = vsub.f32 1.0, %v473
        %v475 = vmul.f32 %v472, %v474
        %v476 = vadd.f32 %v472, %v475
        %vm477 = vweird.f32 %v470
        %vm478 = vweird.f32 %v472
        %vm479 = vmor %vm477, %vm478
        %v480 = vsel %vm479, %v472, %v476
        %v481 = vand.u32 2147483647, %v470
        %vm482 = vcmp.eq.f32.partialorder %v481, 8.507059e+37
        %v483 = vand.u32 %v470, 2147483648
        %v484 = vor.u32 1.1754944e-38, %v483
        %v485 = vsel %vm482, %v484, %v480
        %v486 = vmul.f32 1.0, %v485
        %v487 = vrcp.pop %v471
        %v488 = vmul.f32 %v471, %v487
        %v489 = vsub.f32 1.0, %v488
        %v490 = vmul.f32 %v487, %v489
        %v491 = vadd.f32 %v487, %v490
        %vm492 = vweird.f32 %v471
        %vm493 = vweird.f32 %v487
        %vm494 = vmor %vm492, %vm493
        %v495 = vsel %vm494, %v487, %v491
        %v496 = vand.u32 2147483647, %v471
        %vm497 = vcmp.eq.f32.partialorder %v496, 8.507059e+37
        %v498 = vand.u32 %v471, 2147483648
        %v499 = vor.u32 1.1754944e-38, %v498
        %v500 = vsel %vm497, %v499, %v495
        %v501 = vmul.f32 1.0, %v500
        %v502 = vmul.f32 %v460, %v486
        %v503 = vmul.f32 %v462, %v501
        %v504 = vld [vmem:[%s5] sm:$0xf]
        %v505 = vpack.c.bf16 %v503, %v502
        %v506 = vld [vmem:[%s6] sm:$0x1]
        %v508 = vperm.slane %v506, 0
        %vm510 = vcmask 64512
        %v512 = vsel %vm510, %v505, 0
        %vm514 = vcmask 1043456
        %v516 = vsel %vm514, %v504, 0
        %518 = vmatpush.bf16.msra.mxu0 0
        %519 = vmatpush.bf16.msra.mxu0 0
        %520 = vmatpush.bf16.msra.mxu0 0
        %521 = vmatpush.bf16.msra.mxu0 0
        %522 = vmatpush.bf16.msra.mxu0 0
        %523 = vmatpush.bf16.msra.mxu0 0
        %524 = vmatpush.bf16.msra.mxu0 0
        %525 = vmatpush.bf16.msra.mxu0 %v516
        %526 = vmatmul.bf16.gmra.mxu0 %v512
        %v527 = vpop.f32.mrf.mxu0
        %v528 = vadd.f32 %v508, %v527
        %v529 = vpop.f32.mrf.mxu0
        %v530 = vadd.f32 %v508, %v529
        %531 = vdwg.mxu0
        %v532 = vxor.u32 %v528, 2147483648
        %v533 = vxor.u32 %v530, 2147483648
        %v534 = vmul.f32 %v532, 1.442695
        %v535 = vpow.pop %v534
        %v536 = vmul.f32 %v533, 1.442695
        %v537 = vpow.pop %v536
        %v538 = vadd.f32 %v535, 1.0
        %v539 = vadd.f32 %v537, 1.0
        %v540 = vrcp.pop %v538
        %v541 = vmul.f32 %v538, %v540
        %v542 = vsub.f32 1.0, %v541
        %v543 = vmul.f32 %v540, %v542
        %v544 = vadd.f32 %v540, %v543
        %vm545 = vweird.f32 %v538
        %vm546 = vweird.f32 %v540
        %vm547 = vmor %vm545, %vm546
        %v548 = vsel %vm547, %v540, %v544
        %v549 = vand.u32 2147483647, %v538
        %vm550 = vcmp.eq.f32.partialorder %v549, 8.507059e+37
        %v551 = vand.u32 %v538, 2147483648
        %v552 = vor.u32 1.1754944e-38, %v551
        %v553 = vsel %vm550, %v552, %v548
        %v554 = vmul.f32 1.0, %v553
        %v555 = vrcp.pop %v539
        %v556 = vmul.f32 %v539, %v555
        %v557 = vsub.f32 1.0, %v556
        %v558 = vmul.f32 %v555, %v557
        %v559 = vadd.f32 %v555, %v558
        %vm560 = vweird.f32 %v539
        %vm561 = vweird.f32 %v555
        %vm562 = vmor %vm560, %vm561
        %v563 = vsel %vm562, %v555, %v559
        %v564 = vand.u32 2147483647, %v539
        %vm565 = vcmp.eq.f32.partialorder %v564, 8.507059e+37
        %v566 = vand.u32 %v539, 2147483648
        %v567 = vor.u32 1.1754944e-38, %v566
        %v568 = vsel %vm565, %v567, %v563
        %v569 = vmul.f32 1.0, %v568
        %v570 = vmul.f32 %v528, %v554
        %v571 = vmul.f32 %v530, %v569
        %v572 = vld [vmem:[%s7] sm:$0x3]
        %v573 = vpack.c.bf16 %v571, %v570
        %v574 = vld [vmem:[%s8] sm:$0x1]
        %v576 = vperm.slane %v574, 0
        %vm578 = vcmask 31744
        %v580 = vsel %vm578, %v573, 0
        %vm582 = vcmask 1041408
        %v584 = vsel %vm582, %v572, 0
        %586 = vmatpush.bf16.msra.mxu0 0
        %587 = vmatpush.bf16.msra.mxu0 0
        %588 = vmatpush.bf16.msra.mxu0 0
        %589 = vmatpush.bf16.msra.mxu0 0
        %590 = vmatpush.bf16.msra.mxu0 0
        %591 = vmatpush.bf16.msra.mxu0 0
        %592 = vmatpush.bf16.msra.mxu0 0
        %593 = vmatpush.bf16.msra.mxu0 %v584
        %594 = vmatmul.bf16.gmra.mxu0 %v580
        %v595 = vpop.f32.mrf.mxu0
        %v596 = vadd.f32 %v576, %v595
        %v597 = vpop.f32.mrf.mxu0
        %v598 = vadd.f32 %v576, %v597
        %599 = vdwg.mxu0
        %s600 = scalar_lea.vmem %s3, 8
        %v601 = vld [vmem:[%s600] sm:$0xf]
        %v602 = vld [vmem:[%s600 + $0x4] sm:$0xf]
        %s603 = scalar_lea.vmem %s4, 1
        %v604 = vld [vmem:[%s603] sm:$0x1]
        %v606 = vperm.slane %v604, 0
        %609 = vrot.lane.b32.xlu0 %v435, 112
        %v610 = vpop.permute.xlu0 %609
        %v613 = vunpack.c.l.b16 %v601
        %v614 = vunpack.c.l.b16 %v602
        %v615 = vpack.c.b16 %v614, %v613
        %v618 = vsel %vm446, %v610, 0
        %620 = vmatpush.bf16.msra.mxu0 0
        %621 = vmatpush.bf16.msra.mxu0 0
        %622 = vmatpush.bf16.msra.mxu0 0
        %623 = vmatpush.bf16.msra.mxu0 0
        %624 = vmatpush.bf16.msra.mxu0 0
        %625 = vmatpush.bf16.msra.mxu0 0
        %626 = vmatpush.bf16.msra.mxu0 0
        %627 = vmatpush.bf16.msra.mxu0 %v615
        %628 = vmatmul.bf16.gmra.mxu0 %v618
        %v629 = vpop.f32.mrf.mxu0
        %v630 = vadd.f32 %v606, %v629
        %v631 = vpop.f32.mrf.mxu0
        %v632 = vadd.f32 %v606, %v631
        %633 = vdwg.mxu0
        %v634 = vxor.u32 %v630, 2147483648
        %v635 = vxor.u32 %v632, 2147483648
        %v636 = vmul.f32 %v634, 1.442695
        %v637 = vpow.pop %v636
        %v638 = vmul.f32 %v635, 1.442695
        %v639 = vpow.pop %v638
        %v640 = vadd.f32 %v637, 1.0
        %v641 = vadd.f32 %v639, 1.0
        %v642 = vrcp.pop %v640
        %v643 = vmul.f32 %v640, %v642
        %v644 = vsub.f32 1.0, %v643
        %v645 = vmul.f32 %v642, %v644
        %v646 = vadd.f32 %v642, %v645
        %vm647 = vweird.f32 %v640
        %vm648 = vweird.f32 %v642
        %vm649 = vmor %vm647, %vm648
        %v650 = vsel %vm649, %v642, %v646
        %v651 = vand.u32 2147483647, %v640
        %vm652 = vcmp.eq.f32.partialorder %v651, 8.507059e+37
        %v653 = vand.u32 %v640, 2147483648
        %v654 = vor.u32 1.1754944e-38, %v653
        %v655 = vsel %vm652, %v654, %v650
        %v656 = vmul.f32 1.0, %v655
        %v657 = vrcp.pop %v641
        %v658 = vmul.f32 %v641, %v657
        %v659 = vsub.f32 1.0, %v658
        %v660 = vmul.f32 %v657, %v659
        %v661 = vadd.f32 %v657, %v660
        %vm662 = vweird.f32 %v641
        %vm663 = vweird.f32 %v657
        %vm664 = vmor %vm662, %vm663
        %v665 = vsel %vm664, %v657, %v661
        %v666 = vand.u32 2147483647, %v641
        %vm667 = vcmp.eq.f32.partialorder %v666, 8.507059e+37
        %v668 = vand.u32 %v641, 2147483648
        %v669 = vor.u32 1.1754944e-38, %v668
        %v670 = vsel %vm667, %v669, %v665
        %v671 = vmul.f32 1.0, %v670
        %v672 = vmul.f32 %v630, %v656
        %v673 = vmul.f32 %v632, %v671
        %s674 = scalar_lea.vmem %s5, 4
        %v675 = vld [vmem:[%s674] sm:$0xf]
        %v676 = vpack.c.bf16 %v673, %v672
        %s677 = scalar_lea.vmem %s6, 1
        %v678 = vld [vmem:[%s677] sm:$0x1]
        %v680 = vperm.slane %v678, 0
        %v683 = vsel %vm510, %v676, 0
        %v686 = vsel %vm514, %v675, 0
        %688 = vmatpush.bf16.msra.mxu0 0
        %689 = vmatpush.bf16.msra.mxu0 0
        %690 = vmatpush.bf16.msra.mxu0 0
        %691 = vmatpush.bf16.msra.mxu0 0
        %692 = vmatpush.bf16.msra.mxu0 0
        %693 = vmatpush.bf16.msra.mxu0 0
        %694 = vmatpush.bf16.msra.mxu0 0
        %695 = vmatpush.bf16.msra.mxu0 %v686
        %696 = vmatmul.bf16.gmra.mxu0 %v683
        %v697 = vpop.f32.mrf.mxu0
        %v698 = vadd.f32 %v680, %v697
        %v699 = vpop.f32.mrf.mxu0
        %v700 = vadd.f32 %v680, %v699
        %701 = vdwg.mxu0
        %v702 = vxor.u32 %v698, 2147483648
        %v703 = vxor.u32 %v700, 2147483648
        %v704 = vmul.f32 %v702, 1.442695
        %v705 = vpow.pop %v704
        %v706 = vmul.f32 %v703, 1.442695
        %v707 = vpow.pop %v706
        %v708 = vadd.f32 %v705, 1.0
        %v709 = vadd.f32 %v707, 1.0
        %v710 = vrcp.pop %v708
        %v711 = vmul.f32 %v708, %v710
        %v712 = vsub.f32 1.0, %v711
        %v713 = vmul.f32 %v710, %v712
        %v714 = vadd.f32 %v710, %v713
        %vm715 = vweird.f32 %v708
        %vm716 = vweird.f32 %v710
        %vm717 = vmor %vm715, %vm716
        %v718 = vsel %vm717, %v710, %v714
        %v719 = vand.u32 2147483647, %v708
        %vm720 = vcmp.eq.f32.partialorder %v719, 8.507059e+37
        %v721 = vand.u32 %v708, 2147483648
        %v722 = vor.u32 1.1754944e-38, %v721
        %v723 = vsel %vm720, %v722, %v718
        %v724 = vmul.f32 1.0, %v723
        %v725 = vrcp.pop %v709
        %v726 = vmul.f32 %v709, %v725
        %v727 = vsub.f32 1.0, %v726
        %v728 = vmul.f32 %v725, %v727
        %v729 = vadd.f32 %v725, %v728
        %vm730 = vweird.f32 %v709
        %vm731 = vweird.f32 %v725
        %vm732 = vmor %vm730, %vm731
        %v733 = vsel %vm732, %v725, %v729
        %v734 = vand.u32 2147483647, %v709
        %vm735 = vcmp.eq.f32.partialorder %v734, 8.507059e+37
        %v736 = vand.u32 %v709, 2147483648
        %v737 = vor.u32 1.1754944e-38, %v736
        %v738 = vsel %vm735, %v737, %v733
        %v739 = vmul.f32 1.0, %v738
        %v740 = vmul.f32 %v698, %v724
        %v741 = vmul.f32 %v700, %v739
        %s742 = scalar_lea.vmem %s7, 2
        %v743 = vld [vmem:[%s742] sm:$0x3]
        %v744 = vpack.c.bf16 %v741, %v740
        %s745 = scalar_lea.vmem %s8, 1
        %v746 = vld [vmem:[%s745] sm:$0x1]
        %v748 = vperm.slane %v746, 0
        %v751 = vsel %vm578, %v744, 0
        %v754 = vsel %vm582, %v743, 0
        %756 = vmatpush.bf16.msra.mxu0 0
        %757 = vmatpush.bf16.msra.mxu0 0
        %758 = vmatpush.bf16.msra.mxu0 0
        %759 = vmatpush.bf16.msra.mxu0 0
        %760 = vmatpush.bf16.msra.mxu0 0
        %761 = vmatpush.bf16.msra.mxu0 0
        %762 = vmatpush.bf16.msra.mxu0 0
        %763 = vmatpush.bf16.msra.mxu0 %v754
        %764 = vmatmul.bf16.gmra.mxu0 %v751
        %v765 = vpop.f32.mrf.mxu0
        %v766 = vadd.f32 %v748, %v765
        %v767 = vpop.f32.mrf.mxu0
        %v768 = vadd.f32 %v748, %v767
        %769 = vdwg.mxu0
        %772 = vrot.lane.b32.xlu0 %v766, 10
        %v773 = vpop.permute.xlu0 %772
        %774 = vrot.lane.b32.xlu0 %v768, 10
        %v775 = vpop.permute.xlu0 %774
        %vm778 = vcmask 80896
        %v779 = vsel %vm778, %v596, %v773
        %v780 = vsel %vm778, %v598, %v775
        %vm781 = vcmask 162816
        %v782 = vsel %vm781, %v779, 0.0
        %v783 = vsel %vm781, %v780, 0.0
        %784 = vst [vmem:[%s349] sm:$0xff] %v782
        %785 = vst [vmem:[%s349 + $0x8] sm:$0xff] %v783
        %s786 = smul.u32 2, %s21
        %p787 = scmp.lt.s32.totalorder %s786, 3
        %s788 = scalar_select %p787, %s786, 3
        %s789 = smul.addr %s788, 8
        %s790 = scalar_lea.vmem %s9, %s789
        // Predicated region
        $region61: #{vq_indexer_forward.5} parent=55 // pred_check
          %p791 = pneg %p233
        $region62: #{vq_indexer_forward.5} parent=55 // pred_check_branch
          %793 = sbr.rel (%p791) target = $region64
        $region63: #{vq_indexer_forward.5} parent=55 // pred_region
          %s794 = smul.u32 2, %s21
        $region64: #{vq_indexer_forward.5} parent=55 // pred_fallthru
          _
      $region56: #{vq_indexer_forward.5} parent=5 // pred_fallthru
        _
      %p795 = scmp.le.s32.totalorder 2, %s16
      // Predicated region
      $region65: #{vq_indexer_forward.5} parent=5 // pred_check
        %p796 = pneg %p795
      $region66: #{vq_indexer_forward.5} parent=5 // pred_check_branch
        %798 = sbr.rel (%p796) target = $region68
      $region67: #{vq_indexer_forward.5} parent=5 // pred_region
        %s799 = ssub.s32 %s16, 2
        // Predicated region
        $region69: #{vq_indexer_forward.5} parent=67 // pred_check
          %p800 = pneg %p239
        $region70: #{vq_indexer_forward.5} parent=67 // pred_check_branch
          %802 = sbr.rel (%p800) target = $region72
        $region71: #{vq_indexer_forward.5} parent=67 // pred_region
          %s803 = smul.u32 2, %s22
          %p804 = scmp.lt.s32.totalorder %s803, 3
          %s805 = scalar_select %p804, %s803, 3
          %s806 = smul.addr %s805, 8
          %s807 = scalar_lea.vmem %s9, %s806
        $region72: #{vq_indexer_forward.5} parent=67 // pred_fallthru
          _
      $region68: #{vq_indexer_forward.5} parent=5 // pred_fallthru
        _
    $region6: #{vq_indexer_forward.5} parent=1 // loop_footer
      %s20 = sadd.s32 1, %s16
    $region7: #{vq_indexer_forward.5} parent=1 // loop_footer_branch
      %15 = sbr.rel target = $region3
    $region8: #{vq_indexer_forward.5} parent=1 // loop_exit
      _
    %808 = vsyncpa [#allocation3], 1
    %s809 = scalar_lea.sflag [#allocation3], 1
    %810 = vsyncpa %s809, 1

// kernel: vq_indexer_forward.4
$region0: #{vq_indexer_forward.4}
  #allocation0 [shape = 'u32[]', space=smem, size = 0x4, offset = 0x4, fixed_abs, tag = 'smem constant byte address 0x4 - core index']
  #allocation1 [shape = 'u32[72,128]{1,0:T(1,128)}', space=vmem, size = 0x9000, scoped, tag = 'internal scratch']
  #allocation2 [shape = 'f32[16,32]{1,0:T(8,128)}', space=vmem, size = 0x2000, scoped, tag = 'scratch operand']
  #allocation3 [shape = 'f32[48,64]{1,0:T(8,128)}', space=vmem, size = 0x6000, scoped, tag = 'scratch operand']
  %s0 = inlined_call_operand.smem [shape: u32[34], index: -1, kind: input, shape index: {}]
  %s1 = sld [smem:[%s0]]
  %s2 = scalar_lea.smem %s0, 1
  %s3 = sld [smem:[%s2]]
  %s4 = scalar_lea.smem %s0, 2
  %s5 = sld [smem:[%s4]]
  %s6 = scalar_lea.smem %s0, 3
  %s7 = sld [smem:[%s6]]
  %s8 = scalar_lea.smem %s0, 4
  %s9 = sld [smem:[%s8]]
  %s10 = scalar_lea.smem %s0, 5
  %s11 = sld [smem:[%s10]]
  %s12 = scalar_lea.smem %s0, 6
  %s13 = sld [smem:[%s12]]
  %s14 = scalar_lea.smem %s0, 7
  %s15 = sld [smem:[%s14]]
  %s16 = scalar_lea.smem %s0, 8
  %s17 = sld [smem:[%s16]]
  %s18 = scalar_lea.smem %s0, 9
  %s19 = sld [smem:[%s18]]
  %s20 = scalar_lea.smem %s0, 10
  %s21 = sld [smem:[%s20]]
  %s22 = scalar_lea.smem %s0, 11
  %s23 = sld [smem:[%s22]]
  %s24 = scalar_lea.smem %s0, 12
  %s25 = sld [smem:[%s24]]
  %s26 = scalar_lea.smem %s0, 13
  %s27 = sld [smem:[%s26]]
  %s28 = scalar_lea.smem %s0, 14
  %s29 = sld [smem:[%s28]]
  %s30 = scalar_lea.smem %s0, 15
  %s31 = sld [smem:[%s30]]
  %s32 = scalar_lea.smem %s0, 16
  %s33 = sld [smem:[%s32]]
  %s34 = scalar_lea.smem %s0, 17
  %s35 = sld [smem:[%s34]]
  %s36 = scalar_lea.smem %s0, 18
  %s37 = sld [smem:[%s36]]
  %s38 = scalar_lea.smem %s0, 19
  %s39 = sld [smem:[%s38]]
  %s40 = scalar_lea.smem %s0, 20
  %s41 = sld [smem:[%s40]]
  %s42 = scalar_lea.smem %s0, 21
  %s43 = sld [smem:[%s42]]
  %s44 = scalar_lea.smem %s0, 22
  %s45 = sld [smem:[%s44]]
  %s46 = scalar_lea.smem %s0, 23
  %s47 = sld [smem:[%s46]]
  %s48 = scalar_lea.smem %s0, 24
  %s49 = sld [smem:[%s48]]
  %s50 = scalar_lea.smem %s0, 25
  %s51 = sld [smem:[%s50]]
  %s52 = scalar_lea.smem %s0, 26
  %s53 = sld [smem:[%s52]]
  %s54 = scalar_lea.smem %s0, 27
  %s55 = sld [smem:[%s54]]
  %s56 = scalar_lea.smem %s0, 28
  %s57 = sld [smem:[%s56]]
  %s58 = scalar_lea.smem %s0, 29
  %s59 = sld [smem:[%s58]]
  %s60 = scalar_lea.smem %s0, 30
  %s61 = sld [smem:[%s60]]
  %s62 = scalar_lea.smem %s0, 31
  %s63 = sld [smem:[%s62]]
  %s64 = scalar_lea.smem %s0, 32
  %s65 = sld [smem:[%s64]]
  %s66 = scalar_lea.smem %s0, 33
  %s67 = sld [smem:[%s66]]
  %s68 = sld [smem:[#allocation0]]
  $region169: #{vq_indexer_forward.4} parent=0
    _
  %s70 = ssub.s32 1, %s68
  %s71 = scalar_select 0, %s70, %s68
  loop: start=0, step=1, limit=18
  $region2: #{vq_indexer_forward.4} parent=0 // loop_pre_header
    _
  $region3: #{vq_indexer_forward.4} parent=0 // loop_header
    %s73 = sphi 0, %s77
    %p74 = scmp.ge.s32.totalorder %s73, 18
    %s80 = sphi 0, %s92
    %s81 = sphi 0, %s88
    %s82 = sphi 0, %s80
    %s83 = sphi 0, %s81
    %s84 = sphi 0, %s82
    %s85 = sphi 0, %s83
    %s95 = sphi 0, %s97
    %s98 = sphi 0, %s95
    %s99 = sphi 0, %s98
    %s115 = sphi 0, %s99
    %s121 = sphi 0, %s123
    %s124 = sphi 0, %s121
    %s125 = sphi 0, %s124
    %s141 = sphi 0, %s125
    %s147 = sphi 0, %s149
    %s150 = sphi 0, %s147
    %s151 = sphi 0, %s150
    %s167 = sphi 0, %s151
    %s173 = sphi 0, %s175
    %s176 = sphi 0, %s173
    %s177 = sphi 0, %s176
    %s193 = sphi 0, %s177
    %s199 = sphi 0, %s201
    %s202 = sphi 0, %s199
    %s203 = sphi 0, %s202
    %s219 = sphi 0, %s203
    %s225 = sphi 0, %s227
    %s228 = sphi 0, %s225
    %s229 = sphi 0, %s228
    %s245 = sphi 0, %s229
    %s251 = sphi 0, %s253
    %s254 = sphi 0, %s251
    %s255 = sphi 0, %s254
    %s271 = sphi 0, %s255
    %s277 = sphi 0, %s279
    %s280 = sphi 0, %s277
    %s281 = sphi 0, %s280
    %s297 = sphi 0, %s281
    %s303 = sphi 0, %s305
    %s306 = sphi 0, %s303
    %s307 = sphi 0, %s306
    %s323 = sphi 0, %s307
    %s329 = sphi 0, %s331
    %s332 = sphi 0, %s329
    %s333 = sphi 0, %s332
    %s349 = sphi 0, %s333
    %s355 = sphi 0, %s357
    %s358 = sphi 0, %s355
    %s359 = sphi 0, %s358
    %s375 = sphi 0, %s359
    %s381 = sphi 0, %s383
    %s384 = sphi 0, %s381
    %s385 = sphi 0, %s384
    %s401 = sphi 0, %s385
    %s407 = sphi 0, %s409
    %s410 = sphi 0, %s407
    %s411 = sphi 0, %s410
    %s427 = sphi 0, %s411
    %s433 = sphi 0, %s435
    %s436 = sphi 0, %s433
    %s437 = sphi 0, %s436
    %s453 = sphi 0, %s437
    %s459 = sphi 0, %s461
    %s462 = sphi 0, %s459
    %s463 = sphi 0, %s462
    %s479 = sphi 0, %s463
    %s485 = sphi 0, %s487
    %s488 = sphi 0, %s485
    %s489 = sphi 0, %s488
    %s505 = sphi 0, %s489
    %s511 = sphi 0, %s513
    %s514 = sphi 0, %s511
    %s515 = sphi 0, %s514
    %s531 = sphi 0, %s515
    %s537 = sphi 0, %s539
    %s540 = sphi 0, %s537
    %s541 = sphi 0, %s540
    %s557 = sphi 0, %s541
    %s563 = sphi 0, %s565
    %s566 = sphi 0, %s563
    %s567 = sphi 0, %s566
    %s583 = sphi 0, %s567
    %s589 = sphi 0, %s591
    %s592 = sphi 0, %s589
    %s593 = sphi 0, %s592
    %s609 = sphi 0, %s593
    %s615 = sphi 0, %s617
    %s618 = sphi 0, %s615
    %s619 = sphi 0, %s618
    %s635 = sphi 0, %s619
    %s641 = sphi 0, %s643
    %s644 = sphi 0, %s641
    %s645 = sphi 0, %s644
    %s661 = sphi 0, %s645
    %s667 = sphi 0, %s669
    %s670 = sphi 0, %s667
    %s671 = sphi 0, %s670
    %s687 = sphi 0, %s671
    %s693 = sphi 0, %s695
    %s696 = sphi 0, %s693
    %s697 = sphi 0, %s696
    %s713 = sphi 0, %s697
    %s719 = sphi 0, %s721
    %s722 = sphi 0, %s719
    %s723 = sphi 0, %s722
    %s739 = sphi 0, %s723
    %s745 = sphi 0, %s747
    %s748 = sphi 0, %s745
    %s749 = sphi 0, %s748
    %s765 = sphi 0, %s749
    %s771 = sphi 0, %s773
    %s774 = sphi 0, %s771
    %s775 = sphi 0, %s774
    %s791 = sphi 0, %s775
    %s797 = sphi 0, %s799
    %s800 = sphi 0, %s797
    %s801 = sphi 0, %s800
    %s817 = sphi 0, %s801
    %s823 = sphi 0, %s825
    %s826 = sphi 0, %s823
    %s827 = sphi 0, %s826
    %s843 = sphi 0, %s827
    %s849 = sphi 0, %s851
    %s852 = sphi 0, %s849
    %s853 = sphi 0, %s852
    %s869 = sphi 0, %s853
    %s875 = sphi 0, %s877
    %s878 = sphi 0, %s875
    %s879 = sphi 0, %s878
    %s895 = sphi 0, %s879
    %s901 = sphi 0, %s903
    %s904 = sphi 0, %s901
    %s905 = sphi 0, %s904
    %s921 = sphi 0, %s905
    %s927 = sphi 0, %s929
    %s930 = sphi 0, %s927
    %s931 = sphi 0, %s930
    %s947 = sphi 0, %s931
    %s953 = sphi 0, %s955
    %s956 = sphi 0, %s953
    %s957 = sphi 0, %s956
    %s973 = sphi 0, %s957
  $region4: #{vq_indexer_forward.4} parent=0 // loop_header_branch
    %76 = sbr.rel (%p74) target = $region8
  $region5: #{vq_indexer_forward.4} parent=0 // loop_body
    %s78 = ssub.s32 %s73, 1
    %s79 = ssub.s32 %s73, 2
    %s86 = sadd.s32 1, %s81
    %p87 = scmp.ge.s32.totalorder %s86, 8
    %s88 = scalar_select %p87, 0, %s86
    %s89 = sadd.s32 1, %s80
    %s90 = scalar_select %p87, %s89, %s80
    %p91 = scmp.ge.s32.totalorder %s90, 2
    %s92 = scalar_select %p91, 0, %s90
    %s93 = ssub.s32 %s80, %s92
    %p94 = scmp.eq.s32.totalorder %s93, 0
    %s96 = sadd.s32 %s95, 1
    %s97 = scalar_select %p94, %s95, %s96
    %p100 = pneg %p94
    %p101 = scmp.eq.s32.totalorder %s73, 15
    %p102 = por %p100, %p101
    %p103 = scmp.ne.s32.totalorder %s95, %s98
    %p104 = scmp.eq.s32.totalorder %s73, 0
    %p105 = por %p103, %p104
    %p106 = scmp.ne.s32.totalorder %s95, %s98
    %p107 = scmp.eq.s32.totalorder %s78, 15
    %p108 = por %p106, %p107
    %p109 = scmp.ne.s32.totalorder %s98, %s99
    %p110 = scmp.eq.s32.totalorder %s78, 0
    %p111 = por %p109, %p110
    %p112 = scmp.ne.s32.totalorder %s98, %s99
    %p113 = scmp.eq.s32.totalorder %s79, 15
    %p114 = por %p112, %p113
    %p116 = scmp.ne.s32.totalorder %s99, %s115
    %p117 = scmp.eq.s32.totalorder %s79, 0
    %p118 = por %p116, %p117
    %s119 = ssub.s32 %s80, %s92
    %p120 = scmp.eq.s32.totalorder %s119, 0
    %s122 = sadd.s32 %s121, 1
    %s123 = scalar_select %p120, %s121, %s122
    %p126 = pneg %p120
    %p127 = scmp.eq.s32.totalorder %s73, 15
    %p128 = por %p126, %p127
    %p129 = scmp.ne.s32.totalorder %s121, %s124
    %p130 = scmp.eq.s32.totalorder %s73, 0
    %p131 = por %p129, %p130
    %p132 = scmp.ne.s32.totalorder %s121, %s124
    %p133 = scmp.eq.s32.totalorder %s78, 15
    %p134 = por %p132, %p133
    %p135 = scmp.ne.s32.totalorder %s124, %s125
    %p136 = scmp.eq.s32.totalorder %s78, 0
    %p137 = por %p135, %p136
    %p138 = scmp.ne.s32.totalorder %s124, %s125
    %p139 = scmp.eq.s32.totalorder %s79, 15
    %p140 = por %p138, %p139
    %p142 = scmp.ne.s32.totalorder %s125, %s141
    %p143 = scmp.eq.s32.totalorder %s79, 0
    %p144 = por %p142, %p143
    %s145 = ssub.s32 %s80, %s92
    %p146 = scmp.eq.s32.totalorder %s145, 0
    %s148 = sadd.s32 %s147, 1
    %s149 = scalar_select %p146, %s147, %s148
    %p152 = pneg %p146
    %p153 = scmp.eq.s32.totalorder %s73, 15
    %p154 = por %p152, %p153
    %p155 = scmp.ne.s32.totalorder %s147, %s150
    %p156 = scmp.eq.s32.totalorder %s73, 0
    %p157 = por %p155, %p156
    %p158 = scmp.ne.s32.totalorder %s147, %s150
    %p159 = scmp.eq.s32.totalorder %s78, 15
    %p160 = por %p158, %p159
    %p161 = scmp.ne.s32.totalorder %s150, %s151
    %p162 = scmp.eq.s32.totalorder %s78, 0
    %p163 = por %p161, %p162
    %p164 = scmp.ne.s32.totalorder %s150, %s151
    %p165 = scmp.eq.s32.totalorder %s79, 15
    %p166 = por %p164, %p165
    %p168 = scmp.ne.s32.totalorder %s151, %s167
    %p169 = scmp.eq.s32.totalorder %s79, 0
    %p170 = por %p168, %p169
    %s171 = ssub.s32 %s81, %s88
    %p172 = scmp.eq.s32.totalorder %s171, 0
    %s174 = sadd.s32 %s173, 1
    %s175 = scalar_select %p172, %s173, %s174
    %p178 = pneg %p172
    %p179 = scmp.eq.s32.totalorder %s73, 15
    %p180 = por %p178, %p179
    %p181 = scmp.ne.s32.totalorder %s173, %s176
    %p182 = scmp.eq.s32.totalorder %s73, 0
    %p183 = por %p181, %p182
    %p184 = scmp.ne.s32.totalorder %s173, %s176
    %p185 = scmp.eq.s32.totalorder %s78, 15
    %p186 = por %p184, %p185
    %p187 = scmp.ne.s32.totalorder %s176, %s177
    %p188 = scmp.eq.s32.totalorder %s78, 0
    %p189 = por %p187, %p188
    %p190 = scmp.ne.s32.totalorder %s176, %s177
    %p191 = scmp.eq.s32.totalorder %s79, 15
    %p192 = por %p190, %p191
    %p194 = scmp.ne.s32.totalorder %s177, %s193
    %p195 = scmp.eq.s32.totalorder %s79, 0
    %p196 = por %p194, %p195
    %s197 = ssub.s32 %s81, %s88
    %p198 = scmp.eq.s32.totalorder %s197, 0
    %s200 = sadd.s32 %s199, 1
    %s201 = scalar_select %p198, %s199, %s200
    %p204 = pneg %p198
    %p205 = scmp.eq.s32.totalorder %s73, 15
    %p206 = por %p204, %p205
    %p207 = scmp.ne.s32.totalorder %s199, %s202
    %p208 = scmp.eq.s32.totalorder %s73, 0
    %p209 = por %p207, %p208
    %p210 = scmp.ne.s32.totalorder %s199, %s202
    %p211 = scmp.eq.s32.totalorder %s78, 15
    %p212 = por %p210, %p211
    %p213 = scmp.ne.s32.totalorder %s202, %s203
    %p214 = scmp.eq.s32.totalorder %s78, 0
    %p215 = por %p213, %p214
    %p216 = scmp.ne.s32.totalorder %s202, %s203
    %p217 = scmp.eq.s32.totalorder %s79, 15
    %p218 = por %p216, %p217
    %p220 = scmp.ne.s32.totalorder %s203, %s219
    %p221 = scmp.eq.s32.totalorder %s79, 0
    %p222 = por %p220, %p221
    %s223 = ssub.s32 %s81, %s88
    %p224 = scmp.eq.s32.totalorder %s223, 0
    %s226 = sadd.s32 %s225, 1
    %s227 = scalar_select %p224, %s225, %s226
    %p230 = pneg %p224
    %p231 = scmp.eq.s32.totalorder %s73, 15
    %p232 = por %p230, %p231
    %p233 = scmp.ne.s32.totalorder %s225, %s228
    %p234 = scmp.eq.s32.totalorder %s73, 0
    %p235 = por %p233, %p234
    %p236 = scmp.ne.s32.totalorder %s225, %s228
    %p237 = scmp.eq.s32.totalorder %s78, 15
    %p238 = por %p236, %p237
    %p239 = scmp.ne.s32.totalorder %s228, %s229
    %p240 = scmp.eq.s32.totalorder %s78, 0
    %p241 = por %p239, %p240
    %p242 = scmp.ne.s32.totalorder %s228, %s229
    %p243 = scmp.eq.s32.totalorder %s79, 15
    %p244 = por %p242, %p243
    %p246 = scmp.ne.s32.totalorder %s229, %s245
    %p247 = scmp.eq.s32.totalorder %s79, 0
    %p248 = por %p246, %p247
    %s249 = ssub.s32 %s81, %s88
    %p250 = scmp.eq.s32.totalorder %s249, 0
    %s252 = sadd.s32 %s251, 1
    %s253 = scalar_select %p250, %s251, %s252
    %p256 = pneg %p250
    %p257 = scmp.eq.s32.totalorder %s73, 15
    %p258 = por %p256, %p257
    %p259 = scmp.ne.s32.totalorder %s251, %s254
    %p260 = scmp.eq.s32.totalorder %s73, 0
    %p261 = por %p259, %p260
    %p262 = scmp.ne.s32.totalorder %s251, %s254
    %p263 = scmp.eq.s32.totalorder %s78, 15
    %p264 = por %p262, %p263
    %p265 = scmp.ne.s32.totalorder %s254, %s255
    %p266 = scmp.eq.s32.totalorder %s78, 0
    %p267 = por %p265, %p266
    %p268 = scmp.ne.s32.totalorder %s254, %s255
    %p269 = scmp.eq.s32.totalorder %s79, 15
    %p270 = por %p268, %p269
    %p272 = scmp.ne.s32.totalorder %s255, %s271
    %p273 = scmp.eq.s32.totalorder %s79, 0
    %p274 = por %p272, %p273
    %s275 = ssub.s32 %s81, %s88
    %p276 = scmp.eq.s32.totalorder %s275, 0
    %s278 = sadd.s32 %s277, 1
    %s279 = scalar_select %p276, %s277, %s278
    %p282 = pneg %p276
    %p283 = scmp.eq.s32.totalorder %s73, 15
    %p284 = por %p282, %p283
    %p285 = scmp.ne.s32.totalorder %s277, %s280
    %p286 = scmp.eq.s32.totalorder %s73, 0
    %p287 = por %p285, %p286
    %p288 = scmp.ne.s32.totalorder %s277, %s280
    %p289 = scmp.eq.s32.totalorder %s78, 15
    %p290 = por %p288, %p289
    %p291 = scmp.ne.s32.totalorder %s280, %s281
    %p292 = scmp.eq.s32.totalorder %s78, 0
    %p293 = por %p291, %p292
    %p294 = scmp.ne.s32.totalorder %s280, %s281
    %p295 = scmp.eq.s32.totalorder %s79, 15
    %p296 = por %p294, %p295
    %p298 = scmp.ne.s32.totalorder %s281, %s297
    %p299 = scmp.eq.s32.totalorder %s79, 0
    %p300 = por %p298, %p299
    %s301 = ssub.s32 %s81, %s88
    %p302 = scmp.eq.s32.totalorder %s301, 0
    %s304 = sadd.s32 %s303, 1
    %s305 = scalar_select %p302, %s303, %s304
    %p308 = pneg %p302
    %p309 = scmp.eq.s32.totalorder %s73, 15
    %p310 = por %p308, %p309
    %p311 = scmp.ne.s32.totalorder %s303, %s306
    %p312 = scmp.eq.s32.totalorder %s73, 0
    %p313 = por %p311, %p312
    %p314 = scmp.ne.s32.totalorder %s303, %s306
    %p315 = scmp.eq.s32.totalorder %s78, 15
    %p316 = por %p314, %p315
    %p317 = scmp.ne.s32.totalorder %s306, %s307
    %p318 = scmp.eq.s32.totalorder %s78, 0
    %p319 = por %p317, %p318
    %p320 = scmp.ne.s32.totalorder %s306, %s307
    %p321 = scmp.eq.s32.totalorder %s79, 15
    %p322 = por %p320, %p321
    %p324 = scmp.ne.s32.totalorder %s307, %s323
    %p325 = scmp.eq.s32.totalorder %s79, 0
    %p326 = por %p324, %p325
    %s327 = ssub.s32 %s81, %s88
    %p328 = scmp.eq.s32.totalorder %s327, 0
    %s330 = sadd.s32 %s329, 1
    %s331 = scalar_select %p328, %s329, %s330
    %p334 = pneg %p328
    %p335 = scmp.eq.s32.totalorder %s73, 15
    %p336 = por %p334, %p335
    %p337 = scmp.ne.s32.totalorder %s329, %s332
    %p338 = scmp.eq.s32.totalorder %s73, 0
    %p339 = por %p337, %p338
    %p340 = scmp.ne.s32.totalorder %s329, %s332
    %p341 = scmp.eq.s32.totalorder %s78, 15
    %p342 = por %p340, %p341
    %p343 = scmp.ne.s32.totalorder %s332, %s333
    %p344 = scmp.eq.s32.totalorder %s78, 0
    %p345 = por %p343, %p344
    %p346 = scmp.ne.s32.totalorder %s332, %s333
    %p347 = scmp.eq.s32.totalorder %s79, 15
    %p348 = por %p346, %p347
    %p350 = scmp.ne.s32.totalorder %s333, %s349
    %p351 = scmp.eq.s32.totalorder %s79, 0
    %p352 = por %p350, %p351
    %s353 = ssub.s32 %s81, %s88
    %p354 = scmp.eq.s32.totalorder %s353, 0
    %s356 = sadd.s32 %s355, 1
    %s357 = scalar_select %p354, %s355, %s356
    %p360 = pneg %p354
    %p361 = scmp.eq.s32.totalorder %s73, 15
    %p362 = por %p360, %p361
    %p363 = scmp.ne.s32.totalorder %s355, %s358
    %p364 = scmp.eq.s32.totalorder %s73, 0
    %p365 = por %p363, %p364
    %p366 = scmp.ne.s32.totalorder %s355, %s358
    %p367 = scmp.eq.s32.totalorder %s78, 15
    %p368 = por %p366, %p367
    %p369 = scmp.ne.s32.totalorder %s358, %s359
    %p370 = scmp.eq.s32.totalorder %s78, 0
    %p371 = por %p369, %p370
    %p372 = scmp.ne.s32.totalorder %s358, %s359
    %p373 = scmp.eq.s32.totalorder %s79, 15
    %p374 = por %p372, %p373
    %p376 = scmp.ne.s32.totalorder %s359, %s375
    %p377 = scmp.eq.s32.totalorder %s79, 0
    %p378 = por %p376, %p377
    %s379 = ssub.s32 %s81, %s88
    %p380 = scmp.eq.s32.totalorder %s379, 0
    %s382 = sadd.s32 %s381, 1
    %s383 = scalar_select %p380, %s381, %s382
    %p386 = pneg %p380
    %p387 = scmp.eq.s32.totalorder %s73, 15
    %p388 = por %p386, %p387
    %p389 = scmp.ne.s32.totalorder %s381, %s384
    %p390 = scmp.eq.s32.totalorder %s73, 0
    %p391 = por %p389, %p390
    %p392 = scmp.ne.s32.totalorder %s381, %s384
    %p393 = scmp.eq.s32.totalorder %s78, 15
    %p394 = por %p392, %p393
    %p395 = scmp.ne.s32.totalorder %s384, %s385
    %p396 = scmp.eq.s32.totalorder %s78, 0
    %p397 = por %p395, %p396
    %p398 = scmp.ne.s32.totalorder %s384, %s385
    %p399 = scmp.eq.s32.totalorder %s79, 15
    %p400 = por %p398, %p399
    %p402 = scmp.ne.s32.totalorder %s385, %s401
    %p403 = scmp.eq.s32.totalorder %s79, 0
    %p404 = por %p402, %p403
    %s405 = ssub.s32 %s81, %s88
    %p406 = scmp.eq.s32.totalorder %s405, 0
    %s408 = sadd.s32 %s407, 1
    %s409 = scalar_select %p406, %s407, %s408
    %p412 = pneg %p406
    %p413 = scmp.eq.s32.totalorder %s73, 15
    %p414 = por %p412, %p413
    %p415 = scmp.ne.s32.totalorder %s407, %s410
    %p416 = scmp.eq.s32.totalorder %s73, 0
    %p417 = por %p415, %p416
    %p418 = scmp.ne.s32.totalorder %s407, %s410
    %p419 = scmp.eq.s32.totalorder %s78, 15
    %p420 = por %p418, %p419
    %p421 = scmp.ne.s32.totalorder %s410, %s411
    %p422 = scmp.eq.s32.totalorder %s78, 0
    %p423 = por %p421, %p422
    %p424 = scmp.ne.s32.totalorder %s410, %s411
    %p425 = scmp.eq.s32.totalorder %s79, 15
    %p426 = por %p424, %p425
    %p428 = scmp.ne.s32.totalorder %s411, %s427
    %p429 = scmp.eq.s32.totalorder %s79, 0
    %p430 = por %p428, %p429
    %s431 = ssub.s32 %s81, %s88
    %p432 = scmp.eq.s32.totalorder %s431, 0
    %s434 = sadd.s32 %s433, 1
    %s435 = scalar_select %p432, %s433, %s434
    %p438 = pneg %p432
    %p439 = scmp.eq.s32.totalorder %s73, 15
    %p440 = por %p438, %p439
    %p441 = scmp.ne.s32.totalorder %s433, %s436
    %p442 = scmp.eq.s32.totalorder %s73, 0
    %p443 = por %p441, %p442
    %p444 = scmp.ne.s32.totalorder %s433, %s436
    %p445 = scmp.eq.s32.totalorder %s78, 15
    %p446 = por %p444, %p445
    %p447 = scmp.ne.s32.totalorder %s436, %s437
    %p448 = scmp.eq.s32.totalorder %s78, 0
    %p449 = por %p447, %p448
    %p450 = scmp.ne.s32.totalorder %s436, %s437
    %p451 = scmp.eq.s32.totalorder %s79, 15
    %p452 = por %p450, %p451
    %p454 = scmp.ne.s32.totalorder %s437, %s453
    %p455 = scmp.eq.s32.totalorder %s79, 0
    %p456 = por %p454, %p455
    %s457 = ssub.s32 %s81, %s88
    %p458 = scmp.eq.s32.totalorder %s457, 0
    %s460 = sadd.s32 %s459, 1
    %s461 = scalar_select %p458, %s459, %s460
    %p464 = pneg %p458
    %p465 = scmp.eq.s32.totalorder %s73, 15
    %p466 = por %p464, %p465
    %p467 = scmp.ne.s32.totalorder %s459, %s462
    %p468 = scmp.eq.s32.totalorder %s73, 0
    %p469 = por %p467, %p468
    %p470 = scmp.ne.s32.totalorder %s459, %s462
    %p471 = scmp.eq.s32.totalorder %s78, 15
    %p472 = por %p470, %p471
    %p473 = scmp.ne.s32.totalorder %s462, %s463
    %p474 = scmp.eq.s32.totalorder %s78, 0
    %p475 = por %p473, %p474
    %p476 = scmp.ne.s32.totalorder %s462, %s463
    %p477 = scmp.eq.s32.totalorder %s79, 15
    %p478 = por %p476, %p477
    %p480 = scmp.ne.s32.totalorder %s463, %s479
    %p481 = scmp.eq.s32.totalorder %s79, 0
    %p482 = por %p480, %p481
    %s483 = ssub.s32 %s81, %s88
    %p484 = scmp.eq.s32.totalorder %s483, 0
    %s486 = sadd.s32 %s485, 1
    %s487 = scalar_select %p484, %s485, %s486
    %p490 = pneg %p484
    %p491 = scmp.eq.s32.totalorder %s73, 15
    %p492 = por %p490, %p491
    %p493 = scmp.ne.s32.totalorder %s485, %s488
    %p494 = scmp.eq.s32.totalorder %s73, 0
    %p495 = por %p493, %p494
    %p496 = scmp.ne.s32.totalorder %s485, %s488
    %p497 = scmp.eq.s32.totalorder %s78, 15
    %p498 = por %p496, %p497
    %p499 = scmp.ne.s32.totalorder %s488, %s489
    %p500 = scmp.eq.s32.totalorder %s78, 0
    %p501 = por %p499, %p500
    %p502 = scmp.ne.s32.totalorder %s488, %s489
    %p503 = scmp.eq.s32.totalorder %s79, 15
    %p504 = por %p502, %p503
    %p506 = scmp.ne.s32.totalorder %s489, %s505
    %p507 = scmp.eq.s32.totalorder %s79, 0
    %p508 = por %p506, %p507
    %s509 = ssub.s32 %s81, %s88
    %p510 = scmp.eq.s32.totalorder %s509, 0
    %s512 = sadd.s32 %s511, 1
    %s513 = scalar_select %p510, %s511, %s512
    %p516 = pneg %p510
    %p517 = scmp.eq.s32.totalorder %s73, 15
    %p518 = por %p516, %p517
    %p519 = scmp.ne.s32.totalorder %s511, %s514
    %p520 = scmp.eq.s32.totalorder %s73, 0
    %p521 = por %p519, %p520
    %p522 = scmp.ne.s32.totalorder %s511, %s514
    %p523 = scmp.eq.s32.totalorder %s78, 15
    %p524 = por %p522, %p523
    %p525 = scmp.ne.s32.totalorder %s514, %s515
    %p526 = scmp.eq.s32.totalorder %s78, 0
    %p527 = por %p525, %p526
    %p528 = scmp.ne.s32.totalorder %s514, %s515
    %p529 = scmp.eq.s32.totalorder %s79, 15
    %p530 = por %p528, %p529
    %p532 = scmp.ne.s32.totalorder %s515, %s531
    %p533 = scmp.eq.s32.totalorder %s79, 0
    %p534 = por %p532, %p533
    %s535 = ssub.s32 %s81, %s88
    %p536 = scmp.eq.s32.totalorder %s535, 0
    %s538 = sadd.s32 %s537, 1
    %s539 = scalar_select %p536, %s537, %s538
    %p542 = pneg %p536
    %p543 = scmp.eq.s32.totalorder %s73, 15
    %p544 = por %p542, %p543
    %p545 = scmp.ne.s32.totalorder %s537, %s540
    %p546 = scmp.eq.s32.totalorder %s73, 0
    %p547 = por %p545, %p546
    %p548 = scmp.ne.s32.totalorder %s537, %s540
    %p549 = scmp.eq.s32.totalorder %s78, 15
    %p550 = por %p548, %p549
    %p551 = scmp.ne.s32.totalorder %s540, %s541
    %p552 = scmp.eq.s32.totalorder %s78, 0
    %p553 = por %p551, %p552
    %p554 = scmp.ne.s32.totalorder %s540, %s541
    %p555 = scmp.eq.s32.totalorder %s79, 15
    %p556 = por %p554, %p555
    %p558 = scmp.ne.s32.totalorder %s541, %s557
    %p559 = scmp.eq.s32.totalorder %s79, 0
    %p560 = por %p558, %p559
    %s561 = ssub.s32 %s81, %s88
    %p562 = scmp.eq.s32.totalorder %s561, 0
    %s564 = sadd.s32 %s563, 1
    %s565 = scalar_select %p562, %s563, %s564
    %p568 = pneg %p562
    %p569 = scmp.eq.s32.totalorder %s73, 15
    %p570 = por %p568, %p569
    %p571 = scmp.ne.s32.totalorder %s563, %s566
    %p572 = scmp.eq.s32.totalorder %s73, 0
    %p573 = por %p571, %p572
    %p574 = scmp.ne.s32.totalorder %s563, %s566
    %p575 = scmp.eq.s32.totalorder %s78, 15
    %p576 = por %p574, %p575
    %p577 = scmp.ne.s32.totalorder %s566, %s567
    %p578 = scmp.eq.s32.totalorder %s78, 0
    %p579 = por %p577, %p578
    %p580 = scmp.ne.s32.totalorder %s566, %s567
    %p581 = scmp.eq.s32.totalorder %s79, 15
    %p582 = por %p580, %p581
    %p584 = scmp.ne.s32.totalorder %s567, %s583
    %p585 = scmp.eq.s32.totalorder %s79, 0
    %p586 = por %p584, %p585
    %s587 = ssub.s32 %s81, %s88
    %p588 = scmp.eq.s32.totalorder %s587, 0
    %s590 = sadd.s32 %s589, 1
    %s591 = scalar_select %p588, %s589, %s590
    %p594 = pneg %p588
    %p595 = scmp.eq.s32.totalorder %s73, 15
    %p596 = por %p594, %p595
    %p597 = scmp.ne.s32.totalorder %s589, %s592
    %p598 = scmp.eq.s32.totalorder %s73, 0
    %p599 = por %p597, %p598
    %p600 = scmp.ne.s32.totalorder %s589, %s592
    %p601 = scmp.eq.s32.totalorder %s78, 15
    %p602 = por %p600, %p601
    %p603 = scmp.ne.s32.totalorder %s592, %s593
    %p604 = scmp.eq.s32.totalorder %s78, 0
    %p605 = por %p603, %p604
    %p606 = scmp.ne.s32.totalorder %s592, %s593
    %p607 = scmp.eq.s32.totalorder %s79, 15
    %p608 = por %p606, %p607
    %p610 = scmp.ne.s32.totalorder %s593, %s609
    %p611 = scmp.eq.s32.totalorder %s79, 0
    %p612 = por %p610, %p611
    %s613 = ssub.s32 %s81, %s88
    %p614 = scmp.eq.s32.totalorder %s613, 0
    %s616 = sadd.s32 %s615, 1
    %s617 = scalar_select %p614, %s615, %s616
    %p620 = pneg %p614
    %p621 = scmp.eq.s32.totalorder %s73, 15
    %p622 = por %p620, %p621
    %p623 = scmp.ne.s32.totalorder %s615, %s618
    %p624 = scmp.eq.s32.totalorder %s73, 0
    %p625 = por %p623, %p624
    %p626 = scmp.ne.s32.totalorder %s615, %s618
    %p627 = scmp.eq.s32.totalorder %s78, 15
    %p628 = por %p626, %p627
    %p629 = scmp.ne.s32.totalorder %s618, %s619
    %p630 = scmp.eq.s32.totalorder %s78, 0
    %p631 = por %p629, %p630
    %p632 = scmp.ne.s32.totalorder %s618, %s619
    %p633 = scmp.eq.s32.totalorder %s79, 15
    %p634 = por %p632, %p633
    %p636 = scmp.ne.s32.totalorder %s619, %s635
    %p637 = scmp.eq.s32.totalorder %s79, 0
    %p638 = por %p636, %p637
    %s639 = ssub.s32 %s81, %s88
    %p640 = scmp.eq.s32.totalorder %s639, 0
    %s642 = sadd.s32 %s641, 1
    %s643 = scalar_select %p640, %s641, %s642
    %p646 = pneg %p640
    %p647 = scmp.eq.s32.totalorder %s73, 15
    %p648 = por %p646, %p647
    %p649 = scmp.ne.s32.totalorder %s641, %s644
    %p650 = scmp.eq.s32.totalorder %s73, 0
    %p651 = por %p649, %p650
    %p652 = scmp.ne.s32.totalorder %s641, %s644
    %p653 = scmp.eq.s32.totalorder %s78, 15
    %p654 = por %p652, %p653
    %p655 = scmp.ne.s32.totalorder %s644, %s645
    %p656 = scmp.eq.s32.totalorder %s78, 0
    %p657 = por %p655, %p656
    %p658 = scmp.ne.s32.totalorder %s644, %s645
    %p659 = scmp.eq.s32.totalorder %s79, 15
    %p660 = por %p658, %p659
    %p662 = scmp.ne.s32.totalorder %s645, %s661
    %p663 = scmp.eq.s32.totalorder %s79, 0
    %p664 = por %p662, %p663
    %s665 = ssub.s32 %s81, %s88
    %p666 = scmp.eq.s32.totalorder %s665, 0
    %s668 = sadd.s32 %s667, 1
    %s669 = scalar_select %p666, %s667, %s668
    %p672 = pneg %p666
    %p673 = scmp.eq.s32.totalorder %s73, 15
    %p674 = por %p672, %p673
    %p675 = scmp.ne.s32.totalorder %s667, %s670
    %p676 = scmp.eq.s32.totalorder %s73, 0
    %p677 = por %p675, %p676
    %p678 = scmp.ne.s32.totalorder %s667, %s670
    %p679 = scmp.eq.s32.totalorder %s78, 15
    %p680 = por %p678, %p679
    %p681 = scmp.ne.s32.totalorder %s670, %s671
    %p682 = scmp.eq.s32.totalorder %s78, 0
    %p683 = por %p681, %p682
    %p684 = scmp.ne.s32.totalorder %s670, %s671
    %p685 = scmp.eq.s32.totalorder %s79, 15
    %p686 = por %p684, %p685
    %p688 = scmp.ne.s32.totalorder %s671, %s687
    %p689 = scmp.eq.s32.totalorder %s79, 0
    %p690 = por %p688, %p689
    %s691 = ssub.s32 %s81, %s88
    %p692 = scmp.eq.s32.totalorder %s691, 0
    %s694 = sadd.s32 %s693, 1
    %s695 = scalar_select %p692, %s693, %s694
    %p698 = pneg %p692
    %p699 = scmp.eq.s32.totalorder %s73, 15
    %p700 = por %p698, %p699
    %p701 = scmp.ne.s32.totalorder %s693, %s696
    %p702 = scmp.eq.s32.totalorder %s73, 0
    %p703 = por %p701, %p702
    %p704 = scmp.ne.s32.totalorder %s693, %s696
    %p705 = scmp.eq.s32.totalorder %s78, 15
    %p706 = por %p704, %p705
    %p707 = scmp.ne.s32.totalorder %s696, %s697
    %p708 = scmp.eq.s32.totalorder %s78, 0
    %p709 = por %p707, %p708
    %p710 = scmp.ne.s32.totalorder %s696, %s697
    %p711 = scmp.eq.s32.totalorder %s79, 15
    %p712 = por %p710, %p711
    %p714 = scmp.ne.s32.totalorder %s697, %s713
    %p715 = scmp.eq.s32.totalorder %s79, 0
    %p716 = por %p714, %p715
    %s717 = ssub.s32 %s81, %s88
    %p718 = scmp.eq.s32.totalorder %s717, 0
    %s720 = sadd.s32 %s719, 1
    %s721 = scalar_select %p718, %s719, %s720
    %p724 = pneg %p718
    %p725 = scmp.eq.s32.totalorder %s73, 15
    %p726 = por %p724, %p725
    %p727 = scmp.ne.s32.totalorder %s719, %s722
    %p728 = scmp.eq.s32.totalorder %s73, 0
    %p729 = por %p727, %p728
    %p730 = scmp.ne.s32.totalorder %s719, %s722
    %p731 = scmp.eq.s32.totalorder %s78, 15
    %p732 = por %p730, %p731
    %p733 = scmp.ne.s32.totalorder %s722, %s723
    %p734 = scmp.eq.s32.totalorder %s78, 0
    %p735 = por %p733, %p734
    %p736 = scmp.ne.s32.totalorder %s722, %s723
    %p737 = scmp.eq.s32.totalorder %s79, 15
    %p738 = por %p736, %p737
    %p740 = scmp.ne.s32.totalorder %s723, %s739
    %p741 = scmp.eq.s32.totalorder %s79, 0
    %p742 = por %p740, %p741
    %s743 = ssub.s32 %s81, %s88
    %p744 = scmp.eq.s32.totalorder %s743, 0
    %s746 = sadd.s32 %s745, 1
    %s747 = scalar_select %p744, %s745, %s746
    %p750 = pneg %p744
    %p751 = scmp.eq.s32.totalorder %s73, 15
    %p752 = por %p750, %p751
    %p753 = scmp.ne.s32.totalorder %s745, %s748
    %p754 = scmp.eq.s32.totalorder %s73, 0
    %p755 = por %p753, %p754
    %p756 = scmp.ne.s32.totalorder %s745, %s748
    %p757 = scmp.eq.s32.totalorder %s78, 15
    %p758 = por %p756, %p757
    %p759 = scmp.ne.s32.totalorder %s748, %s749
    %p760 = scmp.eq.s32.totalorder %s78, 0
    %p761 = por %p759, %p760
    %p762 = scmp.ne.s32.totalorder %s748, %s749
    %p763 = scmp.eq.s32.totalorder %s79, 15
    %p764 = por %p762, %p763
    %p766 = scmp.ne.s32.totalorder %s749, %s765
    %p767 = scmp.eq.s32.totalorder %s79, 0
    %p768 = por %p766, %p767
    %s769 = ssub.s32 %s81, %s88
    %p770 = scmp.eq.s32.totalorder %s769, 0
    %s772 = sadd.s32 %s771, 1
    %s773 = scalar_select %p770, %s771, %s772
    %p776 = pneg %p770
    %p777 = scmp.eq.s32.totalorder %s73, 15
    %p778 = por %p776, %p777
    %p779 = scmp.ne.s32.totalorder %s771, %s774
    %p780 = scmp.eq.s32.totalorder %s73, 0
    %p781 = por %p779, %p780
    %p782 = scmp.ne.s32.totalorder %s771, %s774
    %p783 = scmp.eq.s32.totalorder %s78, 15
    %p784 = por %p782, %p783
    %p785 = scmp.ne.s32.totalorder %s774, %s775
    %p786 = scmp.eq.s32.totalorder %s78, 0
    %p787 = por %p785, %p786
    %p788 = scmp.ne.s32.totalorder %s774, %s775
    %p789 = scmp.eq.s32.totalorder %s79, 15
    %p790 = por %p788, %p789
    %p792 = scmp.ne.s32.totalorder %s775, %s791
    %p793 = scmp.eq.s32.totalorder %s79, 0
    %p794 = por %p792, %p793
    %s795 = ssub.s32 %s81, %s88
    %p796 = scmp.eq.s32.totalorder %s795, 0
    %s798 = sadd.s32 %s797, 1
    %s799 = scalar_select %p796, %s797, %s798
    %p802 = pneg %p796
    %p803 = scmp.eq.s32.totalorder %s73, 15
    %p804 = por %p802, %p803
    %p805 = scmp.ne.s32.totalorder %s797, %s800
    %p806 = scmp.eq.s32.totalorder %s73, 0
    %p807 = por %p805, %p806
    %p808 = scmp.ne.s32.totalorder %s797, %s800
    %p809 = scmp.eq.s32.totalorder %s78, 15
    %p810 = por %p808, %p809
    %p811 = scmp.ne.s32.totalorder %s800, %s801
    %p812 = scmp.eq.s32.totalorder %s78, 0
    %p813 = por %p811, %p812
    %p814 = scmp.ne.s32.totalorder %s800, %s801
    %p815 = scmp.eq.s32.totalorder %s79, 15
    %p816 = por %p814, %p815
    %p818 = scmp.ne.s32.totalorder %s801, %s817
    %p819 = scmp.eq.s32.totalorder %s79, 0
    %p820 = por %p818, %p819
    %s821 = ssub.s32 %s81, %s88
    %p822 = scmp.eq.s32.totalorder %s821, 0
    %s824 = sadd.s32 %s823, 1
    %s825 = scalar_select %p822, %s823, %s824
    %p828 = pneg %p822
    %p829 = scmp.eq.s32.totalorder %s73, 15
    %p830 = por %p828, %p829
    %p831 = scmp.ne.s32.totalorder %s823, %s826
    %p832 = scmp.eq.s32.totalorder %s73, 0
    %p833 = por %p831, %p832
    %p834 = scmp.ne.s32.totalorder %s823, %s826
    %p835 = scmp.eq.s32.totalorder %s78, 15
    %p836 = por %p834, %p835
    %p837 = scmp.ne.s32.totalorder %s826, %s827
    %p838 = scmp.eq.s32.totalorder %s78, 0
    %p839 = por %p837, %p838
    %p840 = scmp.ne.s32.totalorder %s826, %s827
    %p841 = scmp.eq.s32.totalorder %s79, 15
    %p842 = por %p840, %p841
    %p844 = scmp.ne.s32.totalorder %s827, %s843
    %p845 = scmp.eq.s32.totalorder %s79, 0
    %p846 = por %p844, %p845
    %s847 = ssub.s32 %s81, %s88
    %p848 = scmp.eq.s32.totalorder %s847, 0
    %s850 = sadd.s32 %s849, 1
    %s851 = scalar_select %p848, %s849, %s850
    %p854 = pneg %p848
    %p855 = scmp.eq.s32.totalorder %s73, 15
    %p856 = por %p854, %p855
    %p857 = scmp.ne.s32.totalorder %s849, %s852
    %p858 = scmp.eq.s32.totalorder %s73, 0
    %p859 = por %p857, %p858
    %p860 = scmp.ne.s32.totalorder %s849, %s852
    %p861 = scmp.eq.s32.totalorder %s78, 15
    %p862 = por %p860, %p861
    %p863 = scmp.ne.s32.totalorder %s852, %s853
    %p864 = scmp.eq.s32.totalorder %s78, 0
    %p865 = por %p863, %p864
    %p866 = scmp.ne.s32.totalorder %s852, %s853
    %p867 = scmp.eq.s32.totalorder %s79, 15
    %p868 = por %p866, %p867
    %p870 = scmp.ne.s32.totalorder %s853, %s869
    %p871 = scmp.eq.s32.totalorder %s79, 0
    %p872 = por %p870, %p871
    %s873 = ssub.s32 %s81, %s88
    %p874 = scmp.eq.s32.totalorder %s873, 0
    %s876 = sadd.s32 %s875, 1
    %s877 = scalar_select %p874, %s875, %s876
    %p880 = pneg %p874
    %p881 = scmp.eq.s32.totalorder %s73, 15
    %p882 = por %p880, %p881
    %p883 = scmp.ne.s32.totalorder %s875, %s878
    %p884 = scmp.eq.s32.totalorder %s73, 0
    %p885 = por %p883, %p884
    %p886 = scmp.ne.s32.totalorder %s875, %s878
    %p887 = scmp.eq.s32.totalorder %s78, 15
    %p888 = por %p886, %p887
    %p889 = scmp.ne.s32.totalorder %s878, %s879
    %p890 = scmp.eq.s32.totalorder %s78, 0
    %p891 = por %p889, %p890
    %p892 = scmp.ne.s32.totalorder %s878, %s879
    %p893 = scmp.eq.s32.totalorder %s79, 15
    %p894 = por %p892, %p893
    %p896 = scmp.ne.s32.totalorder %s879, %s895
    %p897 = scmp.eq.s32.totalorder %s79, 0
    %p898 = por %p896, %p897
    %s899 = ssub.s32 %s81, %s88
    %p900 = scmp.eq.s32.totalorder %s899, 0
    %s902 = sadd.s32 %s901, 1
    %s903 = scalar_select %p900, %s901, %s902
    %p906 = pneg %p900
    %p907 = scmp.eq.s32.totalorder %s73, 15
    %p908 = por %p906, %p907
    %p909 = scmp.ne.s32.totalorder %s901, %s904
    %p910 = scmp.eq.s32.totalorder %s73, 0
    %p911 = por %p909, %p910
    %p912 = scmp.ne.s32.totalorder %s901, %s904
    %p913 = scmp.eq.s32.totalorder %s78, 15
    %p914 = por %p912, %p913
    %p915 = scmp.ne.s32.totalorder %s904, %s905
    %p916 = scmp.eq.s32.totalorder %s78, 0
    %p917 = por %p915, %p916
    %p918 = scmp.ne.s32.totalorder %s904, %s905
    %p919 = scmp.eq.s32.totalorder %s79, 15
    %p920 = por %p918, %p919
    %p922 = scmp.ne.s32.totalorder %s905, %s921
    %p923 = scmp.eq.s32.totalorder %s79, 0
    %p924 = por %p922, %p923
    %s925 = ssub.s32 %s81, %s88
    %p926 = scmp.eq.s32.totalorder %s925, 0
    %s928 = sadd.s32 %s927, 1
    %s929 = scalar_select %p926, %s927, %s928
    %p932 = pneg %p926
    %p933 = scmp.eq.s32.totalorder %s73, 15
    %p934 = por %p932, %p933
    %p935 = scmp.ne.s32.totalorder %s927, %s930
    %p936 = scmp.eq.s32.totalorder %s73, 0
    %p937 = por %p935, %p936
    %p938 = scmp.ne.s32.totalorder %s927, %s930
    %p939 = scmp.eq.s32.totalorder %s78, 15
    %p940 = por %p938, %p939
    %p941 = scmp.ne.s32.totalorder %s930, %s931
    %p942 = scmp.eq.s32.totalorder %s78, 0
    %p943 = por %p941, %p942
    %p944 = scmp.ne.s32.totalorder %s930, %s931
    %p945 = scmp.eq.s32.totalorder %s79, 15
    %p946 = por %p944, %p945
    %p948 = scmp.ne.s32.totalorder %s931, %s947
    %p949 = scmp.eq.s32.totalorder %s79, 0
    %p950 = por %p948, %p949
    %s951 = ssub.s32 %s80, %s92
    %p952 = scmp.eq.s32.totalorder %s951, 0
    %s954 = sadd.s32 %s953, 1
    %s955 = scalar_select %p952, %s953, %s954
    %p958 = pneg %p952
    %p959 = scmp.eq.s32.totalorder %s73, 15
    %p960 = por %p958, %p959
    %p961 = scmp.ne.s32.totalorder %s953, %s956
    %p962 = scmp.eq.s32.totalorder %s73, 0
    %p963 = por %p961, %p962
    %p964 = scmp.ne.s32.totalorder %s953, %s956
    %p965 = scmp.eq.s32.totalorder %s78, 15
    %p966 = por %p964, %p965
    %p967 = scmp.ne.s32.totalorder %s956, %s957
    %p968 = scmp.eq.s32.totalorder %s78, 0
    %p969 = por %p967, %p968
    %p970 = scmp.ne.s32.totalorder %s956, %s957
    %p971 = scmp.eq.s32.totalorder %s79, 15
    %p972 = por %p970, %p971
    %p974 = scmp.ne.s32.totalorder %s957, %s973
    %p975 = scmp.eq.s32.totalorder %s79, 0
    %p976 = por %p974, %p975
    %p977 = scmp.le.s32.totalorder 1, %s73
    %p978 = scmp.lt.s32.totalorder %s73, 17
    %p979 = pnand %p977, %p978
    %p980 = pneg %p979
    // Predicated region
    $region9: #{vq_indexer_forward.4} parent=5 // pred_check
      _
    $region10: #{vq_indexer_forward.4} parent=5 // pred_check_branch
      %982 = sbr.rel (%p979) target = $region12
    $region11: #{vq_indexer_forward.4} parent=5 // pred_region
      %s983 = ssub.s32 %s73, 1
    $region12: #{vq_indexer_forward.4} parent=5 // pred_fallthru
      _
    %p984 = scmp.lt.s32.totalorder %s73, 16
    // Predicated region
    $region13: #{vq_indexer_forward.4} parent=5 // pred_check
      %p985 = pneg %p984
    $region14: #{vq_indexer_forward.4} parent=5 // pred_check_branch
      %987 = sbr.rel (%p985) target = $region16
    $region15: #{vq_indexer_forward.4} parent=5 // pred_region
      // Predicated region
      $region17: #{vq_indexer_forward.4} parent=15 // pred_check
        %p988 = pneg %p105
      $region18: #{vq_indexer_forward.4} parent=15 // pred_check_branch
        %990 = sbr.rel (%p988) target = $region20
      $region19: #{vq_indexer_forward.4} parent=15 // pred_region
        %p991 = scmp.lt.s32.totalorder %s80, 1
        %s992 = scalar_select %p991, %s80, 1
        %s993 = smul.addr %s992, 2
        %s994 = smul.addr %s993, 8
        %s995 = scalar_lea.vmem %s1, %s994
      $region20: #{vq_indexer_forward.4} parent=15 // pred_fallthru
        _
      // Predicated region
      $region21: #{vq_indexer_forward.4} parent=15 // pred_check
        %p996 = pneg %p131
      $region22: #{vq_indexer_forward.4} parent=15 // pred_check_branch
        %998 = sbr.rel (%p996) target = $region24
      $region23: #{vq_indexer_forward.4} parent=15 // pred_region
        %p999 = scmp.lt.s32.totalorder %s80, 1
        %s1000 = scalar_select %p999, %s80, 1
        %s1001 = scalar_lea.vmem %s3, %s1000
      $region24: #{vq_indexer_forward.4} parent=15 // pred_fallthru
        _
      // Predicated region
      $region25: #{vq_indexer_forward.4} parent=15 // pred_check
        %p1002 = pneg %p157
      $region26: #{vq_indexer_forward.4} parent=15 // pred_check_branch
        %1004 = sbr.rel (%p1002) target = $region28
      $region27: #{vq_indexer_forward.4} parent=15 // pred_region
        %p1005 = scmp.lt.s32.totalorder %s80, 1
        %s1006 = scalar_select %p1005, %s80, 1
        %s1007 = smul.addr %s1006, 2
        %s1008 = smul.addr %s1007, 8
        %s1009 = scalar_lea.vmem %s5, %s1008
      $region28: #{vq_indexer_forward.4} parent=15 // pred_fallthru
        _
      // Predicated region
      $region29: #{vq_indexer_forward.4} parent=15 // pred_check
        %p1010 = pneg %p183
      $region30: #{vq_indexer_forward.4} parent=15 // pred_check_branch
        %1012 = sbr.rel (%p1010) target = $region32
      $region31: #{vq_indexer_forward.4} parent=15 // pred_region
        %p1013 = scmp.lt.s32.totalorder %s81, 7
        %s1014 = scalar_select %p1013, %s81, 7
        %s1015 = scalar_lea.vmem %s7, %s1014
      $region32: #{vq_indexer_forward.4} parent=15 // pred_fallthru
        _
      // Predicated region
      $region33: #{vq_indexer_forward.4} parent=15 // pred_check
        %p1016 = pneg %p209
      $region34: #{vq_indexer_forward.4} parent=15 // pred_check_branch
        %1018 = sbr.rel (%p1016) target = $region36
      $region35: #{vq_indexer_forward.4} parent=15 // pred_region
        %p1019 = scmp.lt.s32.totalorder %s81, 7
        %s1020 = scalar_select %p1019, %s81, 7
        %s1021 = scalar_lea.vmem %s9, %s1020
      $region36: #{vq_indexer_forward.4} parent=15 // pred_fallthru
        _
      // Predicated region
      $region37: #{vq_indexer_forward.4} parent=15 // pred_check
        %p1022 = pneg %p235
      $region38: #{vq_indexer_forward.4} parent=15 // pred_check_branch
        %1024 = sbr.rel (%p1022) target = $region40
      $region39: #{vq_indexer_forward.4} parent=15 // pred_region
        %p1025 = scmp.lt.s32.totalorder %s81, 7
        %s1026 = scalar_select %p1025, %s81, 7
        %s1027 = smul.addr %s1026, 4
        %s1028 = smul.addr %s1027, 4
        %s1029 = scalar_lea.vmem %s11, %s1028
      $region40: #{vq_indexer_forward.4} parent=15 // pred_fallthru
        _
      // Predicated region
      $region41: #{vq_indexer_forward.4} parent=15 // pred_check
        %p1030 = pneg %p261
      $region42: #{vq_indexer_forward.4} parent=15 // pred_check_branch
        %1032 = sbr.rel (%p1030) target = $region44
      $region43: #{vq_indexer_forward.4} parent=15 // pred_region
        %p1033 = scmp.lt.s32.totalorder %s81, 7
        %s1034 = scalar_select %p1033, %s81, 7
        %s1035 = scalar_lea.vmem %s13, %s1034
      $region44: #{vq_indexer_forward.4} parent=15 // pred_fallthru
        _
      // Predicated region
      $region45: #{vq_indexer_forward.4} parent=15 // pred_check
        %p1036 = pneg %p287
      $region46: #{vq_indexer_forward.4} parent=15 // pred_check_branch
        %1038 = sbr.rel (%p1036) target = $region48
      $region47: #{vq_indexer_forward.4} parent=15 // pred_region
        %p1039 = scmp.lt.s32.totalorder %s81, 7
        %s1040 = scalar_select %p1039, %s81, 7
        %s1041 = smul.addr %s1040, 16
        %s1042 = smul.addr %s1041, 4
        %s1043 = scalar_lea.vmem %s15, %s1042
      $region48: #{vq_indexer_forward.4} parent=15 // pred_fallthru
        _
      // Predicated region
      $region49: #{vq_indexer_forward.4} parent=15 // pred_check
        %p1044 = pneg %p313
      $region50: #{vq_indexer_forward.4} parent=15 // pred_check_branch
        %1046 = sbr.rel (%p1044) target = $region52
      $region51: #{vq_indexer_forward.4} parent=15 // pred_region
        %p1047 = scmp.lt.s32.totalorder %s81, 7
        %s1048 = scalar_select %p1047, %s81, 7
        %s1049 = scalar_lea.vmem %s17, %s1048
      $region52: #{vq_indexer_forward.4} parent=15 // pred_fallthru
        _
      // Predicated region
      $region53: #{vq_indexer_forward.4} parent=15 // pred_check
        %p1050 = pneg %p339
      $region54: #{vq_indexer_forward.4} parent=15 // pred_check_branch
        %1052 = sbr.rel (%p1050) target = $region56
      $region55: #{vq_indexer_forward.4} parent=15 // pred_region
        %p1053 = scmp.lt.s32.totalorder %s81, 7
        %s1054 = scalar_select %p1053, %s81, 7
        %s1055 = scalar_lea.vmem %s19, %s1054
      $region56: #{vq_indexer_forward.4} parent=15 // pred_fallthru
        _
      // Predicated region
      $region57: #{vq_indexer_forward.4} parent=15 // pred_check
        %p1056 = pneg %p365
      $region58: #{vq_indexer_forward.4} parent=15 // pred_check_branch
        %1058 = sbr.rel (%p1056) target = $region60
      $region59: #{vq_indexer_forward.4} parent=15 // pred_region
        %p1059 = scmp.lt.s32.totalorder %s81, 7
        %s1060 = scalar_select %p1059, %s81, 7
        %s1061 = scalar_lea.vmem %s21, %s1060
      $region60: #{vq_indexer_forward.4} parent=15 // pred_fallthru
        _
      // Predicated region
      $region61: #{vq_indexer_forward.4} parent=15 // pred_check
        %p1062 = pneg %p391
      $region62: #{vq_indexer_forward.4} parent=15 // pred_check_branch
        %1064 = sbr.rel (%p1062) target = $region64
      $region63: #{vq_indexer_forward.4} parent=15 // pred_region
        %p1065 = scmp.lt.s32.totalorder %s81, 7
        %s1066 = scalar_select %p1065, %s81, 7
        %s1067 = smul.addr %s1066, 4
        %s1068 = smul.addr %s1067, 4
        %s1069 = scalar_lea.vmem %s23, %s1068
      $region64: #{vq_indexer_forward.4} parent=15 // pred_fallthru
        _
      // Predicated region
      $region65: #{vq_indexer_forward.4} parent=15 // pred_check
        %p1070 = pneg %p417
      $region66: #{vq_indexer_forward.4} parent=15 // pred_check_branch
        %1072 = sbr.rel (%p1070) target = $region68
      $region67: #{vq_indexer_forward.4} parent=15 // pred_region
        %p1073 = scmp.lt.s32.totalorder %s81, 7
        %s1074 = scalar_select %p1073, %s81, 7
        %s1075 = smul.addr %s1074, 4
        %s1076 = smul.addr %s1075, 4
        %s1077 = scalar_lea.vmem %s25, %s1076
      $region68: #{vq_indexer_forward.4} parent=15 // pred_fallthru
        _
      // Predicated region
      $region69: #{vq_indexer_forward.4} parent=15 // pred_check
        %p1078 = pneg %p443
      $region70: #{vq_indexer_forward.4} parent=15 // pred_check_branch
        %1080 = sbr.rel (%p1078) target = $region72
      $region71: #{vq_indexer_forward.4} parent=15 // pred_region
        %p1081 = scmp.lt.s32.totalorder %s81, 7
        %s1082 = scalar_select %p1081, %s81, 7
        %s1083 = scalar_lea.vmem %s27, %s1082
      $region72: #{vq_indexer_forward.4} parent=15 // pred_fallthru
        _
      // Predicated region
      $region73: #{vq_indexer_forward.4} parent=15 // pred_check
        %p1084 = pneg %p469
      $region74: #{vq_indexer_forward.4} parent=15 // pred_check_branch
        %1086 = sbr.rel (%p1084) target = $region76
      $region75: #{vq_indexer_forward.4} parent=15 // pred_region
        %p1087 = scmp.lt.s32.totalorder %s81, 7
        %s1088 = scalar_select %p1087, %s81, 7
        %s1089 = scalar_lea.vmem %s29, %s1088
      $region76: #{vq_indexer_forward.4} parent=15 // pred_fallthru
        _
      // Predicated region
      $region77: #{vq_indexer_forward.4} parent=15 // pred_check
        %p1090 = pneg %p495
      $region78: #{vq_indexer_forward.4} parent=15 // pred_check_branch
        %1092 = sbr.rel (%p1090) target = $region80
      $region79: #{vq_indexer_forward.4} parent=15 // pred_region
        %p1093 = scmp.lt.s32.totalorder %s81, 7
        %s1094 = scalar_select %p1093, %s81, 7
        %s1095 = scalar_lea.vmem %s31, %s1094
      $region80: #{vq_indexer_forward.4} parent=15 // pred_fallthru
        _
      // Predicated region
      $region81: #{vq_indexer_forward.4} parent=15 // pred_check
        %p1096 = pneg %p521
      $region82: #{vq_indexer_forward.4} parent=15 // pred_check_branch
        %1098 = sbr.rel (%p1096) target = $region84
      $region83: #{vq_indexer_forward.4} parent=15 // pred_region
        %p1099 = scmp.lt.s32.totalorder %s81, 7
        %s1100 = scalar_select %p1099, %s81, 7
        %s1101 = smul.addr %s1100, 4
        %s1102 = smul.addr %s1101, 4
        %s1103 = scalar_lea.vmem %s33, %s1102
      $region84: #{vq_indexer_forward.4} parent=15 // pred_fallthru
        _
      // Predicated region
      $region85: #{vq_indexer_forward.4} parent=15 // pred_check
        %p1104 = pneg %p547
      $region86: #{vq_indexer_forward.4} parent=15 // pred_check_branch
        %1106 = sbr.rel (%p1104) target = $region88
      $region87: #{vq_indexer_forward.4} parent=15 // pred_region
        %p1107 = scmp.lt.s32.totalorder %s81, 7
        %s1108 = scalar_select %p1107, %s81, 7
        %s1109 = scalar_lea.vmem %s35, %s1108
      $region88: #{vq_indexer_forward.4} parent=15 // pred_fallthru
        _
      // Predicated region
      $region89: #{vq_indexer_forward.4} parent=15 // pred_check
        %p1110 = pneg %p573
      $region90: #{vq_indexer_forward.4} parent=15 // pred_check_branch
        %1112 = sbr.rel (%p1110) target = $region92
      $region91: #{vq_indexer_forward.4} parent=15 // pred_region
        %p1113 = scmp.lt.s32.totalorder %s81, 7
        %s1114 = scalar_select %p1113, %s81, 7
        %s1115 = smul.addr %s1114, 4
        %s1116 = smul.addr %s1115, 8
        %s1117 = scalar_lea.vmem %s37, %s1116
      $region92: #{vq_indexer_forward.4} parent=15 // pred_fallthru
        _
      // Predicated region
      $region93: #{vq_indexer_forward.4} parent=15 // pred_check
        %p1118 = pneg %p599
      $region94: #{vq_indexer_forward.4} parent=15 // pred_check_branch
        %1120 = sbr.rel (%p1118) target = $region96
      $region95: #{vq_indexer_forward.4} parent=15 // pred_region
        %p1121 = scmp.lt.s32.totalorder %s81, 7
        %s1122 = scalar_select %p1121, %s81, 7
        %s1123 = scalar_lea.vmem %s39, %s1122
      $region96: #{vq_indexer_forward.4} parent=15 // pred_fallthru
        _
      // Predicated region
      $region97: #{vq_indexer_forward.4} parent=15 // pred_check
        %p1124 = pneg %p625
      $region98: #{vq_indexer_forward.4} parent=15 // pred_check_branch
        %1126 = sbr.rel (%p1124) target = $region100
      $region99: #{vq_indexer_forward.4} parent=15 // pred_region
        %p1127 = scmp.lt.s32.totalorder %s81, 7
        %s1128 = scalar_select %p1127, %s81, 7
        %s1129 = scalar_lea.vmem %s41, %s1128
      $region100: #{vq_indexer_forward.4} parent=15 // pred_fallthru
        _
      // Predicated region
      $region101: #{vq_indexer_forward.4} parent=15 // pred_check
        %p1130 = pneg %p651
      $region102: #{vq_indexer_forward.4} parent=15 // pred_check_branch
        %1132 = sbr.rel (%p1130) target = $region104
      $region103: #{vq_indexer_forward.4} parent=15 // pred_region
        %p1133 = scmp.lt.s32.totalorder %s81, 7
        %s1134 = scalar_select %p1133, %s81, 7
        %s1135 = scalar_lea.vmem %s43, %s1134
      $region104: #{vq_indexer_forward.4} parent=15 // pred_fallthru
        _
      // Predicated region
      $region105: #{vq_indexer_forward.4} parent=15 // pred_check
        %p1136 = pneg %p677
      $region106: #{vq_indexer_forward.4} parent=15 // pred_check_branch
        %1138 = sbr.rel (%p1136) target = $region108
      $region107: #{vq_indexer_forward.4} parent=15 // pred_region
        %p1139 = scmp.lt.s32.totalorder %s81, 7
        %s1140 = scalar_select %p1139, %s81, 7
        %s1141 = smul.addr %s1140, 8
        %s1142 = smul.addr %s1141, 4
        %s1143 = scalar_lea.vmem %s45, %s1142
      $region108: #{vq_indexer_forward.4} parent=15 // pred_fallthru
        _
      // Predicated region
      $region109: #{vq_indexer_forward.4} parent=15 // pred_check
        %p1144 = pneg %p703
      $region110: #{vq_indexer_forward.4} parent=15 // pred_check_branch
        %1146 = sbr.rel (%p1144) target = $region112
      $region111: #{vq_indexer_forward.4} parent=15 // pred_region
        %p1147 = scmp.lt.s32.totalorder %s81, 7
        %s1148 = scalar_select %p1147, %s81, 7
        %s1149 = scalar_lea.vmem %s47, %s1148
      $region112: #{vq_indexer_forward.4} parent=15 // pred_fallthru
        _
      // Predicated region
      $region113: #{vq_indexer_forward.4} parent=15 // pred_check
        %p1150 = pneg %p729
      $region114: #{vq_indexer_forward.4} parent=15 // pred_check_branch
        %1152 = sbr.rel (%p1150) target = $region116
      $region115: #{vq_indexer_forward.4} parent=15 // pred_region
        %p1153 = scmp.lt.s32.totalorder %s81, 7
        %s1154 = scalar_select %p1153, %s81, 7
        %s1155 = scalar_lea.vmem %s49, %s1154
      $region116: #{vq_indexer_forward.4} parent=15 // pred_fallthru
        _
      // Predicated region
      $region117: #{vq_indexer_forward.4} parent=15 // pred_check
        %p1156 = pneg %p755
      $region118: #{vq_indexer_forward.4} parent=15 // pred_check_branch
        %1158 = sbr.rel (%p1156) target = $region120
      $region119: #{vq_indexer_forward.4} parent=15 // pred_region
        %p1159 = scmp.lt.s32.totalorder %s81, 7
        %s1160 = scalar_select %p1159, %s81, 7
        %s1161 = scalar_lea.vmem %s51, %s1160
      $region120: #{vq_indexer_forward.4} parent=15 // pred_fallthru
        _
      // Predicated region
      $region121: #{vq_indexer_forward.4} parent=15 // pred_check
        %p1162 = pneg %p781
      $region122: #{vq_indexer_forward.4} parent=15 // pred_check_branch
        %1164 = sbr.rel (%p1162) target = $region124
      $region123: #{vq_indexer_forward.4} parent=15 // pred_region
        %p1165 = scmp.lt.s32.totalorder %s81, 7
        %s1166 = scalar_select %p1165, %s81, 7
        %s1167 = smul.addr %s1166, 4
        %s1168 = smul.addr %s1167, 4
        %s1169 = scalar_lea.vmem %s53, %s1168
      $region124: #{vq_indexer_forward.4} parent=15 // pred_fallthru
        _
      // Predicated region
      $region125: #{vq_indexer_forward.4} parent=15 // pred_check
        %p1170 = pneg %p807
      $region126: #{vq_indexer_forward.4} parent=15 // pred_check_branch
        %1172 = sbr.rel (%p1170) target = $region128
      $region127: #{vq_indexer_forward.4} parent=15 // pred_region
        %p1173 = scmp.lt.s32.totalorder %s81, 7
        %s1174 = scalar_select %p1173, %s81, 7
        %s1175 = scalar_lea.vmem %s55, %s1174
      $region128: #{vq_indexer_forward.4} parent=15 // pred_fallthru
        _
      // Predicated region
      $region129: #{vq_indexer_forward.4} parent=15 // pred_check
        %p1176 = pneg %p833
      $region130: #{vq_indexer_forward.4} parent=15 // pred_check_branch
        %1178 = sbr.rel (%p1176) target = $region132
      $region131: #{vq_indexer_forward.4} parent=15 // pred_region
        %p1179 = scmp.lt.s32.totalorder %s81, 7
        %s1180 = scalar_select %p1179, %s81, 7
        %s1181 = smul.addr %s1180, 16
        %s1182 = smul.addr %s1181, 4
        %s1183 = scalar_lea.vmem %s57, %s1182
      $region132: #{vq_indexer_forward.4} parent=15 // pred_fallthru
        _
      // Predicated region
      $region133: #{vq_indexer_forward.4} parent=15 // pred_check
        %p1184 = pneg %p859
      $region134: #{vq_indexer_forward.4} parent=15 // pred_check_branch
        %1186 = sbr.rel (%p1184) target = $region136
      $region135: #{vq_indexer_forward.4} parent=15 // pred_region
        %p1187 = scmp.lt.s32.totalorder %s81, 7
        %s1188 = scalar_select %p1187, %s81, 7
        %s1189 = scalar_lea.vmem %s59, %s1188
      $region136: #{vq_indexer_forward.4} parent=15 // pred_fallthru
        _
      // Predicated region
      $region137: #{vq_indexer_forward.4} parent=15 // pred_check
        %p1190 = pneg %p885
      $region138: #{vq_indexer_forward.4} parent=15 // pred_check_branch
        %1192 = sbr.rel (%p1190) target = $region140
      $region139: #{vq_indexer_forward.4} parent=15 // pred_region
        %p1193 = scmp.lt.s32.totalorder %s81, 7
        %s1194 = scalar_select %p1193, %s81, 7
        %s1195 = scalar_lea.vmem %s61, %s1194
      $region140: #{vq_indexer_forward.4} parent=15 // pred_fallthru
        _
      // Predicated region
      $region141: #{vq_indexer_forward.4} parent=15 // pred_check
        %p1196 = pneg %p911
      $region142: #{vq_indexer_forward.4} parent=15 // pred_check_branch
        %1198 = sbr.rel (%p1196) target = $region144
      $region143: #{vq_indexer_forward.4} parent=15 // pred_region
        %p1199 = scmp.lt.s32.totalorder %s81, 7
        %s1200 = scalar_select %p1199, %s81, 7
        %s1201 = scalar_lea.vmem %s63, %s1200
      $region144: #{vq_indexer_forward.4} parent=15 // pred_fallthru
        _
      // Predicated region
      $region145: #{vq_indexer_forward.4} parent=15 // pred_check
        %p1202 = pneg %p937
      $region146: #{vq_indexer_forward.4} parent=15 // pred_check_branch
        %1204 = sbr.rel (%p1202) target = $region148
      $region147: #{vq_indexer_forward.4} parent=15 // pred_region
        %p1205 = scmp.lt.s32.totalorder %s81, 7
        %s1206 = scalar_select %p1205, %s81, 7
        %s1207 = smul.addr %s1206, 16
        %s1208 = smul.addr %s1207, 4
        %s1209 = scalar_lea.vmem %s65, %s1208
      $region148: #{vq_indexer_forward.4} parent=15 // pred_fallthru
        _
    $region16: #{vq_indexer_forward.4} parent=5 // pred_fallthru
      _
    %p1210 = scmp.le.s32.totalorder 1, %s73
    %p1211 = scmp.lt.s32.totalorder %s73, 17
    %p1212 = pnand %p1210, %p1211
    %p1213 = pneg %p1212
    // Predicated region
    $region149: #{vq_indexer_forward.4} parent=5 // pred_check
      _
    $region150: #{vq_indexer_forward.4} parent=5 // pred_check_branch
      %1215 = sbr.rel (%p1212) target = $region152
    $region151: #{vq_indexer_forward.4} parent=5 // pred_region
      %s1216 = ssub.s32 %s73, 1
      %p1217 = scmp.lt.s32.totalorder %s82, 1
      %s1218 = scalar_select %p1217, %s82, 1
      %s1219 = smul.addr %s1218, 2
      %s1220 = smul.addr %s1219, 8
      %s1221 = scalar_lea.vmem %s1, %s1220
      %p1222 = pneg %p111
      %p1223 = pneg %p108
      %p1224 = scmp.lt.s32.totalorder %s82, 1
      %s1225 = scalar_select %p1224, %s82, 1
      %s1226 = scalar_lea.vmem %s3, %s1225
      %p1227 = pneg %p137
      %p1228 = pneg %p134
      %p1229 = scmp.lt.s32.totalorder %s82, 1
      %s1230 = scalar_select %p1229, %s82, 1
      %s1231 = smul.addr %s1230, 2
      %s1232 = smul.addr %s1231, 8
      %s1233 = scalar_lea.vmem %s5, %s1232
      %p1234 = pneg %p163
      %p1235 = pneg %p160
      %p1236 = scmp.lt.s32.totalorder %s83, 7
      %s1237 = scalar_select %p1236, %s83, 7
      %s1238 = scalar_lea.vmem %s7, %s1237
      %p1239 = pneg %p189
      %p1240 = pneg %p186
      %p1241 = scmp.lt.s32.totalorder %s83, 7
      %s1242 = scalar_select %p1241, %s83, 7
      %s1243 = scalar_lea.vmem %s9, %s1242
      %p1244 = pneg %p215
      %p1245 = pneg %p212
      %p1246 = scmp.lt.s32.totalorder %s83, 7
      %s1247 = scalar_select %p1246, %s83, 7
      %s1248 = smul.addr %s1247, 4
      %s1249 = smul.addr %s1248, 4
      %s1250 = scalar_lea.vmem %s11, %s1249
      %p1251 = pneg %p241
      %p1252 = pneg %p238
      %p1253 = scmp.lt.s32.totalorder %s83, 7
      %s1254 = scalar_select %p1253, %s83, 7
      %s1255 = scalar_lea.vmem %s13, %s1254
      %p1256 = pneg %p267
      %p1257 = pneg %p264
      %p1258 = scmp.lt.s32.totalorder %s83, 7
      %s1259 = scalar_select %p1258, %s83, 7
      %s1260 = smul.addr %s1259, 16
      %s1261 = smul.addr %s1260, 4
      %s1262 = scalar_lea.vmem %s15, %s1261
      %p1263 = pneg %p293
      %p1264 = pneg %p290
      %p1265 = scmp.lt.s32.totalorder %s83, 7
      %s1266 = scalar_select %p1265, %s83, 7
      %s1267 = scalar_lea.vmem %s17, %s1266
      %p1268 = pneg %p319
      %p1269 = pneg %p316
      %p1270 = scmp.lt.s32.totalorder %s83, 7
      %s1271 = scalar_select %p1270, %s83, 7
      %s1272 = scalar_lea.vmem %s19, %s1271
      %p1273 = pneg %p345
      %p1274 = pneg %p342
      %p1275 = scmp.lt.s32.totalorder %s83, 7
      %s1276 = scalar_select %p1275, %s83, 7
      %s1277 = scalar_lea.vmem %s21, %s1276
      %p1278 = pneg %p371
      %p1279 = pneg %p368
      %p1280 = scmp.lt.s32.totalorder %s83, 7
      %s1281 = scalar_select %p1280, %s83, 7
      %s1282 = smul.addr %s1281, 4
      %s1283 = smul.addr %s1282, 4
      %s1284 = scalar_lea.vmem %s23, %s1283
      %p1285 = pneg %p397
      %p1286 = pneg %p394
      %p1287 = scmp.lt.s32.totalorder %s83, 7
      %s1288 = scalar_select %p1287, %s83, 7
      %s1289 = smul.addr %s1288, 4
      %s1290 = smul.addr %s1289, 4
      %s1291 = scalar_lea.vmem %s25, %s1290
      %p1292 = pneg %p423
      %p1293 = pneg %p420
      %p1294 = scmp.lt.s32.totalorder %s83, 7
      %s1295 = scalar_select %p1294, %s83, 7
      %s1296 = scalar_lea.vmem %s27, %s1295
      %p1297 = pneg %p449
      %p1298 = pneg %p446
      %p1299 = scmp.lt.s32.totalorder %s83, 7
      %s1300 = scalar_select %p1299, %s83, 7
      %s1301 = scalar_lea.vmem %s29, %s1300
      %p1302 = pneg %p475
      %p1303 = pneg %p472
      %p1304 = scmp.lt.s32.totalorder %s83, 7
      %s1305 = scalar_select %p1304, %s83, 7
      %s1306 = scalar_lea.vmem %s31, %s1305
      %p1307 = pneg %p501
      %p1308 = pneg %p498
      %p1309 = scmp.lt.s32.totalorder %s83, 7
      %s1310 = scalar_select %p1309, %s83, 7
      %s1311 = smul.addr %s1310, 4
      %s1312 = smul.addr %s1311, 4
      %s1313 = scalar_lea.vmem %s33, %s1312
      %p1314 = pneg %p527
      %p1315 = pneg %p524
      %p1316 = scmp.lt.s32.totalorder %s83, 7
      %s1317 = scalar_select %p1316, %s83, 7
      %s1318 = scalar_lea.vmem %s35, %s1317
      %p1319 = pneg %p553
      %p1320 = pneg %p550
      %p1321 = scmp.lt.s32.totalorder %s83, 7
      %s1322 = scalar_select %p1321, %s83, 7
      %s1323 = smul.addr %s1322, 4
      %s1324 = smul.addr %s1323, 8
      %s1325 = scalar_lea.vmem %s37, %s1324
      %p1326 = pneg %p579
      %p1327 = pneg %p576
      %p1328 = scmp.lt.s32.totalorder %s83, 7
      %s1329 = scalar_select %p1328, %s83, 7
      %s1330 = scalar_lea.vmem %s39, %s1329
      %p1331 = pneg %p605
      %p1332 = pneg %p602
      %p1333 = scmp.lt.s32.totalorder %s83, 7
      %s1334 = scalar_select %p1333, %s83, 7
      %s1335 = scalar_lea.vmem %s41, %s1334
      %p1336 = pneg %p631
      %p1337 = pneg %p628
      %p1338 = scmp.lt.s32.totalorder %s83, 7
      %s1339 = scalar_select %p1338, %s83, 7
      %s1340 = scalar_lea.vmem %s43, %s1339
      %p1341 = pneg %p657
      %p1342 = pneg %p654
      %p1343 = scmp.lt.s32.totalorder %s83, 7
      %s1344 = scalar_select %p1343, %s83, 7
      %s1345 = smul.addr %s1344, 8
      %s1346 = smul.addr %s1345, 4
      %s1347 = scalar_lea.vmem %s45, %s1346
      %p1348 = pneg %p683
      %p1349 = pneg %p680
      %p1350 = scmp.lt.s32.totalorder %s83, 7
      %s1351 = scalar_select %p1350, %s83, 7
      %s1352 = scalar_lea.vmem %s47, %s1351
      %p1353 = pneg %p709
      %p1354 = pneg %p706
      %p1355 = scmp.lt.s32.totalorder %s83, 7
      %s1356 = scalar_select %p1355, %s83, 7
      %s1357 = scalar_lea.vmem %s49, %s1356
      %p1358 = pneg %p735
      %p1359 = pneg %p732
      %p1360 = scmp.lt.s32.totalorder %s83, 7
      %s1361 = scalar_select %p1360, %s83, 7
      %s1362 = scalar_lea.vmem %s51, %s1361
      %p1363 = pneg %p761
      %p1364 = pneg %p758
      %p1365 = scmp.lt.s32.totalorder %s83, 7
      %s1366 = scalar_select %p1365, %s83, 7
      %s1367 = smul.addr %s1366, 4
      %s1368 = smul.addr %s1367, 4
      %s1369 = scalar_lea.vmem %s53, %s1368
      %p1370 = pneg %p787
      %p1371 = pneg %p784
      %p1372 = scmp.lt.s32.totalorder %s83, 7
      %s1373 = scalar_select %p1372, %s83, 7
      %s1374 = scalar_lea.vmem %s55, %s1373
      %p1375 = pneg %p813
      %p1376 = pneg %p810
      %p1377 = scmp.lt.s32.totalorder %s83, 7
      %s1378 = scalar_select %p1377, %s83, 7
      %s1379 = smul.addr %s1378, 16
      %s1380 = smul.addr %s1379, 4
      %s1381 = scalar_lea.vmem %s57, %s1380
      %p1382 = pneg %p839
      %p1383 = pneg %p836
      %p1384 = scmp.lt.s32.totalorder %s83, 7
      %s1385 = scalar_select %p1384, %s83, 7
      %s1386 = scalar_lea.vmem %s59, %s1385
      %p1387 = pneg %p865
      %p1388 = pneg %p862
      %p1389 = scmp.lt.s32.totalorder %s83, 7
      %s1390 = scalar_select %p1389, %s83, 7
      %s1391 = scalar_lea.vmem %s61, %s1390
      %p1392 = pneg %p891
      %p1393 = pneg %p888
      %p1394 = scmp.lt.s32.totalorder %s83, 7
      %s1395 = scalar_select %p1394, %s83, 7
      %s1396 = scalar_lea.vmem %s63, %s1395
      %p1397 = pneg %p917
      %p1398 = pneg %p914
      %p1399 = scmp.lt.s32.totalorder %s83, 7
      %s1400 = scalar_select %p1399, %s83, 7
      %s1401 = smul.addr %s1400, 16
      %s1402 = smul.addr %s1401, 4
      %s1403 = scalar_lea.vmem %s65, %s1402
      %p1404 = pneg %p943
      %p1405 = pneg %p940
      %p1406 = pneg %p969
      %p1407 = pneg %p966
      %p1408 = scmp.lt.s32.totalorder %s82, 1
      %s1409 = scalar_select %p1408, %s82, 1
      %s1410 = smul.addr %s1409, 2
      %s1411 = smul.addr %s1410, 8
      %s1412 = scalar_lea.vmem %s67, %s1411
      %p1413 = scmp.lt.s32.totalorder %s82, 1
      %s1414 = scalar_select %p1413, %s82, 1
      %s1415 = smul.addr %s1414, 2
      %s1416 = smul.addr %s1415, 8
      %s1417 = scalar_lea.vmem %s1, %s1416
      %p1418 = scmp.lt.s32.totalorder %s82, 1
      %s1419 = scalar_select %p1418, %s82, 1
      %s1420 = scalar_lea.vmem %s3, %s1419
      %p1421 = scmp.lt.s32.totalorder %s82, 1
      %s1422 = scalar_select %p1421, %s82, 1
      %s1423 = smul.addr %s1422, 2
      %s1424 = smul.addr %s1423, 8
      %s1425 = scalar_lea.vmem %s5, %s1424
      %p1426 = scmp.lt.s32.totalorder %s83, 7
      %s1427 = scalar_select %p1426, %s83, 7
      %s1428 = scalar_lea.vmem %s7, %s1427
      %p1429 = scmp.lt.s32.totalorder %s83, 7
      %s1430 = scalar_select %p1429, %s83, 7
      %s1431 = scalar_lea.vmem %s9, %s1430
      %p1432 = scmp.lt.s32.totalorder %s83, 7
      %s1433 = scalar_select %p1432, %s83, 7
      %s1434 = smul.addr %s1433, 4
      %s1435 = smul.addr %s1434, 4
      %s1436 = scalar_lea.vmem %s11, %s1435
      %p1437 = scmp.lt.s32.totalorder %s83, 7
      %s1438 = scalar_select %p1437, %s83, 7
      %s1439 = scalar_lea.vmem %s13, %s1438
      %p1440 = scmp.lt.s32.totalorder %s83, 7
      %s1441 = scalar_select %p1440, %s83, 7
      %s1442 = smul.addr %s1441, 16
      %s1443 = smul.addr %s1442, 4
      %s1444 = scalar_lea.vmem %s15, %s1443
      %p1445 = scmp.lt.s32.totalorder %s83, 7
      %s1446 = scalar_select %p1445, %s83, 7
      %s1447 = scalar_lea.vmem %s17, %s1446
      %p1448 = scmp.lt.s32.totalorder %s83, 7
      %s1449 = scalar_select %p1448, %s83, 7
      %s1450 = scalar_lea.vmem %s19, %s1449
      %p1451 = scmp.lt.s32.totalorder %s83, 7
      %s1452 = scalar_select %p1451, %s83, 7
      %s1453 = scalar_lea.vmem %s21, %s1452
      %p1454 = scmp.lt.s32.totalorder %s83, 7
      %s1455 = scalar_select %p1454, %s83, 7
      %s1456 = smul.addr %s1455, 4
      %s1457 = smul.addr %s1456, 4
      %s1458 = scalar_lea.vmem %s23, %s1457
      %p1459 = scmp.lt.s32.totalorder %s83, 7
      %s1460 = scalar_select %p1459, %s83, 7
      %s1461 = smul.addr %s1460, 4
      %s1462 = smul.addr %s1461, 4
      %s1463 = scalar_lea.vmem %s25, %s1462
      %p1464 = scmp.lt.s32.totalorder %s83, 7
      %s1465 = scalar_select %p1464, %s83, 7
      %s1466 = scalar_lea.vmem %s27, %s1465
      %p1467 = scmp.lt.s32.totalorder %s83, 7
      %s1468 = scalar_select %p1467, %s83, 7
      %s1469 = scalar_lea.vmem %s29, %s1468
      %p1470 = scmp.lt.s32.totalorder %s83, 7
      %s1471 = scalar_select %p1470, %s83, 7
      %s1472 = scalar_lea.vmem %s31, %s1471
      %p1473 = scmp.lt.s32.totalorder %s83, 7
      %s1474 = scalar_select %p1473, %s83, 7
      %s1475 = smul.addr %s1474, 4
      %s1476 = smul.addr %s1475, 4
      %s1477 = scalar_lea.vmem %s33, %s1476
      %p1478 = scmp.lt.s32.totalorder %s83, 7
      %s1479 = scalar_select %p1478, %s83, 7
      %s1480 = scalar_lea.vmem %s35, %s1479
      %p1481 = scmp.lt.s32.totalorder %s83, 7
      %s1482 = scalar_select %p1481, %s83, 7
      %s1483 = smul.addr %s1482, 4
      %s1484 = smul.addr %s1483, 8
      %s1485 = scalar_lea.vmem %s37, %s1484
      %p1486 = scmp.lt.s32.totalorder %s83, 7
      %s1487 = scalar_select %p1486, %s83, 7
      %s1488 = scalar_lea.vmem %s39, %s1487
      %p1489 = scmp.lt.s32.totalorder %s83, 7
      %s1490 = scalar_select %p1489, %s83, 7
      %s1491 = scalar_lea.vmem %s41, %s1490
      %p1492 = scmp.lt.s32.totalorder %s83, 7
      %s1493 = scalar_select %p1492, %s83, 7
      %s1494 = scalar_lea.vmem %s43, %s1493
      %p1495 = scmp.lt.s32.totalorder %s83, 7
      %s1496 = scalar_select %p1495, %s83, 7
      %s1497 = smul.addr %s1496, 8
      %s1498 = smul.addr %s1497, 4
      %s1499 = scalar_lea.vmem %s45, %s1498
      %p1500 = scmp.lt.s32.totalorder %s83, 7
      %s1501 = scalar_select %p1500, %s83, 7
      %s1502 = scalar_lea.vmem %s47, %s1501
      %p1503 = scmp.lt.s32.totalorder %s83, 7
      %s1504 = scalar_select %p1503, %s83, 7
      %s1505 = scalar_lea.vmem %s49, %s1504
      %p1506 = scmp.lt.s32.totalorder %s83, 7
      %s1507 = scalar_select %p1506, %s83, 7
      %s1508 = scalar_lea.vmem %s51, %s1507
      %p1509 = scmp.lt.s32.totalorder %s83, 7
      %s1510 = scalar_select %p1509, %s83, 7
      %s1511 = smul.addr %s1510, 4
      %s1512 = smul.addr %s1511, 4
      %s1513 = scalar_lea.vmem %s53, %s1512
      %p1514 = scmp.lt.s32.totalorder %s83, 7
      %s1515 = scalar_select %p1514, %s83, 7
      %s1516 = scalar_lea.vmem %s55, %s1515
      %p1517 = scmp.lt.s32.totalorder %s83, 7
      %s1518 = scalar_select %p1517, %s83, 7
      %s1519 = smul.addr %s1518, 16
      %s1520 = smul.addr %s1519, 4
      %s1521 = scalar_lea.vmem %s57, %s1520
      %p1522 = scmp.lt.s32.totalorder %s83, 7
      %s1523 = scalar_select %p1522, %s83, 7
      %s1524 = scalar_lea.vmem %s59, %s1523
      %p1525 = scmp.lt.s32.totalorder %s83, 7
      %s1526 = scalar_select %p1525, %s83, 7
      %s1527 = scalar_lea.vmem %s61, %s1526
      %p1528 = scmp.lt.s32.totalorder %s83, 7
      %s1529 = scalar_select %p1528, %s83, 7
      %s1530 = scalar_lea.vmem %s63, %s1529
      %p1531 = scmp.lt.s32.totalorder %s83, 7
      %s1532 = scalar_select %p1531, %s83, 7
      %s1533 = smul.addr %s1532, 16
      %s1534 = smul.addr %s1533, 4
      %s1535 = scalar_lea.vmem %s65, %s1534
      %p1536 = scmp.lt.s32.totalorder %s82, 1
      %s1537 = scalar_select %p1536, %s82, 1
      %s1538 = smul.addr %s1537, 2
      %s1539 = smul.addr %s1538, 8
      %s1540 = scalar_lea.vmem %s67, %s1539
      %p1542 = scmp.eq.s32.totalorder %s83, 0
      // Predicated region
      $region153: #{vq_indexer_forward.4} parent=151 // pred_check
        %p1543 = pneg %p1542
      $region154: #{vq_indexer_forward.4} parent=151 // pred_check_branch
        %1545 = sbr.rel (%p1543) target = $region156
      $region155: #{vq_indexer_forward.4} parent=151 // pred_region
        %v1546 = vld [vmem:[%s1417] sm:$0xff]
        %v1547 = vld [vmem:[%s1417 + $0x8] sm:$0xff]
        %vm1548 = vcmask 261120
        %1549 = vst.msk [vmem:[#allocation2] sm:$0xff] %vm1548, %v1546
        %1550 = vst.msk [vmem:[#allocation2 + $0x8] sm:$0xff] %vm1548, %v1547
      $region156: #{vq_indexer_forward.4} parent=151 // pred_fallthru
        _
      %v1551 = vld [vmem:[#allocation2] sm:$0xff]
      %v1552 = vld [vmem:[#allocation2 + $0x8] sm:$0xff]
      %v1553 = vld [vmem:[%s1428] sm:$0x1]
      %v1554 = vld [vmem:[%s1431] sm:$0x1]
      %v1555 = vld [vmem:[%s1436] sm:$0xf]
      %v1556 = vld [vmem:[%s1436 + $0x4] sm:$0xf]
      %v1557 = vld [vmem:[%s1436 + $0x8] sm:$0xf]
      %v1558 = vld [vmem:[%s1436 + $0xc] sm:$0xf]
      %v1559 = vld [vmem:[%s1439] sm:$0x1]
      %v1560 = vld [vmem:[%s1444] sm:$0xf]
      %v1561 = vld [vmem:[%s1444 + $0x4] sm:$0xf]
      %v1562 = vld [vmem:[%s1444 + $0x8] sm:$0xf]
      %v1563 = vld [vmem:[%s1444 + $0xc] sm:$0xf]
      %v1564 = vld [vmem:[%s1444 + $0x10] sm:$0xf]
      %v1565 = vld [vmem:[%s1444 + $0x14] sm:$0xf]
      %v1566 = vld [vmem:[%s1444 + $0x18] sm:$0xf]
      %v1567 = vld [vmem:[%s1444 + $0x1c] sm:$0xf]
      %v1568 = vld [vmem:[%s1444 + $0x20] sm:$0xf]
      %v1569 = vld [vmem:[%s1444 + $0x24] sm:$0xf]
      %v1570 = vld [vmem:[%s1444 + $0x28] sm:$0xf]
      %v1571 = vld [vmem:[%s1444 + $0x2c] sm:$0xf]
      %v1572 = vld [vmem:[%s1444 + $0x30] sm:$0xf]
      %v1573 = vld [vmem:[%s1444 + $0x34] sm:$0xf]
      %v1574 = vld [vmem:[%s1444 + $0x38] sm:$0xf]
      %v1575 = vld [vmem:[%s1444 + $0x3c] sm:$0xf]
      %v1576 = vld [vmem:[%s1447] sm:$0x1]
      %vm1577 = vcmask 261120
      %v1578 = vsel %vm1577, %v1551, 0.0
      %1579 = vadd.xlane.f32.xlu0 %v1578
      %v1580 = vpop.xlane.xlu0 %1579
      %v1581 = vsel %vm1577, %v1552, 0.0
      %1582 = vadd.xlane.f32.xlu0 %v1581
      %v1583 = vpop.xlane.xlu0 %1582
      %v1584 = vrcp.pop 32.0
      %v1585 = vmul.f32 32.0, %v1584
      %v1586 = vsub.f32 1.0, %v1585
      %v1587 = vmul.f32 %v1584, %v1586
      %v1588 = vadd.f32 %v1584, %v1587
      %vm1589 = vweird.f32 %v1584
      %v1590 = vsel %vm1589, %v1584, %v1588
      %v1591 = vmul.f32 %v1580, %v1590
      %v1592 = vmul.f32 %v1583, %v1590
      %v1593 = vsub.f32 %v1551, %v1591
      %v1594 = vsub.f32 %v1552, %v1592
      %v1595 = vmul.f32 %v1593, %v1593
      %v1596 = vmul.f32 %v1594, %v1594
      %v1597 = vsel %vm1577, %v1595, 0.0
      %1598 = vadd.xlane.f32.xlu0 %v1597
      %v1599 = vpop.xlane.xlu0 %1598
      %v1600 = vsel %vm1577, %v1596, 0.0
      %1601 = vadd.xlane.f32.xlu0 %v1600
      %v1602 = vpop.xlane.xlu0 %1601
      %v1603 = vmul.f32 %v1599, %v1590
      %v1604 = vmul.f32 %v1602, %v1590
      %v1605 = vadd.f32 %v1603, 1e-05
      %v1606 = vadd.f32 %v1604, 1e-05
      %v1607 = vrsqrt.pop %v1605
      %v1608 = vmul.f32 %v1607, %v1605
      %v1609 = vmul.f32 %v1608, %v1607
      %v1610 = vmul.f32 0.5, %v1609
      %v1611 = vsub.f32 1.5, %v1610
      %v1612 = vmul.f32 %v1607, %v1611
      %vm1613 = vweird.f32 %v1605
      %vm1614 = vweird.f32 %v1607
      %vm1615 = vmor %vm1613, %vm1614
      %v1616 = vsel %vm1615, %v1607, %v1612
      %v1617 = vrsqrt.pop %v1606
      %v1618 = vmul.f32 %v1617, %v1606
      %v1619 = vmul.f32 %v1618, %v1617
      %v1620 = vmul.f32 0.5, %v1619
      %v1621 = vsub.f32 1.5, %v1620
      %v1622 = vmul.f32 %v1617, %v1621
      %vm1623 = vweird.f32 %v1606
      %vm1624 = vweird.f32 %v1617
      %vm1625 = vmor %vm1623, %vm1624
      %v1626 = vsel %vm1625, %v1617, %v1622
      %v1627 = vmul.f32 %v1593, %v1616
      %v1628 = vmul.f32 %v1594, %v1626
      %v1630 = vperm.slane %v1553, 0
      %v1632 = vmul.f32 %v1627, %v1630
      %v1633 = vmul.f32 %v1628, %v1630
      %v1635 = vperm.slane %v1554, 0
      %v1637 = vadd.f32 %v1632, %v1635
      %v1638 = vadd.f32 %v1633, %v1635
      %v1639 = vpack.c.bf16 %v1638, %v1637
      %v1641 = vperm.slane %v1559, 0
      %v1647 = vunpack.c.l.b16 %v1555
      %v1648 = vunpack.c.l.b16 %v1556
      %v1649 = vunpack.c.l.b16 %v1557
      %v1650 = vunpack.c.l.b16 %v1558
      %v1651 = vpack.c.b16 %v1648, %v1647
      %v1652 = vpack.c.b16 %v1650, %v1649
      %v1656 = vsel %vm1577, %v1639, 0
      %1658 = vmatpush.bf16.msra.mxu0 0
      %1659 = vmatpush.bf16.msra.mxu0 0
      %1660 = vmatpush.bf16.msra.mxu0 0
      %1661 = vmatpush.bf16.msra.mxu0 0
      %1662 = vmatpush.bf16.msra.mxu0 0
      %1663 = vmatpush.bf16.msra.mxu0 0
      %1664 = vmatpush.bf16.msra.mxu0 %v1652
      %1665 = vmatpush.bf16.msra.mxu0 %v1651
      %1666 = vmatmul.bf16.gmra.mxu0 %v1656
      %v1667 = vpop.f32.mrf.mxu0
      %v1668 = vadd.f32 %v1641, %v1667
      %v1669 = vpop.f32.mrf.mxu0
      %v1670 = vadd.f32 %v1641, %v1669
      %1671 = vdwg.mxu0
      %v1672 = vxor.u32 %v1668, 2147483648
      %v1673 = vxor.u32 %v1670, 2147483648
      %v1674 = vmul.f32 %v1672, 1.442695
      %v1675 = vpow.pop %v1674
      %v1676 = vmul.f32 %v1673, 1.442695
      %v1677 = vpow.pop %v1676
      %v1678 = vadd.f32 %v1675, 1.0
      %v1679 = vadd.f32 %v1677, 1.0
      %v1680 = vrcp.pop %v1678
      %v1681 = vmul.f32 %v1678, %v1680
      %v1682 = vsub.f32 1.0, %v1681
      %v1683 = vmul.f32 %v1680, %v1682
      %v1684 = vadd.f32 %v1680, %v1683
      %vm1685 = vweird.f32 %v1678
      %vm1686 = vweird.f32 %v1680
      %vm1687 = vmor %vm1685, %vm1686
      %v1688 = vsel %vm1687, %v1680, %v1684
      %v1689 = vand.u32 2147483647, %v1678
      %vm1690 = vcmp.eq.f32.partialorder %v1689, 8.507059e+37
      %v1691 = vand.u32 %v1678, 2147483648
      %v1692 = vor.u32 1.1754944e-38, %v1691
      %v1693 = vsel %vm1690, %v1692, %v1688
      %v1694 = vmul.f32 1.0, %v1693
      %v1695 = vrcp.pop %v1679
      %v1696 = vmul.f32 %v1679, %v1695
      %v1697 = vsub.f32 1.0, %v1696
      %v1698 = vmul.f32 %v1695, %v1697
      %v1699 = vadd.f32 %v1695, %v1698
      %vm1700 = vweird.f32 %v1679
      %vm1701 = vweird.f32 %v1695
      %vm1702 = vmor %vm1700, %vm1701
      %v1703 = vsel %vm1702, %v1695, %v1699
      %v1704 = vand.u32 2147483647, %v1679
      %vm1705 = vcmp.eq.f32.partialorder %v1704, 8.507059e+37
      %v1706 = vand.u32 %v1679, 2147483648
      %v1707 = vor.u32 1.1754944e-38, %v1706
      %v1708 = vsel %vm1705, %v1707, %v1703
      %v1709 = vmul.f32 1.0, %v1708
      %v1710 = vmul.f32 %v1668, %v1694
      %v1711 = vmul.f32 %v1670, %v1709
      %v1712 = vpack.c.bf16 %v1711, %v1710
      %v1714 = vperm.slane %v1576, 0
      %v1732 = vunpack.c.l.b16 %v1560
      %v1733 = vunpack.c.l.b16 %v1561
      %v1734 = vunpack.c.l.b16 %v1562
      %v1735 = vunpack.c.l.b16 %v1563
      %v1736 = vunpack.c.l.b16 %v1564
      %v1737 = vunpack.c.l.b16 %v1565
      %v1738 = vunpack.c.l.b16 %v1566
      %v1739 = vunpack.c.l.b16 %v1567
      %v1740 = vunpack.c.l.b16 %v1568
      %v1741 = vunpack.c.l.b16 %v1569
      %v1742 = vunpack.c.l.b16 %v1570
      %v1743 = vunpack.c.l.b16 %v1571
      %v1744 = vunpack.c.l.b16 %v1572
      %v1745 = vunpack.c.l.b16 %v1573
      %v1746 = vunpack.c.l.b16 %v1574
      %v1747 = vunpack.c.l.b16 %v1575
      %v1748 = vpack.c.b16 %v1733, %v1732
      %v1749 = vpack.c.b16 %v1735, %v1734
      %v1750 = vpack.c.b16 %v1737, %v1736
      %v1751 = vpack.c.b16 %v1739, %v1738
      %v1752 = vpack.c.b16 %v1741, %v1740
      %v1753 = vpack.c.b16 %v1743, %v1742
      %v1754 = vpack.c.b16 %v1745, %v1744
      %v1755 = vpack.c.b16 %v1747, %v1746
      %1764 = vmatpush.bf16.msra.mxu0 %v1755
      %1765 = vmatpush.bf16.msra.mxu0 %v1754
      %1766 = vmatpush.bf16.msra.mxu0 %v1753
      %1767 = vmatpush.bf16.msra.mxu0 %v1752
      %1768 = vmatpush.bf16.msra.mxu0 %v1751
      %1769 = vmatpush.bf16.msra.mxu0 %v1750
      %1770 = vmatpush.bf16.msra.mxu0 %v1749
      %1771 = vmatpush.bf16.msra.mxu0 %v1748
      %1772 = vmatmul.bf16.gmra.mxu0 %v1712
      %v1773 = vpop.f32.mrf.mxu0
      %v1774 = vadd.f32 %v1714, %v1773
      %v1775 = vpop.f32.mrf.mxu0
      %v1776 = vadd.f32 %v1714, %v1775
      %1777 = vdwg.mxu0
      %v1778 = vmul.f32 %v1774, 0.5
      %v1779 = vmul.f32 %v1776, 0.5
      %v1780 = vadd.f32 %v1551, %v1778
      %v1781 = vadd.f32 %v1552, %v1779
      %v1782 = vld [vmem:[%s1425] sm:$0xff]
      %v1783 = vld [vmem:[%s1425 + $0x8] sm:$0xff]
      %v1784 = vld [vmem:[%s1420] sm:$0x1]
      %1786 = vset.pattern.permute.xlu0 0
      %1787 = vperm.xlu0 %1786, %v1782
      %v1788 = vpop.permute.xlu0 %1787
      %1791 = vset.pattern.permute.xlu0 0
      %1792 = vperm.xlu0 %1791, %v1783
      %v1793 = vpop.permute.xlu0 %1792
      %v1796 = vperm.slane %v1784, 0
      %v1798 = vmul.f32 %v1788, %v1796
      %v1799 = vmul.f32 %v1793, %v1796
      %vm1800 = vcmp.gt.f32.partialorder %v1798, 0.5
      %vm1801 = vcmp.gt.f32.partialorder %v1799, 0.5
      %v1802 = vsel %vm1800, 0.0, -1e+30
      %v1803 = vsel %vm1801, 0.0, -1e+30
      %v1804 = vld [vmem:[%s1450] sm:$0x1]
      %v1805 = vld [vmem:[%s1453] sm:$0x1]
      %v1806 = vld [vmem:[%s1458] sm:$0xf]
      %v1807 = vld [vmem:[%s1458 + $0x4] sm:$0xf]
      %v1808 = vld [vmem:[%s1458 + $0x8] sm:$0xf]
      %v1809 = vld [vmem:[%s1458 + $0xc] sm:$0xf]
      %v1810 = vld [vmem:[%s1463] sm:$0xf]
      %v1811 = vld [vmem:[%s1463 + $0x4] sm:$0xf]
      %v1812 = vld [vmem:[%s1463 + $0x8] sm:$0xf]
      %v1813 = vld [vmem:[%s1463 + $0xc] sm:$0xf]
      %v1814 = vld [vmem:[%s1466] sm:$0x1]
      %v1815 = vld [vmem:[%s1535] sm:$0xf]
      %v1816 = vld [vmem:[%s1535 + $0x4] sm:$0xf]
      %v1817 = vld [vmem:[%s1535 + $0x8] sm:$0xf]
      %v1818 = vld [vmem:[%s1535 + $0xc] sm:$0xf]
      %v1819 = vld [vmem:[%s1535 + $0x10] sm:$0xf]
      %v1820 = vld [vmem:[%s1535 + $0x14] sm:$0xf]
      %v1821 = vld [vmem:[%s1535 + $0x18] sm:$0xf]
      %v1822 = vld [vmem:[%s1535 + $0x1c] sm:$0xf]
      %v1823 = vld [vmem:[%s1535 + $0x20] sm:$0xf]
      %v1824 = vld [vmem:[%s1535 + $0x24] sm:$0xf]
      %v1825 = vld [vmem:[%s1535 + $0x28] sm:$0xf]
      %v1826 = vld [vmem:[%s1535 + $0x2c] sm:$0xf]
      %v1827 = vld [vmem:[%s1535 + $0x30] sm:$0xf]
      %v1828 = vld [vmem:[%s1535 + $0x34] sm:$0xf]
      %v1829 = vld [vmem:[%s1535 + $0x38] sm:$0xf]
      %v1830 = vld [vmem:[%s1535 + $0x3c] sm:$0xf]
      %v1831 = vsel %vm1577, %v1780, 0.0
      %1832 = vadd.xlane.f32.xlu0 %v1831
      %v1833 = vpop.xlane.xlu0 %1832
      %v1834 = vsel %vm1577, %v1781, 0.0
      %1835 = vadd.xlane.f32.xlu0 %v1834
      %v1836 = vpop.xlane.xlu0 %1835
      %v1837 = vmul.f32 %v1833, %v1590
      %v1838 = vmul.f32 %v1836, %v1590
      %v1839 = vsub.f32 %v1780, %v1837
      %v1840 = vsub.f32 %v1781, %v1838
      %v1841 = vmul.f32 %v1839, %v1839
      %v1842 = vmul.f32 %v1840, %v1840
      %v1843 = vsel %vm1577, %v1841, 0.0
      %1844 = vadd.xlane.f32.xlu0 %v1843
      %v1845 = vpop.xlane.xlu0 %1844
      %v1846 = vsel %vm1577, %v1842, 0.0
      %1847 = vadd.xlane.f32.xlu0 %v1846
      %v1848 = vpop.xlane.xlu0 %1847
      %v1849 = vmul.f32 %v1845, %v1590
      %v1850 = vmul.f32 %v1848, %v1590
      %v1851 = vadd.f32 %v1849, 1e-05
      %v1852 = vadd.f32 %v1850, 1e-05
      %v1853 = vrsqrt.pop %v1851
      %v1854 = vmul.f32 %v1853, %v1851
      %v1855 = vmul.f32 %v1854, %v1853
      %v1856 = vmul.f32 0.5, %v1855
      %v1857 = vsub.f32 1.5, %v1856
      %v1858 = vmul.f32 %v1853, %v1857
      %vm1859 = vweird.f32 %v1851
      %vm1860 = vweird.f32 %v1853
      %vm1861 = vmor %vm1859, %vm1860
      %v1862 = vsel %vm1861, %v1853, %v1858
      %v1863 = vrsqrt.pop %v1852
      %v1864 = vmul.f32 %v1863, %v1852
      %v1865 = vmul.f32 %v1864, %v1863
      %v1866 = vmul.f32 0.5, %v1865
      %v1867 = vsub.f32 1.5, %v1866
      %v1868 = vmul.f32 %v1863, %v1867
      %vm1869 = vweird.f32 %v1852
      %vm1870 = vweird.f32 %v1863
      %vm1871 = vmor %vm1869, %vm1870
      %v1872 = vsel %vm1871, %v1863, %v1868
      %v1873 = vmul.f32 %v1839, %v1862
      %v1874 = vmul.f32 %v1840, %v1872
      %v1876 = vperm.slane %v1804, 0
      %v1878 = vmul.f32 %v1873, %v1876
      %v1879 = vmul.f32 %v1874, %v1876
      %v1881 = vperm.slane %v1805, 0
      %v1883 = vadd.f32 %v1878, %v1881
      %v1884 = vadd.f32 %v1879, %v1881
      %v1885 = vpack.c.bf16 %v1884, %v1883
      %v1890 = vunpack.c.l.b16 %v1806
      %v1891 = vunpack.c.l.b16 %v1807
      %v1892 = vunpack.c.l.b16 %v1808
      %v1893 = vunpack.c.l.b16 %v1809
      %v1894 = vpack.c.b16 %v1891, %v1890
      %v1895 = vpack.c.b16 %v1893, %v1892
      %v1899 = vsel %vm1577, %v1885, 0
      %1901 = vmatpush.bf16.msra.mxu0 0
      %1902 = vmatpush.bf16.msra.mxu0 0
      %1903 = vmatpush.bf16.msra.mxu0 0
      %1904 = vmatpush.bf16.msra.mxu0 0
      %1905 = vmatpush.bf16.msra.mxu0 0
      %1906 = vmatpush.bf16.msra.mxu0 0
      %1907 = vmatpush.bf16.msra.mxu0 %v1895
      %1908 = vmatpush.bf16.msra.mxu0 %v1894
      %1909 = vmatmul.bf16.gmra.mxu0 %v1899
      %v1910 = vpop.f32.mrf.mxu0
      %v1911 = vadd.f32 0.0, %v1910
      %v1912 = vpop.f32.mrf.mxu0
      %v1913 = vadd.f32 0.0, %v1912
      %1914 = vdwg.mxu0
      %v1915 = vpack.c.bf16 %v1911, %v1911
      %v1916 = vpack.c.bf16 %v1913, %v1913
      %v1919 = vunpack.c.l.b16 %v1915
      %v1920 = vunpack.c.l.b16 %v1916
      %v1921 = vpack.c.b16 %v1920, %v1919
      %v1938 = vunpack.c.l.b16 %v1815
      %v1939 = vunpack.c.l.b16 %v1816
      %v1940 = vunpack.c.l.b16 %v1817
      %v1941 = vunpack.c.l.b16 %v1818
      %v1942 = vunpack.c.l.b16 %v1819
      %v1943 = vunpack.c.l.b16 %v1820
      %v1944 = vunpack.c.l.b16 %v1821
      %v1945 = vunpack.c.l.b16 %v1822
      %v1946 = vunpack.c.l.b16 %v1823
      %v1947 = vunpack.c.l.b16 %v1824
      %v1948 = vunpack.c.l.b16 %v1825
      %v1949 = vunpack.c.l.b16 %v1826
      %v1950 = vunpack.c.l.b16 %v1827
      %v1951 = vunpack.c.l.b16 %v1828
      %v1952 = vunpack.c.l.b16 %v1829
      %v1953 = vunpack.c.l.b16 %v1830
      %v1954 = vpack.c.b16 %v1939, %v1938
      %v1955 = vpack.c.b16 %v1941, %v1940
      %v1956 = vpack.c.b16 %v1943, %v1942
      %v1957 = vpack.c.b16 %v1945, %v1944
      %v1958 = vpack.c.b16 %v1947, %v1946
      %v1959 = vpack.c.b16 %v1949, %v1948
      %v1960 = vpack.c.b16 %v1951, %v1950
      %v1961 = vpack.c.b16 %v1953, %v1952
      %vm1962 = vcmask 64512
      %v1964 = vsel %vm1962, %v1921, 0
      %v1967 = vsel %vm1962, %v1954, 0
      %v1970 = vsel %vm1962, %v1955, 0
      %v1973 = vsel %vm1962, %v1956, 0
      %v1976 = vsel %vm1962, %v1957, 0
      %v1979 = vsel %vm1962, %v1958, 0
      %v1982 = vsel %vm1962, %v1959, 0
      %v1985 = vsel %vm1962, %v1960, 0
      %v1988 = vsel %vm1962, %v1961, 0
      %1990 = vmatpush.bf16.xpose.msra.mxu0 %v1988
      %1991 = vmatpush.bf16.xpose.msra.mxu0 %v1985
      %1992 = vmatpush.bf16.xpose.msra.mxu0 %v1982
      %1993 = vmatpush.bf16.xpose.msra.mxu0 %v1979
      %1994 = vmatpush.bf16.xpose.msra.mxu0 %v1976
      %1995 = vmatpush.bf16.xpose.msra.mxu0 %v1973
      %1996 = vmatpush.bf16.xpose.msra.mxu0 %v1970
      %1997 = vmatpush.bf16.xpose.msra.mxu0 %v1967
      %1998 = vmatmul.bf16.gmra.mxu0 %v1964
      %v1999 = vpop.f32.mrf.mxu0
      %v2000 = vadd.f32 0.0, %v1999
      %v2001 = vpop.f32.mrf.mxu0
      %v2002 = vadd.f32 0.0, %v2001
      %2003 = vdwg.mxu0
      %s2005 = sor.u32 256, 113
      %2006 = vrot.lane.b32.xlu0 %v2000, %s2005
      %v2007 = vpop.permute.xlu0 %2006
      %s2009 = sor.u32 256, 121
      %2010 = vrot.lane.b32.xlu0 %v2002, %s2009
      %v2011 = vpop.permute.xlu0 %2010
      %2012 = vrot.lane.b32.xlu0 %v1921, 96
      %v2013 = vpop.permute.xlu0 %2012
      %v2015 = vsel %vm1962, %v2013, 0
      %2017 = vmatpush.bf16.xpose.msra.mxu0 0
      %2018 = vmatpush.bf16.xpose.msra.mxu0 0
      %2019 = vmatpush.bf16.xpose.msra.mxu0 0
      %2020 = vmatpush.bf16.xpose.msra.mxu0 0
      %2021 = vmatpush.bf16.xpose.msra.mxu0 0
      %2022 = vmatpush.bf16.xpose.msra.mxu0 0
      %2023 = vmatpush.bf16.xpose.msra.mxu0 0
      %2024 = vmatpush.bf16.xpose.msra.mxu0 %v2015
      %2025 = vmatmul.bf16.gmra.mxu0 %v1964
      %v2026 = vpop.f32.mrf.mxu0
      %v2027 = vadd.f32 %v2007, %v2026
      %v2028 = vpop.f32.mrf.mxu0
      %v2029 = vadd.f32 %v2011, %v2028
      %2030 = vdwg.mxu0
      %v2031 = vadd.f32 %v2027, %v1802
      %v2032 = vadd.f32 %v2029, %v1803
      %vm2033 = vcmask 130048
      %v2034 = vsel %vm2033, %v2031, -inf
      %2035 = vmax.xlane.f32.xlu0 %v2034
      %v2036 = vpop.xlane.xlu0 %2035
      %v2037 = vsel %vm2033, %v2032, -inf
      %2038 = vmax.xlane.f32.xlu0 %v2037
      %v2039 = vpop.xlane.xlu0 %2038
      %v2040 = vsub.f32 %v2031, %v2036
      %v2041 = vsub.f32 %v2032, %v2039
      %v2042 = vmul.f32 %v2040, 1.442695
      %v2043 = vpow.pop %v2042
      %v2044 = vmul.f32 %v2041, 1.442695
      %v2045 = vpow.pop %v2044
      %v2046 = vsel %vm2033, %v2043, 0.0
      %2047 = vadd.xlane.f32.xlu0 %v2046
      %v2048 = vpop.xlane.xlu0 %2047
      %v2049 = vsel %vm2033, %v2045, 0.0
      %2050 = vadd.xlane.f32.xlu0 %v2049
      %v2051 = vpop.xlane.xlu0 %2050
      %v2052 = vrcp.pop %v2048
      %v2053 = vmul.f32 %v2048, %v2052
      %v2054 = vsub.f32 1.0, %v2053
      %v2055 = vmul.f32 %v2052, %v2054
      %v2056 = vadd.f32 %v2052, %v2055
      %vm2057 = vweird.f32 %v2048
      %vm2058 = vweird.f32 %v2052
      %vm2059 = vmor %vm2057, %vm2058
      %v2060 = vsel %vm2059, %v2052, %v2056
      %v2061 = vand.u32 2147483647, %v2048
      %vm2062 = vcmp.eq.f32.partialorder %v2061, 8.507059e+37
      %v2063 = vand.u32 %v2048, 2147483648
      %v2064 = vor.u32 1.1754944e-38, %v2063
      %v2065 = vsel %vm2062, %v2064, %v2060
      %v2066 = vmul.f32 %v2043, %v2065
      %v2067 = vrcp.pop %v2051
      %v2068 = vmul.f32 %v2051, %v2067
      %v2069 = vsub.f32 1.0, %v2068
      %v2070 = vmul.f32 %v2067, %v2069
      %v2071 = vadd.f32 %v2067, %v2070
      %vm2072 = vweird.f32 %v2051
      %vm2073 = vweird.f32 %v2067
      %vm2074 = vmor %vm2072, %vm2073
      %v2075 = vsel %vm2074, %v2067, %v2071
      %v2076 = vand.u32 2147483647, %v2051
      %vm2077 = vcmp.eq.f32.partialorder %v2076, 8.507059e+37
      %v2078 = vand.u32 %v2051, 2147483648
      %v2079 = vor.u32 1.1754944e-38, %v2078
      %v2080 = vsel %vm2077, %v2079, %v2075
      %v2081 = vmul.f32 %v2045, %v2080
      %v2082 = vpack.c.bf16 %v2081, %v2066
      %2083 = vrot.lane.b32.xlu0 %v1921, 64
      %v2084 = vpop.permute.xlu0 %2083
      %v2087 = vsel %vm2033, %v2082, 0
      %2089 = vmatpush.bf16.msra.mxu0 0
      %2090 = vmatpush.bf16.msra.mxu0 0
      %2091 = vmatpush.bf16.msra.mxu0 0
      %2092 = vmatpush.bf16.msra.mxu0 0
      %2093 = vmatpush.bf16.msra.mxu0 0
      %2094 = vmatpush.bf16.msra.mxu0 0
      %2095 = vmatpush.bf16.msra.mxu0 0
      %2096 = vmatpush.bf16.msra.mxu0 %v2084
      %2097 = vmatmul.bf16.gmra.mxu0 %v2087
      %v2098 = vpop.f32.mrf.mxu0
      %v2099 = vadd.f32 0.0, %v2098
      %v2100 = vpop.f32.mrf.mxu0
      %v2101 = vadd.f32 0.0, %v2100
      %2102 = vdwg.mxu0
      %2103 = vrot.lane.b32.xlu0 %v1921, 120
      %v2104 = vpop.permute.xlu0 %2103
      %v2106 = vsel %vm1962, %v2104, 0
      %2108 = vmatpush.bf16.xpose.msra.mxu0 %v1988
      %2109 = vmatpush.bf16.xpose.msra.mxu0 %v1985
      %2110 = vmatpush.bf16.xpose.msra.mxu0 %v1982
      %2111 = vmatpush.bf16.xpose.msra.mxu0 %v1979
      %2112 = vmatpush.bf16.xpose.msra.mxu0 %v1976
      %2113 = vmatpush.bf16.xpose.msra.mxu0 %v1973
      %2114 = vmatpush.bf16.xpose.msra.mxu0 %v1970
      %2115 = vmatpush.bf16.xpose.msra.mxu0 %v1967
      %2116 = vmatmul.bf16.gmra.mxu0 %v2106
      %v2117 = vpop.f32.mrf.mxu0
      %v2118 = vadd.f32 0.0, %v2117
      %v2119 = vpop.f32.mrf.mxu0
      %v2120 = vadd.f32 0.0, %v2119
      %2121 = vdwg.mxu0
      %s2123 = sor.u32 256, 113
      %2124 = vrot.lane.b32.xlu0 %v2118, %s2123
      %v2125 = vpop.permute.xlu0 %2124
      %s2127 = sor.u32 256, 121
      %2128 = vrot.lane.b32.xlu0 %v2120, %s2127
      %v2129 = vpop.permute.xlu0 %2128
      %2130 = vrot.lane.b32.xlu0 %v1921, 88
      %v2131 = vpop.permute.xlu0 %2130
      %v2133 = vsel %vm1962, %v2131, 0
      %2135 = vmatpush.bf16.xpose.msra.mxu0 0
      %2136 = vmatpush.bf16.xpose.msra.mxu0 0
      %2137 = vmatpush.bf16.xpose.msra.mxu0 0
      %2138 = vmatpush.bf16.xpose.msra.mxu0 0
      %2139 = vmatpush.bf16.xpose.msra.mxu0 0
      %2140 = vmatpush.bf16.xpose.msra.mxu0 0
      %2141 = vmatpush.bf16.xpose.msra.mxu0 0
      %2142 = vmatpush.bf16.xpose.msra.mxu0 %v2133
      %2143 = vmatmul.bf16.gmra.mxu0 %v2106
      %v2144 = vpop.f32.mrf.mxu0
      %v2145 = vadd.f32 %v2125, %v2144
      %v2146 = vpop.f32.mrf.mxu0
      %v2147 = vadd.f32 %v2129, %v2146
      %2148 = vdwg.mxu0
      %v2149 = vadd.f32 %v2145, %v1802
      %v2150 = vadd.f32 %v2147, %v1803
      %v2151 = vsel %vm2033, %v2149, -inf
      %2152 = vmax.xlane.f32.xlu0 %v2151
      %v2153 = vpop.xlane.xlu0 %2152
      %v2154 = vsel %vm2033, %v2150, -inf
      %2155 = vmax.xlane.f32.xlu0 %v2154
      %v2156 = vpop.xlane.xlu0 %2155
      %v2157 = vsub.f32 %v2149, %v2153
      %v2158 = vsub.f32 %v2150, %v2156
      %v2159 = vmul.f32 %v2157, 1.442695
      %v2160 = vpow.pop %v2159
      %v2161 = vmul.f32 %v2158, 1.442695
      %v2162 = vpow.pop %v2161
      %v2163 = vsel %vm2033, %v2160, 0.0
      %2164 = vadd.xlane.f32.xlu0 %v2163
      %v2165 = vpop.xlane.xlu0 %2164
      %v2166 = vsel %vm2033, %v2162, 0.0
      %2167 = vadd.xlane.f32.xlu0 %v2166
      %v2168 = vpop.xlane.xlu0 %2167
      %v2169 = vrcp.pop %v2165
      %v2170 = vmul.f32 %v2165, %v2169
      %v2171 = vsub.f32 1.0, %v2170
      %v2172 = vmul.f32 %v2169, %v2171
      %v2173 = vadd.f32 %v2169, %v2172
      %vm2174 = vweird.f32 %v2165
      %vm2175 = vweird.f32 %v2169
      %vm2176 = vmor %vm2174, %vm2175
      %v2177 = vsel %vm2176, %v2169, %v2173
      %v2178 = vand.u32 2147483647, %v2165
      %vm2179 = vcmp.eq.f32.partialorder %v2178, 8.507059e+37
      %v2180 = vand.u32 %v2165, 2147483648
      %v2181 = vor.u32 1.1754944e-38, %v2180
      %v2182 = vsel %vm2179, %v2181, %v2177
      %v2183 = vmul.f32 %v2160, %v2182
      %v2184 = vrcp.pop %v2168
      %v2185 = vmul.f32 %v2168, %v2184
      %v2186 = vsub.f32 1.0, %v2185
      %v2187 = vmul.f32 %v2184, %v2186
      %v2188 = vadd.f32 %v2184, %v2187
      %vm2189 = vweird.f32 %v2168
      %vm2190 = vweird.f32 %v2184
      %vm2191 = vmor %vm2189, %vm2190
      %v2192 = vsel %vm2191, %v2184, %v2188
      %v2193 = vand.u32 2147483647, %v2168
      %vm2194 = vcmp.eq.f32.partialorder %v2193, 8.507059e+37
      %v2195 = vand.u32 %v2168, 2147483648
      %v2196 = vor.u32 1.1754944e-38, %v2195
      %v2197 = vsel %vm2194, %v2196, %v2192
      %v2198 = vmul.f32 %v2162, %v2197
      %v2199 = vpack.c.bf16 %v2198, %v2183
      %2200 = vrot.lane.b32.xlu0 %v1921, 56
      %v2201 = vpop.permute.xlu0 %2200
      %v2204 = vsel %vm2033, %v2199, 0
      %2206 = vmatpush.bf16.msra.mxu0 0
      %2207 = vmatpush.bf16.msra.mxu0 0
      %2208 = vmatpush.bf16.msra.mxu0 0
      %2209 = vmatpush.bf16.msra.mxu0 0
      %2210 = vmatpush.bf16.msra.mxu0 0
      %2211 = vmatpush.bf16.msra.mxu0 0
      %2212 = vmatpush.bf16.msra.mxu0 0
      %2213 = vmatpush.bf16.msra.mxu0 %v2201
      %2214 = vmatmul.bf16.gmra.mxu0 %v2204
      %v2215 = vpop.f32.mrf.mxu0
      %v2216 = vadd.f32 0.0, %v2215
      %v2217 = vpop.f32.mrf.mxu0
      %v2218 = vadd.f32 0.0, %v2217
      %2219 = vdwg.mxu0
      %2220 = vrot.lane.b32.xlu0 %v1921, 112
      %v2221 = vpop.permute.xlu0 %2220
      %v2223 = vsel %vm1962, %v2221, 0
      %2225 = vmatpush.bf16.xpose.msra.mxu0 %v1988
      %2226 = vmatpush.bf16.xpose.msra.mxu0 %v1985
      %2227 = vmatpush.bf16.xpose.msra.mxu0 %v1982
      %2228 = vmatpush.bf16.xpose.msra.mxu0 %v1979
      %2229 = vmatpush.bf16.xpose.msra.mxu0 %v1976
      %2230 = vmatpush.bf16.xpose.msra.mxu0 %v1973
      %2231 = vmatpush.bf16.xpose.msra.mxu0 %v1970
      %2232 = vmatpush.bf16.xpose.msra.mxu0 %v1967
      %2233 = vmatmul.bf16.gmra.mxu0 %v2223
      %v2234 = vpop.f32.mrf.mxu0
      %v2235 = vadd.f32 0.0, %v2234
      %v2236 = vpop.f32.mrf.mxu0
      %v2237 = vadd.f32 0.0, %v2236
      %2238 = vdwg.mxu0
      %s2240 = sor.u32 256, 113
      %2241 = vrot.lane.b32.xlu0 %v2235, %s2240
      %v2242 = vpop.permute.xlu0 %2241
      %s2244 = sor.u32 256, 121
      %2245 = vrot.lane.b32.xlu0 %v2237, %s2244
      %v2246 = vpop.permute.xlu0 %2245
      %2247 = vrot.lane.b32.xlu0 %v1921, 80
      %v2248 = vpop.permute.xlu0 %2247
      %v2250 = vsel %vm1962, %v2248, 0
      %2252 = vmatpush.bf16.xpose.msra.mxu0 0
      %2253 = vmatpush.bf16.xpose.msra.mxu0 0
      %2254 = vmatpush.bf16.xpose.msra.mxu0 0
      %2255 = vmatpush.bf16.xpose.msra.mxu0 0
      %2256 = vmatpush.bf16.xpose.msra.mxu0 0
      %2257 = vmatpush.bf16.xpose.msra.mxu0 0
      %2258 = vmatpush.bf16.xpose.msra.mxu0 0
      %2259 = vmatpush.bf16.xpose.msra.mxu0 %v2250
      %2260 = vmatmul.bf16.gmra.mxu0 %v2223
      %v2261 = vpop.f32.mrf.mxu0
      %v2262 = vadd.f32 %v2242, %v2261
      %v2263 = vpop.f32.mrf.mxu0
      %v2264 = vadd.f32 %v2246, %v2263
      %2265 = vdwg.mxu0
      %v2266 = vadd.f32 %v2262, %v1802
      %v2267 = vadd.f32 %v2264, %v1803
      %v2268 = vsel %vm2033, %v2266, -inf
      %2269 = vmax.xlane.f32.xlu0 %v2268
      %v2270 = vpop.xlane.xlu0 %2269
      %v2271 = vsel %vm2033, %v2267, -inf
      %2272 = vmax.xlane.f32.xlu0 %v2271
      %v2273 = vpop.xlane.xlu0 %2272
      %v2274 = vsub.f32 %v2266, %v2270
      %v2275 = vsub.f32 %v2267, %v2273
      %v2276 = vmul.f32 %v2274, 1.442695
      %v2277 = vpow.pop %v2276
      %v2278 = vmul.f32 %v2275, 1.442695
      %v2279 = vpow.pop %v2278
      %v2280 = vsel %vm2033, %v2277, 0.0
      %2281 = vadd.xlane.f32.xlu0 %v2280
      %v2282 = vpop.xlane.xlu0 %2281
      %v2283 = vsel %vm2033, %v2279, 0.0
      %2284 = vadd.xlane.f32.xlu0 %v2283
      %v2285 = vpop.xlane.xlu0 %2284
      %v2286 = vrcp.pop %v2282
      %v2287 = vmul.f32 %v2282, %v2286
      %v2288 = vsub.f32 1.0, %v2287
      %v2289 = vmul.f32 %v2286, %v2288
      %v2290 = vadd.f32 %v2286, %v2289
      %vm2291 = vweird.f32 %v2282
      %vm2292 = vweird.f32 %v2286
      %vm2293 = vmor %vm2291, %vm2292
      %v2294 = vsel %vm2293, %v2286, %v2290
      %v2295 = vand.u32 2147483647, %v2282
      %vm2296 = vcmp.eq.f32.partialorder %v2295, 8.507059e+37
      %v2297 = vand.u32 %v2282, 2147483648
      %v2298 = vor.u32 1.1754944e-38, %v2297
      %v2299 = vsel %vm2296, %v2298, %v2294
      %v2300 = vmul.f32 %v2277, %v2299
      %v2301 = vrcp.pop %v2285
      %v2302 = vmul.f32 %v2285, %v2301
      %v2303 = vsub.f32 1.0, %v2302
      %v2304 = vmul.f32 %v2301, %v2303
      %v2305 = vadd.f32 %v2301, %v2304
      %vm2306 = vweird.f32 %v2285
      %vm2307 = vweird.f32 %v2301
      %vm2308 = vmor %vm2306, %vm2307
      %v2309 = vsel %vm2308, %v2301, %v2305
      %v2310 = vand.u32 2147483647, %v2285
      %vm2311 = vcmp.eq.f32.partialorder %v2310, 8.507059e+37
      %v2312 = vand.u32 %v2285, 2147483648
      %v2313 = vor.u32 1.1754944e-38, %v2312
      %v2314 = vsel %vm2311, %v2313, %v2309
      %v2315 = vmul.f32 %v2279, %v2314
      %v2316 = vpack.c.bf16 %v2315, %v2300
      %2317 = vrot.lane.b32.xlu0 %v1921, 48
      %v2318 = vpop.permute.xlu0 %2317
      %v2321 = vsel %vm2033, %v2316, 0
      %2323 = vmatpush.bf16.msra.mxu0 0
      %2324 = vmatpush.bf16.msra.mxu0 0
      %2325 = vmatpush.bf16.msra.mxu0 0
      %2326 = vmatpush.bf16.msra.mxu0 0
      %2327 = vmatpush.bf16.msra.mxu0 0
      %2328 = vmatpush.bf16.msra.mxu0 0
      %2329 = vmatpush.bf16.msra.mxu0 0
      %2330 = vmatpush.bf16.msra.mxu0 %v2318
      %2331 = vmatmul.bf16.gmra.mxu0 %v2321
      %v2332 = vpop.f32.mrf.mxu0
      %v2333 = vadd.f32 0.0, %v2332
      %v2334 = vpop.f32.mrf.mxu0
      %v2335 = vadd.f32 0.0, %v2334
      %2336 = vdwg.mxu0
      %2337 = vrot.lane.b32.xlu0 %v1921, 104
      %v2338 = vpop.permute.xlu0 %2337
      %v2340 = vsel %vm1962, %v2338, 0
      %2342 = vmatpush.bf16.xpose.msra.mxu0 %v1988
      %2343 = vmatpush.bf16.xpose.msra.mxu0 %v1985
      %2344 = vmatpush.bf16.xpose.msra.mxu0 %v1982
      %2345 = vmatpush.bf16.xpose.msra.mxu0 %v1979
      %2346 = vmatpush.bf16.xpose.msra.mxu0 %v1976
      %2347 = vmatpush.bf16.xpose.msra.mxu0 %v1973
      %2348 = vmatpush.bf16.xpose.msra.mxu0 %v1970
      %2349 = vmatpush.bf16.xpose.msra.mxu0 %v1967
      %2350 = vmatmul.bf16.gmra.mxu0 %v2340
      %v2351 = vpop.f32.mrf.mxu0
      %v2352 = vadd.f32 0.0, %v2351
      %v2353 = vpop.f32.mrf.mxu0
      %v2354 = vadd.f32 0.0, %v2353
      %2355 = vdwg.mxu0
      %s2357 = sor.u32 256, 113
      %2358 = vrot.lane.b32.xlu0 %v2352, %s2357
      %v2359 = vpop.permute.xlu0 %2358
      %s2361 = sor.u32 256, 121
      %2362 = vrot.lane.b32.xlu0 %v2354, %s2361
      %v2363 = vpop.permute.xlu0 %2362
      %2364 = vrot.lane.b32.xlu0 %v1921, 72
      %v2365 = vpop.permute.xlu0 %2364
      %v2367 = vsel %vm1962, %v2365, 0
      %2369 = vmatpush.bf16.xpose.msra.mxu0 0
      %2370 = vmatpush.bf16.xpose.msra.mxu0 0
      %2371 = vmatpush.bf16.xpose.msra.mxu0 0
      %2372 = vmatpush.bf16.xpose.msra.mxu0 0
      %2373 = vmatpush.bf16.xpose.msra.mxu0 0
      %2374 = vmatpush.bf16.xpose.msra.mxu0 0
      %2375 = vmatpush.bf16.xpose.msra.mxu0 0
      %2376 = vmatpush.bf16.xpose.msra.mxu0 %v2367
      %2377 = vmatmul.bf16.gmra.mxu0 %v2340
      %v2378 = vpop.f32.mrf.mxu0
      %v2379 = vadd.f32 %v2359, %v2378
      %v2380 = vpop.f32.mrf.mxu0
      %v2381 = vadd.f32 %v2363, %v2380
      %2382 = vdwg.mxu0
      %v2383 = vadd.f32 %v2379, %v1802
      %v2384 = vadd.f32 %v2381, %v1803
      %v2385 = vsel %vm2033, %v2383, -inf
      %2386 = vmax.xlane.f32.xlu0 %v2385
      %v2387 = vpop.xlane.xlu0 %2386
      %v2388 = vsel %vm2033, %v2384, -inf
      %2389 = vmax.xlane.f32.xlu0 %v2388
      %v2390 = vpop.xlane.xlu0 %2389
      %v2391 = vsub.f32 %v2383, %v2387
      %v2392 = vsub.f32 %v2384, %v2390
      %v2393 = vmul.f32 %v2391, 1.442695
      %v2394 = vpow.pop %v2393
      %v2395 = vmul.f32 %v2392, 1.442695
      %v2396 = vpow.pop %v2395
      %v2397 = vsel %vm2033, %v2394, 0.0
      %2398 = vadd.xlane.f32.xlu0 %v2397
      %v2399 = vpop.xlane.xlu0 %2398
      %v2400 = vsel %vm2033, %v2396, 0.0
      %2401 = vadd.xlane.f32.xlu0 %v2400
      %v2402 = vpop.xlane.xlu0 %2401
      %v2403 = vrcp.pop %v2399
      %v2404 = vmul.f32 %v2399, %v2403
      %v2405 = vsub.f32 1.0, %v2404
      %v2406 = vmul.f32 %v2403, %v2405
      %v2407 = vadd.f32 %v2403, %v2406
      %vm2408 = vweird.f32 %v2399
      %vm2409 = vweird.f32 %v2403
      %vm2410 = vmor %vm2408, %vm2409
      %v2411 = vsel %vm2410, %v2403, %v2407
      %v2412 = vand.u32 2147483647, %v2399
      %vm2413 = vcmp.eq.f32.partialorder %v2412, 8.507059e+37
      %v2414 = vand.u32 %v2399, 2147483648
      %v2415 = vor.u32 1.1754944e-38, %v2414
      %v2416 = vsel %vm2413, %v2415, %v2411
      %v2417 = vmul.f32 %v2394, %v2416
      %v2418 = vrcp.pop %v2402
      %v2419 = vmul.f32 %v2402, %v2418
      %v2420 = vsub.f32 1.0, %v2419
      %v2421 = vmul.f32 %v2418, %v2420
      %v2422 = vadd.f32 %v2418, %v2421
      %vm2423 = vweird.f32 %v2402
      %vm2424 = vweird.f32 %v2418
      %vm2425 = vmor %vm2423, %vm2424
      %v2426 = vsel %vm2425, %v2418, %v2422
      %v2427 = vand.u32 2147483647, %v2402
      %vm2428 = vcmp.eq.f32.partialorder %v2427, 8.507059e+37
      %v2429 = vand.u32 %v2402, 2147483648
      %v2430 = vor.u32 1.1754944e-38, %v2429
      %v2431 = vsel %vm2428, %v2430, %v2426
      %v2432 = vmul.f32 %v2396, %v2431
      %v2433 = vpack.c.bf16 %v2432, %v2417
      %2434 = vrot.lane.b32.xlu0 %v1921, 40
      %v2435 = vpop.permute.xlu0 %2434
      %v2438 = vsel %vm2033, %v2433, 0
      %2440 = vmatpush.bf16.msra.mxu0 0
      %2441 = vmatpush.bf16.msra.mxu0 0
      %2442 = vmatpush.bf16.msra.mxu0 0
      %2443 = vmatpush.bf16.msra.mxu0 0
      %2444 = vmatpush.bf16.msra.mxu0 0
      %2445 = vmatpush.bf16.msra.mxu0 0
      %2446 = vmatpush.bf16.msra.mxu0 0
      %2447 = vmatpush.bf16.msra.mxu0 %v2435
      %2448 = vmatmul.bf16.gmra.mxu0 %v2438
      %v2449 = vpop.f32.mrf.mxu0
      %v2450 = vadd.f32 0.0, %v2449
      %v2451 = vpop.f32.mrf.mxu0
      %v2452 = vadd.f32 0.0, %v2451
      %2453 = vdwg.mxu0
      %2456 = vrot.lane.b32.xlu0 %v2216, 8
      %v2457 = vpop.permute.xlu0 %2456
      %2458 = vrot.lane.b32.xlu0 %v2218, 8
      %v2459 = vpop.permute.xlu0 %2458
      %2464 = vrot.lane.b32.xlu0 %v2333, 16
      %v2465 = vpop.permute.xlu0 %2464
      %2466 = vrot.lane.b32.xlu0 %v2335, 16
      %v2467 = vpop.permute.xlu0 %2466
      %2472 = vrot.lane.b32.xlu0 %v2450, 24
      %v2473 = vpop.permute.xlu0 %2472
      %2474 = vrot.lane.b32.xlu0 %v2452, 24
      %v2475 = vpop.permute.xlu0 %2474
      %v2478 = vsel %vm1962, %v2099, %v2457
      %v2479 = vsel %vm1962, %v2101, %v2459
      %v2480 = vsel %vm2033, %v2478, %v2465
      %v2481 = vsel %vm2033, %v2479, %v2467
      %vm2482 = vcmask 195584
      %v2483 = vsel %vm2482, %v2480, %v2473
      %v2484 = vsel %vm2482, %v2481, %v2475
      %v2485 = vpack.c.bf16 %v2484, %v2483
      %v2490 = vunpack.c.l.b16 %v1810
      %v2491 = vunpack.c.l.b16 %v1811
      %v2492 = vunpack.c.l.b16 %v1812
      %v2493 = vunpack.c.l.b16 %v1813
      %v2494 = vpack.c.b16 %v2491, %v2490
      %v2495 = vpack.c.b16 %v2493, %v2492
      %v2499 = vsel %vm1577, %v2485, 0
      %2501 = vmatpush.bf16.msra.mxu0 0
      %2502 = vmatpush.bf16.msra.mxu0 0
      %2503 = vmatpush.bf16.msra.mxu0 0
      %2504 = vmatpush.bf16.msra.mxu0 0
      %2505 = vmatpush.bf16.msra.mxu0 0
      %2506 = vmatpush.bf16.msra.mxu0 0
      %2507 = vmatpush.bf16.msra.mxu0 %v2495
      %2508 = vmatpush.bf16.msra.mxu0 %v2494
      %2509 = vmatmul.bf16.gmra.mxu0 %v2499
      %v2510 = vpop.f32.mrf.mxu0
      %v2511 = vadd.f32 0.0, %v2510
      %v2512 = vpop.f32.mrf.mxu0
      %v2513 = vadd.f32 0.0, %v2512
      %2514 = vdwg.mxu0
      %v2515 = vadd.f32 %v1780, %v2511
      %v2516 = vadd.f32 %v1781, %v2513
      %v2518 = vperm.slane %v1814, 0
      %v2520 = vadd.f32 %v2515, %v2518
      %v2521 = vadd.f32 %v2516, %v2518
      %v2522 = vld [vmem:[%s1469] sm:$0x1]
      %v2523 = vld [vmem:[%s1472] sm:$0x1]
      %v2524 = vld [vmem:[%s1477] sm:$0xf]
      %v2525 = vld [vmem:[%s1477 + $0x4] sm:$0xf]
      %v2526 = vld [vmem:[%s1477 + $0x8] sm:$0xf]
      %v2527 = vld [vmem:[%s1477 + $0xc] sm:$0xf]
      %v2528 = vld [vmem:[%s1480] sm:$0x1]
      %v2529 = vld [vmem:[%s1485] sm:$0xff]
      %v2530 = vld [vmem:[%s1485 + $0x8] sm:$0xff]
      %v2531 = vld [vmem:[%s1485 + $0x10] sm:$0xff]
      %v2532 = vld [vmem:[%s1485 + $0x18] sm:$0x7f]
      %v2533 = vld [vmem:[%s1488] sm:$0x1]
      %v2534 = vld [vmem:[%s1491] sm:$0x1]
      %v2535 = vld [vmem:[%s1494] sm:$0x1]
      %v2536 = vld [vmem:[%s1499] sm:$0xf]
      %v2537 = vld [vmem:[%s1499 + $0x4] sm:$0xf]
      %v2538 = vld [vmem:[%s1499 + $0x8] sm:$0xf]
      %v2539 = vld [vmem:[%s1499 + $0xc] sm:$0xf]
      %v2540 = vld [vmem:[%s1499 + $0x10] sm:$0xf]
      %v2541 = vld [vmem:[%s1499 + $0x14] sm:$0xf]
      %v2542 = vld [vmem:[%s1499 + $0x18] sm:$0xf]
      %v2543 = vld [vmem:[%s1499 + $0x1c] sm:$0xf]
      %v2544 = vld [vmem:[%s1502] sm:$0x1]
      %v2545 = vsel %vm1577, %v2520, 0.0
      %2546 = vadd.xlane.f32.xlu0 %v2545
      %v2547 = vpop.xlane.xlu0 %2546
      %v2548 = vsel %vm1577, %v2521, 0.0
      %2549 = vadd.xlane.f32.xlu0 %v2548
      %v2550 = vpop.xlane.xlu0 %2549
      %v2551 = vmul.f32 %v2547, %v1590
      %v2552 = vmul.f32 %v2550, %v1590
      %v2553 = vsub.f32 %v2520, %v2551
      %v2554 = vsub.f32 %v2521, %v2552
      %v2555 = vmul.f32 %v2553, %v2553
      %v2556 = vmul.f32 %v2554, %v2554
      %v2557 = vsel %vm1577, %v2555, 0.0
      %2558 = vadd.xlane.f32.xlu0 %v2557
      %v2559 = vpop.xlane.xlu0 %2558
      %v2560 = vsel %vm1577, %v2556, 0.0
      %2561 = vadd.xlane.f32.xlu0 %v2560
      %v2562 = vpop.xlane.xlu0 %2561
      %v2563 = vmul.f32 %v2559, %v1590
      %v2564 = vmul.f32 %v2562, %v1590
      %v2565 = vadd.f32 %v2563, 1e-05
      %v2566 = vadd.f32 %v2564, 1e-05
      %v2567 = vrsqrt.pop %v2565
      %v2568 = vmul.f32 %v2567, %v2565
      %v2569 = vmul.f32 %v2568, %v2567
      %v2570 = vmul.f32 0.5, %v2569
      %v2571 = vsub.f32 1.5, %v2570
      %v2572 = vmul.f32 %v2567, %v2571
      %vm2573 = vweird.f32 %v2565
      %vm2574 = vweird.f32 %v2567
      %vm2575 = vmor %vm2573, %vm2574
      %v2576 = vsel %vm2575, %v2567, %v2572
      %v2577 = vrsqrt.pop %v2566
      %v2578 = vmul.f32 %v2577, %v2566
      %v2579 = vmul.f32 %v2578, %v2577
      %v2580 = vmul.f32 0.5, %v2579
      %v2581 = vsub.f32 1.5, %v2580
      %v2582 = vmul.f32 %v2577, %v2581
      %vm2583 = vweird.f32 %v2566
      %vm2584 = vweird.f32 %v2577
      %vm2585 = vmor %vm2583, %vm2584
      %v2586 = vsel %vm2585, %v2577, %v2582
      %v2587 = vmul.f32 %v2553, %v2576
      %v2588 = vmul.f32 %v2554, %v2586
      %v2590 = vperm.slane %v2522, 0
      %v2592 = vmul.f32 %v2587, %v2590
      %v2593 = vmul.f32 %v2588, %v2590
      %v2595 = vperm.slane %v2523, 0
      %v2597 = vadd.f32 %v2592, %v2595
      %v2598 = vadd.f32 %v2593, %v2595
      %v2599 = vpack.c.bf16 %v2598, %v2597
      %v2601 = vperm.slane %v2528, 0
      %v2607 = vunpack.c.l.b16 %v2524
      %v2608 = vunpack.c.l.b16 %v2525
      %v2609 = vunpack.c.l.b16 %v2526
      %v2610 = vunpack.c.l.b16 %v2527
      %v2611 = vpack.c.b16 %v2608, %v2607
      %v2612 = vpack.c.b16 %v2610, %v2609
      %v2616 = vsel %vm1577, %v2599, 0
      %2618 = vmatpush.bf16.msra.mxu0 0
      %2619 = vmatpush.bf16.msra.mxu0 0
      %2620 = vmatpush.bf16.msra.mxu0 0
      %2621 = vmatpush.bf16.msra.mxu0 0
      %2622 = vmatpush.bf16.msra.mxu0 0
      %2623 = vmatpush.bf16.msra.mxu0 0
      %2624 = vmatpush.bf16.msra.mxu0 %v2612
      %2625 = vmatpush.bf16.msra.mxu0 %v2611
      %2626 = vmatmul.bf16.gmra.mxu0 %v2616
      %v2627 = vpop.f32.mrf.mxu0
      %v2628 = vadd.f32 %v2601, %v2627
      %v2629 = vpop.f32.mrf.mxu0
      %v2630 = vadd.f32 %v2601, %v2629
      %2631 = vdwg.mxu0
      %v2632 = vxor.u32 %v2628, 2147483648
      %v2633 = vxor.u32 %v2630, 2147483648
      %v2634 = vmul.f32 %v2632, 1.442695
      %v2635 = vpow.pop %v2634
      %v2636 = vmul.f32 %v2633, 1.442695
      %v2637 = vpow.pop %v2636
      %v2638 = vadd.f32 %v2635, 1.0
      %v2639 = vadd.f32 %v2637, 1.0
      %v2640 = vrcp.pop %v2638
      %v2641 = vmul.f32 %v2638, %v2640
      %v2642 = vsub.f32 1.0, %v2641
      %v2643 = vmul.f32 %v2640, %v2642
      %v2644 = vadd.f32 %v2640, %v2643
      %vm2645 = vweird.f32 %v2638
      %vm2646 = vweird.f32 %v2640
      %vm2647 = vmor %vm2645, %vm2646
      %v2648 = vsel %vm2647, %v2640, %v2644
      %v2649 = vand.u32 2147483647, %v2638
      %vm2650 = vcmp.eq.f32.partialorder %v2649, 8.507059e+37
      %v2651 = vand.u32 %v2638, 2147483648
      %v2652 = vor.u32 1.1754944e-38, %v2651
      %v2653 = vsel %vm2650, %v2652, %v2648
      %v2654 = vmul.f32 1.0, %v2653
      %v2655 = vrcp.pop %v2639
      %v2656 = vmul.f32 %v2639, %v2655
      %v2657 = vsub.f32 1.0, %v2656
      %v2658 = vmul.f32 %v2655, %v2657
      %v2659 = vadd.f32 %v2655, %v2658
      %vm2660 = vweird.f32 %v2639
      %vm2661 = vweird.f32 %v2655
      %vm2662 = vmor %vm2660, %vm2661
      %v2663 = vsel %vm2662, %v2655, %v2659
      %v2664 = vand.u32 2147483647, %v2639
      %vm2665 = vcmp.eq.f32.partialorder %v2664, 8.507059e+37
      %v2666 = vand.u32 %v2639, 2147483648
      %v2667 = vor.u32 1.1754944e-38, %v2666
      %v2668 = vsel %vm2665, %v2667, %v2663
      %v2669 = vmul.f32 1.0, %v2668
      %2672 = vrot.lane.b32.xlu0 %v2654, 64
      %v2673 = vpop.permute.xlu0 %2672
      %2674 = vrot.lane.b32.xlu0 %v2669, 64
      %v2675 = vpop.permute.xlu0 %2674
      %v2678 = vmul.f32 %v2628, %v2673
      %v2679 = vmul.f32 %v2630, %v2675
      %vm2680 = vcmask 523264
      %2681 = vst.msk [vmem:[#allocation3] sm:$0xff] %vm2680, 0.0
      %2682 = vst.msk [vmem:[#allocation3 + $0x8] sm:$0xff] %vm2680, 0.0
      %2683 = vst.msk [vmem:[#allocation3 + $0x20] sm:$0xff] %vm2680, 0.0
      %2684 = vst.msk [vmem:[#allocation3 + $0x28] sm:$0xff] %vm2680, 0.0
      %2685 = vst.msk [vmem:[#allocation3 + $0x10] sm:$0xff] %vm2680, %v2678
      %2686 = vst.msk [vmem:[#allocation3 + $0x18] sm:$0xff] %vm2680, %v2679
      %v2687 = vld [vmem:[#allocation3 + $0x1] sm:$0xff]
      %v2688 = vld [vmem:[#allocation3 + $0x9] sm:$0xff]
      %v2689 = vperm.slane %v2529, 0
      %v2690 = vmul.f32 %v2687, %v2689
      %v2691 = vmul.f32 %v2688, %v2689
      %v2692 = vadd.f32 %v2690, 0.0
      %v2693 = vadd.f32 %v2691, 0.0
      %v2694 = vld [vmem:[#allocation3 + $0x2] sm:$0xff]
      %v2695 = vld [vmem:[#allocation3 + $0xa] sm:$0xff]
      %v2696 = vperm.slane %v2529, 1
      %v2697 = vmul.f32 %v2694, %v2696
      %v2698 = vmul.f32 %v2695, %v2696
      %v2699 = vadd.f32 %v2692, %v2697
      %v2700 = vadd.f32 %v2693, %v2698
      %v2701 = vld [vmem:[#allocation3 + $0x3] sm:$0xff]
      %v2702 = vld [vmem:[#allocation3 + $0xb] sm:$0xff]
      %v2703 = vperm.slane %v2529, 2
      %v2704 = vmul.f32 %v2701, %v2703
      %v2705 = vmul.f32 %v2702, %v2703
      %v2706 = vadd.f32 %v2699, %v2704
      %v2707 = vadd.f32 %v2700, %v2705
      %v2708 = vld [vmem:[#allocation3 + $0x4] sm:$0xff]
      %v2709 = vld [vmem:[#allocation3 + $0xc] sm:$0xff]
      %v2710 = vperm.slane %v2529, 3
      %v2711 = vmul.f32 %v2708, %v2710
      %v2712 = vmul.f32 %v2709, %v2710
      %v2713 = vadd.f32 %v2706, %v2711
      %v2714 = vadd.f32 %v2707, %v2712
      %v2715 = vld [vmem:[#allocation3 + $0x5] sm:$0xff]
      %v2716 = vld [vmem:[#allocation3 + $0xd] sm:$0xff]
      %v2717 = vperm.slane %v2529, 4
      %v2718 = vmul.f32 %v2715, %v2717
      %v2719 = vmul.f32 %v2716, %v2717
      %v2720 = vadd.f32 %v2713, %v2718
      %v2721 = vadd.f32 %v2714, %v2719
      %v2722 = vld [vmem:[#allocation3 + $0x6] sm:$0xff]
      %v2723 = vld [vmem:[#allocation3 + $0xe] sm:$0xff]
      %v2724 = vperm.slane %v2529, 5
      %v2725 = vmul.f32 %v2722, %v2724
      %v2726 = vmul.f32 %v2723, %v2724
      %v2727 = vadd.f32 %v2720, %v2725
      %v2728 = vadd.f32 %v2721, %v2726
      %v2729 = vld [vmem:[#allocation3 + $0x7] sm:$0xff]
      %v2730 = vld [vmem:[#allocation3 + $0xf] sm:$0xff]
      %v2731 = vperm.slane %v2529, 6
      %v2732 = vmul.f32 %v2729, %v2731
      %v2733 = vmul.f32 %v2730, %v2731
      %v2734 = vadd.f32 %v2727, %v2732
      %v2735 = vadd.f32 %v2728, %v2733
      %v2736 = vld [vmem:[#allocation3 + $0x8] sm:$0xff]
      %v2737 = vld [vmem:[#allocation3 + $0x10] sm:$0xff]
      %v2738 = vperm.slane %v2529, 7
      %v2739 = vmul.f32 %v2736, %v2738
      %v2740 = vmul.f32 %v2737, %v2738
      %v2741 = vadd.f32 %v2734, %v2739
      %v2742 = vadd.f32 %v2735, %v2740
      %v2743 = vld [vmem:[#allocation3 + $0x11] sm:$0xff]
      %v2744 = vperm.slane %v2530, 0
      %v2745 = vmul.f32 %v2688, %v2744
      %v2746 = vmul.f32 %v2743, %v2744
      %v2747 = vadd.f32 %v2741, %v2745
      %v2748 = vadd.f32 %v2742, %v2746
      %v2749 = vld [vmem:[#allocation3 + $0x12] sm:$0xff]
      %v2750 = vperm.slane %v2530, 1
      %v2751 = vmul.f32 %v2695, %v2750
      %v2752 = vmul.f32 %v2749, %v2750
      %v2753 = vadd.f32 %v2747, %v2751
      %v2754 = vadd.f32 %v2748, %v2752
      %v2755 = vld [vmem:[#allocation3 + $0x13] sm:$0xff]
      %v2756 = vperm.slane %v2530, 2
      %v2757 = vmul.f32 %v2702, %v2756
      %v2758 = vmul.f32 %v2755, %v2756
      %v2759 = vadd.f32 %v2753, %v2757
      %v2760 = vadd.f32 %v2754, %v2758
      %v2761 = vld [vmem:[#allocation3 + $0x14] sm:$0xff]
      %v2762 = vperm.slane %v2530, 3
      %v2763 = vmul.f32 %v2709, %v2762
      %v2764 = vmul.f32 %v2761, %v2762
      %v2765 = vadd.f32 %v2759, %v2763
      %v2766 = vadd.f32 %v2760, %v2764
      %v2767 = vld [vmem:[#allocation3 + $0x15] sm:$0xff]
      %v2768 = vperm.slane %v2530, 4
      %v2769 = vmul.f32 %v2716, %v2768
      %v2770 = vmul.f32 %v2767, %v2768
      %v2771 = vadd.f32 %v2765, %v2769
      %v2772 = vadd.f32 %v2766, %v2770
      %v2773 = vld [vmem:[#allocation3 + $0x16] sm:$0xff]
      %v2774 = vperm.slane %v2530, 5
      %v2775 = vmul.f32 %v2723, %v2774
      %v2776 = vmul.f32 %v2773, %v2774
      %v2777 = vadd.f32 %v2771, %v2775
      %v2778 = vadd.f32 %v2772, %v2776
      %v2779 = vld [vmem:[#allocation3 + $0x17] sm:$0xff]
      %v2780 = vperm.slane %v2530, 6
      %v2781 = vmul.f32 %v2730, %v2780
      %v2782 = vmul.f32 %v2779, %v2780
      %v2783 = vadd.f32 %v2777, %v2781
      %v2784 = vadd.f32 %v2778, %v2782
      %v2785 = vld [vmem:[#allocation3 + $0x18] sm:$0xff]
      %v2786 = vperm.slane %v2530, 7
      %v2787 = vmul.f32 %v2737, %v2786
      %v2788 = vmul.f32 %v2785, %v2786
      %v2789 = vadd.f32 %v2783, %v2787
      %v2790 = vadd.f32 %v2784, %v2788
      %v2791 = vld [vmem:[#allocation3 + $0x19] sm:$0xff]
      %v2792 = vperm.slane %v2531, 0
      %v2793 = vmul.f32 %v2743, %v2792
      %v2794 = vmul.f32 %v2791, %v2792
      %v2795 = vadd.f32 %v2789, %v2793
      %v2796 = vadd.f32 %v2790, %v2794
      %v2797 = vld [vmem:[#allocation3 + $0x1a] sm:$0xff]
      %v2798 = vperm.slane %v2531, 1
      %v2799 = vmul.f32 %v2749, %v2798
      %v2800 = vmul.f32 %v2797, %v2798
      %v2801 = vadd.f32 %v2795, %v2799
      %v2802 = vadd.f32 %v2796, %v2800
      %v2803 = vld [vmem:[#allocation3 + $0x1b] sm:$0xff]
      %v2804 = vperm.slane %v2531, 2
      %v2805 = vmul.f32 %v2755, %v2804
      %v2806 = vmul.f32 %v2803, %v2804
      %v2807 = vadd.f32 %v2801, %v2805
      %v2808 = vadd.f32 %v2802, %v2806
      %v2809 = vld [vmem:[#allocation3 + $0x1c] sm:$0xff]
      %v2810 = vperm.slane %v2531, 3
      %v2811 = vmul.f32 %v2761, %v2810
      %v2812 = vmul.f32 %v2809, %v2810
      %v2813 = vadd.f32 %v2807, %v2811
      %v2814 = vadd.f32 %v2808, %v2812
      %v2815 = vld [vmem:[#allocation3 + $0x1d] sm:$0xff]
      %v2816 = vperm.slane %v2531, 4
      %v2817 = vmul.f32 %v2767, %v2816
      %v2818 = vmul.f32 %v2815, %v2816
      %v2819 = vadd.f32 %v2813, %v2817
      %v2820 = vadd.f32 %v2814, %v2818
      %v2821 = vld [vmem:[#allocation3 + $0x1e] sm:$0xff]
      %v2822 = vperm.slane %v2531, 5
      %v2823 = vmul.f32 %v2773, %v2822
      %v2824 = vmul.f32 %v2821, %v2822
      %v2825 = vadd.f32 %v2819, %v2823
      %v2826 = vadd.f32 %v2820, %v2824
      %v2827 = vld [vmem:[#allocation3 + $0x1f] sm:$0xff]
      %v2828 = vperm.slane %v2531, 6
      %v2829 = vmul.f32 %v2779, %v2828
      %v2830 = vmul.f32 %v2827, %v2828
      %v2831 = vadd.f32 %v2825, %v2829
      %v2832 = vadd.f32 %v2826, %v2830
      %v2833 = vld [vmem:[#allocation3 + $0x20] sm:$0xff]
      %v2834 = vperm.slane %v2531, 7
      %v2835 = vmul.f32 %v2785, %v2834
      %v2836 = vmul.f32 %v2833, %v2834
      %v2837 = vadd.f32 %v2831, %v2835
      %v2838 = vadd.f32 %v2832, %v2836
      %v2839 = vld [vmem:[#allocation3 + $0x21] sm:$0xff]
      %v2840 = vperm.slane %v2532, 0
      %v2841 = vmul.f32 %v2791, %v2840
      %v2842 = vmul.f32 %v2839, %v2840
      %v2843 = vadd.f32 %v2837, %v2841
      %v2844 = vadd.f32 %v2838, %v2842
      %v2845 = vld [vmem:[#allocation3 + $0x22] sm:$0xff]
      %v2846 = vperm.slane %v2532, 1
      %v2847 = vmul.f32 %v2797, %v2846
      %v2848 = vmul.f32 %v2845, %v2846
      %v2849 = vadd.f32 %v2843, %v2847
      %v2850 = vadd.f32 %v2844, %v2848
      %v2851 = vld [vmem:[#allocation3 + $0x23] sm:$0xff]
      %v2852 = vperm.slane %v2532, 2
      %v2853 = vmul.f32 %v2803, %v2852
      %v2854 = vmul.f32 %v2851, %v2852
      %v2855 = vadd.f32 %v2849, %v2853
      %v2856 = vadd.f32 %v2850, %v2854
      %v2857 = vld [vmem:[#allocation3 + $0x24] sm:$0xff]
      %v2858 = vperm.slane %v2532, 3
      %v2859 = vmul.f32 %v2809, %v2858
      %v2860 = vmul.f32 %v2857, %v2858
      %v2861 = vadd.f32 %v2855, %v2859
      %v2862 = vadd.f32 %v2856, %v2860
      %v2863 = vld [vmem:[#allocation3 + $0x25] sm:$0xff]
      %v2864 = vperm.slane %v2532, 4
      %v2865 = vmul.f32 %v2815, %v2864
      %v2866 = vmul.f32 %v2863, %v2864
      %v2867 = vadd.f32 %v2861, %v2865
      %v2868 = vadd.f32 %v2862, %v2866
      %v2869 = vld [vmem:[#allocation3 + $0x26] sm:$0xff]
      %v2870 = vperm.slane %v2532, 5
      %v2871 = vmul.f32 %v2821, %v2870
      %v2872 = vmul.f32 %v2869, %v2870
      %v2873 = vadd.f32 %v2867, %v2871
      %v2874 = vadd.f32 %v2868, %v2872
      %v2875 = vld [vmem:[#allocation3 + $0x27] sm:$0xff]
      %v2876 = vperm.slane %v2532, 6
      %v2877 = vmul.f32 %v2827, %v2876
      %v2878 = vmul.f32 %v2875, %v2876
      %v2879 = vadd.f32 %v2873, %v2877
      %v2880 = vadd.f32 %v2874, %v2878
      %v2882 = vperm.slane %v2533, 0
      %v2884 = vadd.f32 %v2879, %v2882
      %v2885 = vadd.f32 %v2880, %v2882
      %v2887 = vperm.slane %v2534, 0
      %v2889 = vmul.f32 %v2884, %v2887
      %v2890 = vmul.f32 %v2885, %v2887
      %v2892 = vperm.slane %v2535, 0
      %v2894 = vadd.f32 %v2889, %v2892
      %v2895 = vadd.f32 %v2890, %v2892
      %v2896 = vxor.u32 %v2894, 2147483648
      %v2897 = vxor.u32 %v2895, 2147483648
      %v2898 = vmul.f32 %v2896, 1.442695
      %v2899 = vpow.pop %v2898
      %v2900 = vmul.f32 %v2897, 1.442695
      %v2901 = vpow.pop %v2900
      %v2902 = vadd.f32 %v2899, 1.0
      %v2903 = vadd.f32 %v2901, 1.0
      %v2904 = vrcp.pop %v2902
      %v2905 = vmul.f32 %v2902, %v2904
      %v2906 = vsub.f32 1.0, %v2905
      %v2907 = vmul.f32 %v2904, %v2906
      %v2908 = vadd.f32 %v2904, %v2907
      %vm2909 = vweird.f32 %v2902
      %vm2910 = vweird.f32 %v2904
      %vm2911 = vmor %vm2909, %vm2910
      %v2912 = vsel %vm2911, %v2904, %v2908
      %v2913 = vand.u32 2147483647, %v2902
      %vm2914 = vcmp.eq.f32.partialorder %v2913, 8.507059e+37
      %v2915 = vand.u32 %v2902, 2147483648
      %v2916 = vor.u32 1.1754944e-38, %v2915
      %v2917 = vsel %vm2914, %v2916, %v2912
      %v2918 = vmul.f32 1.0, %v2917
      %v2919 = vrcp.pop %v2903
      %v2920 = vmul.f32 %v2903, %v2919
      %v2921 = vsub.f32 1.0, %v2920
      %v2922 = vmul.f32 %v2919, %v2921
      %v2923 = vadd.f32 %v2919, %v2922
      %vm2924 = vweird.f32 %v2903
      %vm2925 = vweird.f32 %v2919
      %vm2926 = vmor %vm2924, %vm2925
      %v2927 = vsel %vm2926, %v2919, %v2923
      %v2928 = vand.u32 2147483647, %v2903
      %vm2929 = vcmp.eq.f32.partialorder %v2928, 8.507059e+37
      %v2930 = vand.u32 %v2903, 2147483648
      %v2931 = vor.u32 1.1754944e-38, %v2930
      %v2932 = vsel %vm2929, %v2931, %v2927
      %v2933 = vmul.f32 1.0, %v2932
      %v2934 = vmul.f32 %v2894, %v2918
      %v2935 = vmul.f32 %v2895, %v2933
      %v2936 = vpack.c.bf16 %v2935, %v2934
      %v2945 = vunpack.c.l.b16 %v2536
      %v2946 = vunpack.c.l.b16 %v2537
      %v2947 = vunpack.c.l.b16 %v2538
      %v2948 = vunpack.c.l.b16 %v2539
      %v2949 = vunpack.c.l.b16 %v2540
      %v2950 = vunpack.c.l.b16 %v2541
      %v2951 = vunpack.c.l.b16 %v2542
      %v2952 = vunpack.c.l.b16 %v2543
      %v2953 = vpack.c.b16 %v2946, %v2945
      %v2954 = vpack.c.b16 %v2948, %v2947
      %v2955 = vpack.c.b16 %v2950, %v2949
      %v2956 = vpack.c.b16 %v2952, %v2951
      %v2962 = vsel %vm2680, %v2936, 0
      %2964 = vmatpush.bf16.msra.mxu0 0
      %2965 = vmatpush.bf16.msra.mxu0 0
      %2966 = vmatpush.bf16.msra.mxu0 0
      %2967 = vmatpush.bf16.msra.mxu0 0
      %2968 = vmatpush.bf16.msra.mxu0 %v2956
      %2969 = vmatpush.bf16.msra.mxu0 %v2955
      %2970 = vmatpush.bf16.msra.mxu0 %v2954
      %2971 = vmatpush.bf16.msra.mxu0 %v2953
      %2972 = vmatmul.bf16.gmra.mxu0 %v2962
      %v2973 = vpop.f32.mrf.mxu0
      %v2974 = vadd.f32 0.0, %v2973
      %v2975 = vpop.f32.mrf.mxu0
      %v2976 = vadd.f32 0.0, %v2975
      %2977 = vdwg.mxu0
      %v2978 = vadd.f32 %v2520, %v2974
      %v2979 = vadd.f32 %v2521, %v2976
      %v2981 = vperm.slane %v2544, 0
      %v2983 = vadd.f32 %v2978, %v2981
      %v2984 = vadd.f32 %v2979, %v2981
      %v2985 = vld [vmem:[%s1505] sm:$0x1]
      %v2986 = vld [vmem:[%s1508] sm:$0x1]
      %v2987 = vld [vmem:[%s1513] sm:$0xf]
      %v2988 = vld [vmem:[%s1513 + $0x4] sm:$0xf]
      %v2989 = vld [vmem:[%s1513 + $0x8] sm:$0xf]
      %v2990 = vld [vmem:[%s1513 + $0xc] sm:$0xf]
      %v2991 = vld [vmem:[%s1516] sm:$0x1]
      %v2992 = vld [vmem:[%s1521] sm:$0xf]
      %v2993 = vld [vmem:[%s1521 + $0x4] sm:$0xf]
      %v2994 = vld [vmem:[%s1521 + $0x8] sm:$0xf]
      %v2995 = vld [vmem:[%s1521 + $0xc] sm:$0xf]
      %v2996 = vld [vmem:[%s1521 + $0x10] sm:$0xf]
      %v2997 = vld [vmem:[%s1521 + $0x14] sm:$0xf]
      %v2998 = vld [vmem:[%s1521 + $0x18] sm:$0xf]
      %v2999 = vld [vmem:[%s1521 + $0x1c] sm:$0xf]
      %v3000 = vld [vmem:[%s1521 + $0x20] sm:$0xf]
      %v3001 = vld [vmem:[%s1521 + $0x24] sm:$0xf]
      %v3002 = vld [vmem:[%s1521 + $0x28] sm:$0xf]
      %v3003 = vld [vmem:[%s1521 + $0x2c] sm:$0xf]
      %v3004 = vld [vmem:[%s1521 + $0x30] sm:$0xf]
      %v3005 = vld [vmem:[%s1521 + $0x34] sm:$0xf]
      %v3006 = vld [vmem:[%s1521 + $0x38] sm:$0xf]
      %v3007 = vld [vmem:[%s1521 + $0x3c] sm:$0xf]
      %v3008 = vld [vmem:[%s1524] sm:$0x1]
      %v3009 = vsel %vm1577, %v2983, 0.0
      %3010 = vadd.xlane.f32.xlu0 %v3009
      %v3011 = vpop.xlane.xlu0 %3010
      %v3012 = vsel %vm1577, %v2984, 0.0
      %3013 = vadd.xlane.f32.xlu0 %v3012
      %v3014 = vpop.xlane.xlu0 %3013
      %v3015 = vmul.f32 %v3011, %v1590
      %v3016 = vmul.f32 %v3014, %v1590
      %v3017 = vsub.f32 %v2983, %v3015
      %v3018 = vsub.f32 %v2984, %v3016
      %v3019 = vmul.f32 %v3017, %v3017
      %v3020 = vmul.f32 %v3018, %v3018
      %v3021 = vsel %vm1577, %v3019, 0.0
      %3022 = vadd.xlane.f32.xlu0 %v3021
      %v3023 = vpop.xlane.xlu0 %3022
      %v3024 = vsel %vm1577, %v3020, 0.0
      %3025 = vadd.xlane.f32.xlu0 %v3024
      %v3026 = vpop.xlane.xlu0 %3025
      %v3027 = vmul.f32 %v3023, %v1590
      %v3028 = vmul.f32 %v3026, %v1590
      %v3029 = vadd.f32 %v3027, 1e-05
      %v3030 = vadd.f32 %v3028, 1e-05
      %v3031 = vrsqrt.pop %v3029
      %v3032 = vmul.f32 %v3031, %v3029
      %v3033 = vmul.f32 %v3032, %v3031
      %v3034 = vmul.f32 0.5, %v3033
      %v3035 = vsub.f32 1.5, %v3034
      %v3036 = vmul.f32 %v3031, %v3035
      %vm3037 = vweird.f32 %v3029
      %vm3038 = vweird.f32 %v3031
      %vm3039 = vmor %vm3037, %vm3038
      %v3040 = vsel %vm3039, %v3031, %v3036
      %v3041 = vrsqrt.pop %v3030
      %v3042 = vmul.f32 %v3041, %v3030
      %v3043 = vmul.f32 %v3042, %v3041
      %v3044 = vmul.f32 0.5, %v3043
      %v3045 = vsub.f32 1.5, %v3044
      %v3046 = vmul.f32 %v3041, %v3045
      %vm3047 = vweird.f32 %v3030
      %vm3048 = vweird.f32 %v3041
      %vm3049 = vmor %vm3047, %vm3048
      %v3050 = vsel %vm3049, %v3041, %v3046
      %v3051 = vmul.f32 %v3017, %v3040
      %v3052 = vmul.f32 %v3018, %v3050
      %v3054 = vperm.slane %v2985, 0
      %v3056 = vmul.f32 %v3051, %v3054
      %v3057 = vmul.f32 %v3052, %v3054
      %v3059 = vperm.slane %v2986, 0
      %v3061 = vadd.f32 %v3056, %v3059
      %v3062 = vadd.f32 %v3057, %v3059
      %v3063 = vpack.c.bf16 %v3062, %v3061
      %v3065 = vperm.slane %v2991, 0
      %v3071 = vunpack.c.l.b16 %v2987
      %v3072 = vunpack.c.l.b16 %v2988
      %v3073 = vunpack.c.l.b16 %v2989
      %v3074 = vunpack.c.l.b16 %v2990
      %v3075 = vpack.c.b16 %v3072, %v3071
      %v3076 = vpack.c.b16 %v3074, %v3073
      %v3080 = vsel %vm1577, %v3063, 0
      %3082 = vmatpush.bf16.msra.mxu0 0
      %3083 = vmatpush.bf16.msra.mxu0 0
      %3084 = vmatpush.bf16.msra.mxu0 0
      %3085 = vmatpush.bf16.msra.mxu0 0
      %3086 = vmatpush.bf16.msra.mxu0 0
      %3087 = vmatpush.bf16.msra.mxu0 0
      %3088 = vmatpush.bf16.msra.mxu0 %v3076
      %3089 = vmatpush.bf16.msra.mxu0 %v3075
      %3090 = vmatmul.bf16.gmra.mxu0 %v3080
      %v3091 = vpop.f32.mrf.mxu0
      %v3092 = vadd.f32 %v3065, %v3091
      %v3093 = vpop.f32.mrf.mxu0
      %v3094 = vadd.f32 %v3065, %v3093
      %3095 = vdwg.mxu0
      %v3096 = vxor.u32 %v3092, 2147483648
      %v3097 = vxor.u32 %v3094, 2147483648
      %v3098 = vmul.f32 %v3096, 1.442695
      %v3099 = vpow.pop %v3098
      %v3100 = vmul.f32 %v3097, 1.442695
      %v3101 = vpow.pop %v3100
      %v3102 = vadd.f32 %v3099, 1.0
      %v3103 = vadd.f32 %v3101, 1.0
      %v3104 = vrcp.pop %v3102
      %v3105 = vmul.f32 %v3102, %v3104
      %v3106 = vsub.f32 1.0, %v3105
      %v3107 = vmul.f32 %v3104, %v3106
      %v3108 = vadd.f32 %v3104, %v3107
      %vm3109 = vweird.f32 %v3102
      %vm3110 = vweird.f32 %v3104
      %vm3111 = vmor %vm3109, %vm3110
      %v3112 = vsel %vm3111, %v3104, %v3108
      %v3113 = vand.u32 2147483647, %v3102
      %vm3114 = vcmp.eq.f32.partialorder %v3113, 8.507059e+37
      %v3115 = vand.u32 %v3102, 2147483648
      %v3116 = vor.u32 1.1754944e-38, %v3115
      %v3117 = vsel %vm3114, %v3116, %v3112
      %v3118 = vmul.f32 1.0, %v3117
      %v3119 = vrcp.pop %v3103
      %v3120 = vmul.f32 %v3103, %v3119
      %v3121 = vsub.f32 1.0, %v3120
      %v3122 = vmul.f32 %v3119, %v3121
      %v3123 = vadd.f32 %v3119, %v3122
      %vm3124 = vweird.f32 %v3103
      %vm3125 = vweird.f32 %v3119
      %vm3126 = vmor %vm3124, %vm3125
      %v3127 = vsel %vm3126, %v3119, %v3123
      %v3128 = vand.u32 2147483647, %v3103
      %vm3129 = vcmp.eq.f32.partialorder %v3128, 8.507059e+37
      %v3130 = vand.u32 %v3103, 2147483648
      %v3131 = vor.u32 1.1754944e-38, %v3130
      %v3132 = vsel %vm3129, %v3131, %v3127
      %v3133 = vmul.f32 1.0, %v3132
      %v3134 = vmul.f32 %v3092, %v3118
      %v3135 = vmul.f32 %v3094, %v3133
      %v3136 = vpack.c.bf16 %v3135, %v3134
      %v3138 = vperm.slane %v3008, 0
      %v3156 = vunpack.c.l.b16 %v2992
      %v3157 = vunpack.c.l.b16 %v2993
      %v3158 = vunpack.c.l.b16 %v2994
      %v3159 = vunpack.c.l.b16 %v2995
      %v3160 = vunpack.c.l.b16 %v2996
      %v3161 = vunpack.c.l.b16 %v2997
      %v3162 = vunpack.c.l.b16 %v2998
      %v3163 = vunpack.c.l.b16 %v2999
      %v3164 = vunpack.c.l.b16 %v3000
      %v3165 = vunpack.c.l.b16 %v3001
      %v3166 = vunpack.c.l.b16 %v3002
      %v3167 = vunpack.c.l.b16 %v3003
      %v3168 = vunpack.c.l.b16 %v3004
      %v3169 = vunpack.c.l.b16 %v3005
      %v3170 = vunpack.c.l.b16 %v3006
      %v3171 = vunpack.c.l.b16 %v3007
      %v3172 = vpack.c.b16 %v3157, %v3156
      %v3173 = vpack.c.b16 %v3159, %v3158
      %v3174 = vpack.c.b16 %v3161, %v3160
      %v3175 = vpack.c.b16 %v3163, %v3162
      %v3176 = vpack.c.b16 %v3165, %v3164
      %v3177 = vpack.c.b16 %v3167, %v3166
      %v3178 = vpack.c.b16 %v3169, %v3168
      %v3179 = vpack.c.b16 %v3171, %v3170
      %3188 = vmatpush.bf16.msra.mxu0 %v3179
      %3189 = vmatpush.bf16.msra.mxu0 %v3178
      %3190 = vmatpush.bf16.msra.mxu0 %v3177
      %3191 = vmatpush.bf16.msra.mxu0 %v3176
      %3192 = vmatpush.bf16.msra.mxu0 %v3175
      %3193 = vmatpush.bf16.msra.mxu0 %v3174
      %3194 = vmatpush.bf16.msra.mxu0 %v3173
      %3195 = vmatpush.bf16.msra.mxu0 %v3172
      %3196 = vmatmul.bf16.gmra.mxu0 %v3136
      %v3197 = vpop.f32.mrf.mxu0
      %v3198 = vadd.f32 %v3138, %v3197
      %v3199 = vpop.f32.mrf.mxu0
      %v3200 = vadd.f32 %v3138, %v3199
      %3201 = vdwg.mxu0
      %v3202 = vmul.f32 %v3198, 0.5
      %v3203 = vmul.f32 %v3200, 0.5
      %v3204 = vadd.f32 %v2983, %v3202
      %v3205 = vadd.f32 %v2984, %v3203
      %v3206 = vld [vmem:[%s1527] sm:$0x1]
      %v3207 = vld [vmem:[%s1530] sm:$0x1]
      %v3208 = vsel %vm1577, %v3204, 0.0
      %3209 = vadd.xlane.f32.xlu0 %v3208
      %v3210 = vpop.xlane.xlu0 %3209
      %v3211 = vsel %vm1577, %v3205, 0.0
      %3212 = vadd.xlane.f32.xlu0 %v3211
      %v3213 = vpop.xlane.xlu0 %3212
      %v3214 = vmul.f32 %v3210, %v1590
      %v3215 = vmul.f32 %v3213, %v1590
      %v3216 = vsub.f32 %v3204, %v3214
      %v3217 = vsub.f32 %v3205, %v3215
      %v3218 = vmul.f32 %v3216, %v3216
      %v3219 = vmul.f32 %v3217, %v3217
      %v3220 = vsel %vm1577, %v3218, 0.0
      %3221 = vadd.xlane.f32.xlu0 %v3220
      %v3222 = vpop.xlane.xlu0 %3221
      %v3223 = vsel %vm1577, %v3219, 0.0
      %3224 = vadd.xlane.f32.xlu0 %v3223
      %v3225 = vpop.xlane.xlu0 %3224
      %v3226 = vmul.f32 %v3222, %v1590
      %v3227 = vmul.f32 %v3225, %v1590
      %v3228 = vadd.f32 %v3226, 1e-05
      %v3229 = vadd.f32 %v3227, 1e-05
      %v3230 = vrsqrt.pop %v3228
      %v3231 = vmul.f32 %v3230, %v3228
      %v3232 = vmul.f32 %v3231, %v3230
      %v3233 = vmul.f32 0.5, %v3232
      %v3234 = vsub.f32 1.5, %v3233
      %v3235 = vmul.f32 %v3230, %v3234
      %vm3236 = vweird.f32 %v3228
      %vm3237 = vweird.f32 %v3230
      %vm3238 = vmor %vm3236, %vm3237
      %v3239 = vsel %vm3238, %v3230, %v3235
      %v3240 = vrsqrt.pop %v3229
      %v3241 = vmul.f32 %v3240, %v3229
      %v3242 = vmul.f32 %v3241, %v3240
      %v3243 = vmul.f32 0.5, %v3242
      %v3244 = vsub.f32 1.5, %v3243
      %v3245 = vmul.f32 %v3240, %v3244
      %vm3246 = vweird.f32 %v3229
      %vm3247 = vweird.f32 %v3240
      %vm3248 = vmor %vm3246, %vm3247
      %v3249 = vsel %vm3248, %v3240, %v3245
      %v3250 = vmul.f32 %v3216, %v3239
      %v3251 = vmul.f32 %v3217, %v3249
      %v3253 = vperm.slane %v3206, 0
      %v3255 = vmul.f32 %v3250, %v3253
      %v3256 = vmul.f32 %v3251, %v3253
      %v3258 = vperm.slane %v3207, 0
      %v3260 = vadd.f32 %v3255, %v3258
      %v3261 = vadd.f32 %v3256, %v3258
      %3262 = vst.msk [vmem:[#allocation2] sm:$0xff] %vm1577, %v3260
      %3263 = vst.msk [vmem:[#allocation2 + $0x8] sm:$0xff] %vm1577, %v3261
      %3264 = vst.msk [vmem:[%s1540] sm:$0xff] %vm1577, %v3260
      %3265 = vst.msk [vmem:[%s1540 + $0x8] sm:$0xff] %vm1577, %v3261
      %p3266 = scmp.lt.s32.totalorder %s82, 1
      %s3267 = scalar_select %p3266, %s82, 1
      %s3268 = smul.addr %s3267, 2
      %s3269 = smul.addr %s3268, 8
      %s3270 = scalar_lea.vmem %s67, %s3269
      // Predicated region
      $region157: #{vq_indexer_forward.4} parent=151 // pred_check
        %p3271 = pneg %p966
      $region158: #{vq_indexer_forward.4} parent=151 // pred_check_branch
        %3273 = sbr.rel (%p3271) target = $region160
      $region159: #{vq_indexer_forward.4} parent=151 // pred_region
        _
      $region160: #{vq_indexer_forward.4} parent=151 // pred_fallthru
        _
    $region152: #{vq_indexer_forward.4} parent=5 // pred_fallthru
      _
    %p3274 = scmp.le.s32.totalorder 2, %s73
    // Predicated region
    $region161: #{vq_indexer_forward.4} parent=5 // pred_check
      %p3275 = pneg %p3274
    $region162: #{vq_indexer_forward.4} parent=5 // pred_check_branch
      %3277 = sbr.rel (%p3275) target = $region164
    $region163: #{vq_indexer_forward.4} parent=5 // pred_region
      %s3278 = ssub.s32 %s73, 2
      // Predicated region
      $region165: #{vq_indexer_forward.4} parent=163 // pred_check
        %p3279 = pneg %p972
      $region166: #{vq_indexer_forward.4} parent=163 // pred_check_branch
        %3281 = sbr.rel (%p3279) target = $region168
      $region167: #{vq_indexer_forward.4} parent=163 // pred_region
        %p3282 = scmp.lt.s32.totalorder %s84, 1
        %s3283 = scalar_select %p3282, %s84, 1
        %s3284 = smul.addr %s3283, 2
        %s3285 = smul.addr %s3284, 8
        %s3286 = scalar_lea.vmem %s67, %s3285
      $region168: #{vq_indexer_forward.4} parent=163 // pred_fallthru
        _
    $region164: #{vq_indexer_forward.4} parent=5 // pred_fallthru
      _
  $region6: #{vq_indexer_forward.4} parent=0 // loop_footer
    %s77 = sadd.s32 1, %s73
  $region7: #{vq_indexer_forward.4} parent=0 // loop_footer_branch
    %72 = sbr.rel target = $region3
  $region8: #{vq_indexer_forward.4} parent=0 // loop_exit
    _

</llo_original>
